<compile_context>
chip_gen: v7x
topology: tpu7x:2x2x1
jax: 0.10.0
libtpu: 0.0.40
codegen_flags: <defaults>
</compile_context>

<pallas_src>
import functools

import jax
import jax.numpy as jnp
from jax import lax
from jax.experimental import pallas as pl
from jax.experimental.pallas import tpu as pltpu

_NEG_SLOPE = 0.2
_BN_EPS = 1e-5


def _round_up(x, m):
    return (x + m - 1) // m * m


def _pick_vmem_limit():
    # Generation-aware scoped-VMEM budget: ~3/4 of physical, capped at 96 MiB
    # (v5e/v6e: 128 MiB -> 96 MiB; v7x: 64 MiB -> 48 MiB).  Falls back to a
    # conservative 48 MiB when the query is unavailable (e.g. interpret mode).
    try:
        cap = int(pltpu.get_tpu_info().vmem_capacity_bytes)
    except Exception:
        return 48 * 1024 * 1024
    return max(32 * 1024 * 1024, min(96 * 1024 * 1024, (cap * 3) // 4))


_VMEM_LIMIT = _pick_vmem_limit()
_TM_MAX = 1024 if _VMEM_LIMIT >= 96 * 1024 * 1024 else 512


def _pick_tm(m, cap):
    """Largest multiple-of-8 tile that divides m and is <= cap.

    Prefers >=2 M tiles (so the 'parallel' axis can shard across v7x's two
    TensorCores) as long as tiles stay >=128 rows.  Returns None when m has no
    suitable divisor (caller pads a few rows instead).
    """
    for min_tiles, floor in ((2, 128), (1, 8)):
        hi = min(cap, (m // min_tiles) // 8 * 8)
        for tm in range(hi, floor - 1, -8):
            if m % tm == 0:
                return tm
    return None


# ----------------------------------------------------------------------------
# Pallas kernel 1: one M tile of A(tm,K) @ B(K,Cout) + bias, fused epilogue.
# Full-K blocks => no K grid axis, no accumulator scratch, no pl.when.
# ----------------------------------------------------------------------------
def _mm_kernel(a_ref, b_ref, bias_ref, *out_refs, emit_stats, tile_m, real_m,
               neg_slope):
    if emit_stats:
        o_ref, stats_ref = out_refs
    else:
        (o_ref,) = out_refs

    y = jnp.dot(a_ref[...], b_ref[...], preferred_element_type=jnp.float32)
    y = y + bias_ref[...]

    if emit_stats:
        # Per-tile partial batch statistics (sum, sum of squares); any padded
        # ragged rows are masked out.  program_id stays at kernel top level
        # (calling it inside pl.when broke interpret-mode lowering in rev 2).
        i = pl.program_id(0)
        rows = lax.broadcasted_iota(jnp.int32, (tile_m, 1), 0) + i * tile_m
        mask = rows < real_m
        ym = jnp.where(mask, y, 0.0)
        stats_ref[0, 0:1, :] = jnp.sum(ym, axis=0, keepdims=True)
        stats_ref[0, 1:2, :] = jnp.sum(ym * ym, axis=0, keepdims=True)
        o_ref[...] = y.astype(o_ref.dtype)          # pre-BN output (bf16)
    else:
        y = jnp.where(y >= 0.0, y, neg_slope * y)    # LeakyReLU(0.2)
        o_ref[...] = y.astype(o_ref.dtype)


# ----------------------------------------------------------------------------
# Pallas kernel 2 (BN pass 2): y * scale + shift, then LeakyReLU.  bf16 in/out.
# ----------------------------------------------------------------------------
def _scale_shift_lrelu_kernel(y_ref, scale_ref, shift_ref, o_ref, *, neg_slope):
    y = y_ref[...].astype(jnp.float32) * scale_ref[...] + shift_ref[...]
    o_ref[...] = jnp.where(y >= 0.0, y, neg_slope * y).astype(o_ref.dtype)


# ----------------------------------------------------------------------------
# pallas_call wrappers.
# ----------------------------------------------------------------------------
def _tiled_matmul(a, bmat, bias, *, tm, emit_stats, real_m):
    Mp, K = a.shape
    Cout = bmat.shape[1]
    num_m = Mp // tm

    kernel = functools.partial(_mm_kernel, emit_stats=emit_stats, tile_m=tm,
                               real_m=real_m, neg_slope=_NEG_SLOPE)

    out_shape = [jax.ShapeDtypeStruct((Mp, Cout), jnp.bfloat16)]
    out_specs = [pl.BlockSpec((tm, Cout), lambda i: (i, 0))]
    if emit_stats:
        out_shape.append(jax.ShapeDtypeStruct((num_m, 2, Cout), jnp.float32))
        out_specs.append(pl.BlockSpec((1, 2, Cout), lambda i: (i, 0, 0)))

    cost = pl.CostEstimate(
        flops=2 * Mp * K * Cout, transcendentals=0,
        bytes_accessed=Mp * K * 2 + K * Cout * 2 + Mp * Cout * 2)

    return pl.pallas_call(
        kernel,
        out_shape=tuple(out_shape) if emit_stats else out_shape[0],
        grid=(num_m,),
        in_specs=[
            pl.BlockSpec((tm, K), lambda i: (i, 0)),     # A tile (bf16)
            pl.BlockSpec((K, Cout), lambda i: (0, 0)),   # full B (bf16), resident
            pl.BlockSpec((1, Cout), lambda i: (0, 0)),   # bias (f32)
        ],
        out_specs=tuple(out_specs) if emit_stats else out_specs[0],
        compiler_params=pltpu.CompilerParams(
            dimension_semantics=("parallel",),
            vmem_limit_bytes=_VMEM_LIMIT),
        cost_estimate=cost,
    )(a, bmat, bias)


def _bn_lrelu(y_pre, scale, shift, *, tm):
    Mp, Cout = y_pre.shape
    num_m = Mp // tm
    return pl.pallas_call(
        functools.partial(_scale_shift_lrelu_kernel, neg_slope=_NEG_SLOPE),
        out_shape=jax.ShapeDtypeStruct((Mp, Cout), jnp.bfloat16),
        grid=(num_m,),
        in_specs=[pl.BlockSpec((tm, Cout), lambda i: (i, 0)),
                  pl.BlockSpec((1, Cout), lambda i: (0, 0)),
                  pl.BlockSpec((1, Cout), lambda i: (0, 0))],
        out_specs=pl.BlockSpec((tm, Cout), lambda i: (i, 0)),
        compiler_params=pltpu.CompilerParams(
            dimension_semantics=("parallel",),
            vmem_limit_bytes=_VMEM_LIMIT),
    )(y_pre, scale, shift)


# ----------------------------------------------------------------------------
# JAX glue: im2col + per-layer wrapper.
# ----------------------------------------------------------------------------
def im2col(x, k, stride, pad):
    # x: (N, H, W, C) -> (N*OH*OW, k*k*C) with (ky, kx, cin) column ordering.
    # TODO(synk): stride-2 patch extraction is not expressible with BlockSpec
    # index_maps; eliminating this materialization needs phase-plane splitting
    # + manual pl.ds-strided DMA from an ANY-space ref.
    N, H, W, C = x.shape
    xp = jnp.pad(x, ((0, 0), (pad, pad), (pad, pad), (0, 0)))
    OH = (H + 2 * pad - k) // stride + 1
    OW = (W + 2 * pad - k) // stride + 1
    cols = [xp[:, ky:ky + stride * OH:stride, kx:kx + stride * OW:stride, :]
            for ky in range(k) for kx in range(k)]
    patches = jnp.stack(cols, axis=3)            # (N, OH, OW, k*k, C)
    return patches.reshape(N * OH * OW, k * k * C), N, OH, OW


def conv_layer(x, w, b, gamma=None, beta=None, *, k, stride, pad,
               use_bn=False):
    # Cast to bf16 before patch extraction (halves im2col HBM); outputs are
    # bf16 too, since the next layer's MXU matmul consumes bf16 anyway.
    a, N, OH, OW = im2col(x.astype(jnp.bfloat16), k, stride, pad)
    M, K = a.shape
    Cout = w.shape[-1]

    tm = _pick_tm(M, _TM_MAX)
    if tm is None:
        # No divisor-friendly tile: pad a handful of rows (masked in-kernel).
        tm = min(_TM_MAX, _round_up(M, 8))
        a = jnp.pad(a, ((0, _round_up(M, tm) - M), (0, 0)))

    w_flat = w.astype(jnp.bfloat16).reshape(K, Cout)
    bias = b.astype(jnp.float32).reshape(1, Cout)

    if use_bn:
        # Training-mode (batch) statistics, matching nn.BatchNorm2d default.
        y_pre, stats = _tiled_matmul(a, w_flat, bias, tm=tm,
                                     emit_stats=True, real_m=M)
        s = jnp.sum(stats, axis=0)                       # (2, Cout), tiny
        mean = s[0] / M
        var = jnp.maximum(s[1] / M - mean * mean, 0.0)
        rstd = lax.rsqrt(var + _BN_EPS)
        g = gamma.astype(jnp.float32)
        scale = (g * rstd).reshape(1, Cout)
        shift = (beta.astype(jnp.float32) - mean * g * rstd).reshape(1, Cout)
        tm_bn = _pick_tm(y_pre.shape[0], 2048) or tm     # pure streaming pass
        y = _bn_lrelu(y_pre, scale, shift, tm=tm_bn)
    else:
        y = _tiled_matmul(a, w_flat, bias, tm=tm, emit_stats=False, real_m=M)

    return y[:M].reshape(N, OH, OW, Cout)


def final_conv_sigmoid(x, w, b):
    # Conv2d(dim*8, 1, 4) + Sigmoid: an (N x K x 1) matmul.  Kept as a plain
    # jnp.dot per the perf review (a dedicated pallas_call is dominated by
    # launch overhead + 128x output-lane padding for Cout=1).
    k = w.shape[0]
    a, N, OH, OW = im2col(x.astype(jnp.bfloat16), k, 1, 0)
    w_flat = w.astype(jnp.bfloat16).reshape(-1, 1)
    y = jnp.dot(a, w_flat, preferred_element_type=jnp.float32) + b
    return jax.nn.sigmoid(y).reshape(-1)


# ----------------------------------------------------------------------------
# NetD forward (Pallas) and parameter init (matches weights_init).
# ----------------------------------------------------------------------------
def init_params(key, in_dim, dim):
    ks = jax.random.split(key, 8)

    def conv_w(k, kh, cin, cout):
        return 0.02 * jax.random.normal(k, (kh, kh, cin, cout), jnp.float32)

    p = {}
    p["w1"], p["b1"] = conv_w(ks[0], 5, in_dim, dim), jnp.zeros((dim,), jnp.float32)
    p["w2"], p["b2"] = conv_w(ks[1], 5, dim, dim * 2), jnp.zeros((dim * 2,), jnp.float32)
    p["g2"] = 1.0 + 0.02 * jax.random.normal(ks[2], (dim * 2,), jnp.float32)
    p["be2"] = jnp.zeros((dim * 2,), jnp.float32)
    p["w3"], p["b3"] = conv_w(ks[3], 5, dim * 2, dim * 4), jnp.zeros((dim * 4,), jnp.float32)
    p["g3"] = 1.0 + 0.02 * jax.random.normal(ks[4], (dim * 4,), jnp.float32)
    p["be3"] = jnp.zeros((dim * 4,), jnp.float32)
    p["w4"], p["b4"] = conv_w(ks[5], 5, dim * 4, dim * 8), jnp.zeros((dim * 8,), jnp.float32)
    p["g4"] = 1.0 + 0.02 * jax.random.normal(ks[6], (dim * 8,), jnp.float32)
    p["be4"] = jnp.zeros((dim * 8,), jnp.float32)
    p["w5"], p["b5"] = conv_w(ks[7], 4, dim * 8, 1), jnp.zeros((1,), jnp.float32)
    return p


def netd_forward(x_nchw, p):
    x = jnp.transpose(x_nchw, (0, 2, 3, 1))                      # NCHW -> NHWC
    y = conv_layer(x, p["w1"], p["b1"], k=5, stride=2, pad=2, use_bn=False)
    y = conv_layer(y, p["w2"], p["b2"], p["g2"], p["be2"], k=5, stride=2,
                   pad=2, use_bn=True)
    y = conv_layer(y, p["w3"], p["b3"], p["g3"], p["be3"], k=5, stride=2,
                   pad=2, use_bn=True)
    y = conv_layer(y, p["w4"], p["b4"], p["g4"], p["be4"], k=5, stride=2,
                   pad=2, use_bn=True)
    return final_conv_sigmoid(y, p["w5"], p["b5"])                # y.view(-1)


# Plain-JAX f32 reference (independent of the Pallas path) for a sanity check.
def netd_reference(x_nchw, p):
    x = jnp.transpose(x_nchw, (0, 2, 3, 1)).astype(jnp.float32)

    def conv(x, w, b, stride, pad):
        y = lax.conv_general_dilated(
            x, w, window_strides=(stride, stride),
            padding=[(pad, pad), (pad, pad)],
            dimension_numbers=("NHWC", "HWIO", "NHWC"),
            precision=lax.Precision.HIGHEST)
        return y + b

    def bn(y, g, be):
        mean = jnp.mean(y, axis=(0, 1, 2), keepdims=True)
        var = jnp.mean((y - mean) ** 2, axis=(0, 1, 2), keepdims=True)
        return (y - mean) * lax.rsqrt(var + 1e-5) * g + be

    def lrelu(y):
        return jnp.where(y >= 0, y, 0.2 * y)

    y = lrelu(conv(x, p["w1"], p["b1"], 2, 2))
    y = lrelu(bn(conv(y, p["w2"], p["b2"], 2, 2), p["g2"], p["be2"]))
    y = lrelu(bn(conv(y, p["w3"], p["b3"], 2, 2), p["g3"], p["be3"]))
    y = lrelu(bn(conv(y, p["w4"], p["b4"], 2, 2), p["g4"], p["be4"]))
    y = jax.nn.sigmoid(conv(y, p["w5"], p["b5"], 1, 0))
    return y.reshape(-1)


if __name__ == "__main__":
    N, in_dim, H, W = 2, 3, 64, 64   # 64x64 input so the final 4x4 conv -> 1x1
    dim = 8                          # small "dim" for the synthetic test

    key = jax.random.PRNGKey(0)
    k_x, k_p = jax.random.split(key)
    x = jax.random.normal(k_x, (N, in_dim, H, W), jnp.float32)   # NCHW like PyTorch
    params = init_params(k_p, in_dim, dim)

    out = jax.block_until_ready(jax.jit(netd_forward)(x, params))
    assert out.shape == (N,), out.shape

    ref = jax.block_until_ready(jax.jit(netd_reference)(x, params))
    # bf16 activations / MXU inputs (f32 accumulation) vs a full-f32 HIGHEST
    # precision reference -> loosened tolerance.
    err = float(jnp.max(jnp.abs(out - ref)))
    assert jnp.allclose(out, ref, atol=4e-2, rtol=4e-2), err

    print("KERNEL_OK")
</pallas_src>

<mosaic_0001>
module attributes {stable_mosaic.version = 11 : i64} {
  func.func @_mm_kernel(%arg0: i32, %arg1: memref<512x75xbf16, #tpu.memory_space<vmem>>, %arg2: memref<75x8xbf16, #tpu.memory_space<vmem>>, %arg3: memref<1x8xf32, #tpu.memory_space<vmem>>, %arg4: memref<512x8xbf16, #tpu.memory_space<vmem>>) attributes {dimension_semantics = [#tpu.dimension_semantics<parallel>], iteration_bounds = array<i64: 4>, scalar_prefetch = 0 : i64, scratch_operands = 0 : i64, tpu.core_type = #tpu.core_type<tc>, window_params = [{transform_indices = @transform_0, window_bounds = array<i64: 512, 75>}, {pipeline_mode = #tpu.pipeline_mode<synchronous>, transform_indices = @transform_1, window_bounds = array<i64: 75, 8>}, {pipeline_mode = #tpu.pipeline_mode<synchronous>, transform_indices = @transform_2, window_bounds = array<i64: 1, 8>}, {transform_indices = @transform_3, window_bounds = array<i64: 512, 8>}]} {
    %c0 = arith.constant 0 : index
    %c0_0 = arith.constant 0 : index
    %0 = vector.load %arg1[%c0, %c0_0] : memref<512x75xbf16, #tpu.memory_space<vmem>>, vector<512x75xbf16>
    %c0_1 = arith.constant 0 : index
    %c0_2 = arith.constant 0 : index
    %1 = vector.load %arg2[%c0_1, %c0_2] : memref<75x8xbf16, #tpu.memory_space<vmem>>, vector<75x8xbf16>
    %cst = arith.constant dense<0.000000e+00> : vector<512x8xf32>
    %2 = tpu.matmul %0, %1, %cst {dimension_numbers = #tpu.dot_dimension_numbers<[1], [0], [0], [1], [0, 0, 1, 1], [], []>} : vector<512x75xbf16>, vector<75x8xbf16>, vector<512x8xf32> -> vector<512x8xf32>
    %c0_3 = arith.constant 0 : index
    %c0_4 = arith.constant 0 : index
    %3 = vector.load %arg3[%c0_3, %c0_4] : memref<1x8xf32, #tpu.memory_space<vmem>>, vector<1x8xf32>
    %4 = vector.broadcast %3 : vector<1x8xf32> to vector<512x8xf32>
    %5 = arith.addf %2, %4 : vector<512x8xf32>
    %cst_5 = arith.constant 0.000000e+00 : f32
    %6 = vector.broadcast %cst_5 : f32 to vector<512x8xf32>
    %7 = arith.cmpf oge, %5, %6 : vector<512x8xf32>
    %cst_6 = arith.constant 2.000000e-01 : f32
    %8 = vector.broadcast %cst_6 : f32 to vector<512x8xf32>
    %9 = arith.mulf %8, %5 : vector<512x8xf32>
    %10 = arith.select %7, %5, %9 : vector<512x8xi1>, vector<512x8xf32>
    %11 = arith.truncf %10 : vector<512x8xf32> to vector<512x8xbf16>
    %c0_7 = arith.constant 0 : index
    %c0_8 = arith.constant 0 : index
    %12 = vector.load %arg4[%c0_7, %c0_8] : memref<512x8xbf16, #tpu.memory_space<vmem>>, vector<512x8xbf16>
    tpu.vector_store %arg4[%c0_7, %c0_8], %11 {strides = array<i32>} : memref<512x8xbf16, #tpu.memory_space<vmem>>, vector<512x8xbf16>,
    return
  }
  func.func @transform_0(%arg0: i32) -> (i32, i32) {
    %c0_i32 = arith.constant 0 : i32
    %c0_i32_0 = arith.constant 0 : i32
    return %arg0, %c0_i32 : i32, i32
  }
  func.func @transform_1(%arg0: i32) -> (i32, i32) {
    %c0_i32 = arith.constant 0 : i32
    %c0_i32_0 = arith.constant 0 : i32
    %c0_i32_1 = arith.constant 0 : i32
    return %c0_i32, %c0_i32_0 : i32, i32
  }
  func.func @transform_2(%arg0: i32) -> (i32, i32) {
    %c0_i32 = arith.constant 0 : i32
    %c0_i32_0 = arith.constant 0 : i32
    %c0_i32_1 = arith.constant 0 : i32
    return %c0_i32, %c0_i32_0 : i32, i32
  }
  func.func @transform_3(%arg0: i32) -> (i32, i32) {
    %c0_i32 = arith.constant 0 : i32
    %c0_i32_0 = arith.constant 0 : i32
    return %arg0, %c0_i32 : i32, i32
  }
}

module attributes {stable_mosaic.version = 11 : i64} {
  func.func @_mm_kernel(%arg0: i32, %arg1: memref<256x200xbf16, #tpu.memory_space<vmem>>, %arg2: memref<200x16xbf16, #tpu.memory_space<vmem>>, %arg3: memref<1x16xf32, #tpu.memory_space<vmem>>, %arg4: memref<256x16xbf16, #tpu.memory_space<vmem>>, %arg5: memref<1x2x16xf32, #tpu.memory_space<vmem>>) attributes {dimension_semantics = [#tpu.dimension_semantics<parallel>], iteration_bounds = array<i64: 2>, scalar_prefetch = 0 : i64, scratch_operands = 0 : i64, tpu.core_type = #tpu.core_type<tc>, window_params = [{transform_indices = @transform_0, window_bounds = array<i64: 256, 200>}, {pipeline_mode = #tpu.pipeline_mode<synchronous>, transform_indices = @transform_1, window_bounds = array<i64: 200, 16>}, {pipeline_mode = #tpu.pipeline_mode<synchronous>, transform_indices = @transform_2, window_bounds = array<i64: 1, 16>}, {transform_indices = @transform_3, window_bounds = array<i64: 256, 16>}, {transform_indices = @transform_4, window_bounds = array<i64: 1, 2, 16>}]} {
    %c0 = arith.constant 0 : index
    %c0_0 = arith.constant 0 : index
    %0 = vector.load %arg1[%c0, %c0_0] : memref<256x200xbf16, #tpu.memory_space<vmem>>, vector<256x200xbf16>
    %c0_1 = arith.constant 0 : index
    %c0_2 = arith.constant 0 : index
    %1 = vector.load %arg2[%c0_1, %c0_2] : memref<200x16xbf16, #tpu.memory_space<vmem>>, vector<200x16xbf16>
    %cst = arith.constant dense<0.000000e+00> : vector<256x16xf32>
    %2 = tpu.matmul %0, %1, %cst {dimension_numbers = #tpu.dot_dimension_numbers<[1], [0], [0], [1], [0, 0, 1, 1], [], []>} : vector<256x200xbf16>, vector<200x16xbf16>, vector<256x16xf32> -> vector<256x16xf32>
    %c0_3 = arith.constant 0 : index
    %c0_4 = arith.constant 0 : index
    %3 = vector.load %arg3[%c0_3, %c0_4] : memref<1x16xf32, #tpu.memory_space<vmem>>, vector<1x16xf32>
    %4 = vector.broadcast %3 : vector<1x16xf32> to vector<256x16xf32>
    %5 = arith.addf %2, %4 : vector<256x16xf32>
    %6 = tpu.iota {dimensions = array<i32: 0>} : vector<256x1xi32>
    %c256_i32 = arith.constant 256 : i32
    %7 = arith.muli %arg0, %c256_i32 : i32
    %8 = vector.broadcast %7 : i32 to vector<256x1xi32>
    %9 = arith.addi %6, %8 : vector<256x1xi32>
    %c512_i32 = arith.constant 512 : i32
    %10 = vector.broadcast %c512_i32 : i32 to vector<256x1xi32>
    %11 = arith.cmpi slt, %9, %10 : vector<256x1xi32>
    %cst_5 = arith.constant 0.000000e+00 : f32
    %12 = vector.shape_cast %11 : vector<256x1xi1> to vector<256x1xi1>
    %13 = vector.broadcast %12 : vector<256x1xi1> to vector<256x16xi1>
    %14 = vector.broadcast %cst_5 : f32 to vector<256x16xf32>
    %15 = arith.select %13, %5, %14 : vector<256x16xi1>, vector<256x16xf32>
    %cst_6 = arith.constant dense<0.000000e+00> : vector<16xf32>
    %16 = vector.multi_reduction <add>, %15, %cst_6 [0] : vector<256x16xf32> to vector<16xf32>
    %17 = vector.shape_cast %16 : vector<16xf32> to vector<1x16xf32>
    %c0_7 = arith.constant 0 : index
    %c0_8 = arith.constant 0 : index
    %c0_9 = arith.constant 0 : index
    %18 = vector.load %arg5[%c0_7, %c0_8, %c0_9] : memref<1x2x16xf32, #tpu.memory_space<vmem>>, vector<1x1x16xf32>
    %19 = vector.shape_cast %18 : vector<1x1x16xf32> to vector<1x16xf32>
    %20 = vector.shape_cast %17 : vector<1x16xf32> to vector<1x1x16xf32>
    tpu.vector_store %arg5[%c0_7, %c0_8, %c0_9], %20 {strides = array<i32>} : memref<1x2x16xf32, #tpu.memory_space<vmem>>, vector<1x1x16xf32>,
    %21 = arith.mulf %15, %15 : vector<256x16xf32>
    %cst_10 = arith.constant dense<0.000000e+00> : vector<16xf32>
    %22 = vector.multi_reduction <add>, %21, %cst_10 [0] : vector<256x16xf32> to vector<16xf32>
    %23 = vector.shape_cast %22 : vector<16xf32> to vector<1x16xf32>
    %c0_11 = arith.constant 0 : index
    %c1 = arith.constant 1 : index
    %c0_12 = arith.constant 0 : index
    %24 = vector.load %arg5[%c0_11, %c1, %c0_12] : memref<1x2x16xf32, #tpu.memory_space<vmem>>, vector<1x1x16xf32>
    %25 = vector.shape_cast %24 : vector<1x1x16xf32> to vector<1x16xf32>
    %26 = vector.shape_cast %23 : vector<1x16xf32> to vector<1x1x16xf32>
    tpu.vector_store %arg5[%c0_11, %c1, %c0_12], %26 {strides = array<i32>} : memref<1x2x16xf32, #tpu.memory_space<vmem>>, vector<1x1x16xf32>,
    %27 = arith.truncf %5 : vector<256x16xf32> to vector<256x16xbf16>
    %c0_13 = arith.constant 0 : index
    %c0_14 = arith.constant 0 : index
    %28 = vector.load %arg4[%c0_13, %c0_14] : memref<256x16xbf16, #tpu.memory_space<vmem>>, vector<256x16xbf16>
    tpu.vector_store %arg4[%c0_13, %c0_14], %27 {strides = array<i32>} : memref<256x16xbf16, #tpu.memory_space<vmem>>, vector<256x16xbf16>,
    return
  }
  func.func @transform_0(%arg0: i32) -> (i32, i32) {
    %c0_i32 = arith.constant 0 : i32
    %c0_i32_0 = arith.constant 0 : i32
    return %arg0, %c0_i32 : i32, i32
  }
  func.func @transform_1(%arg0: i32) -> (i32, i32) {
    %c0_i32 = arith.constant 0 : i32
    %c0_i32_0 = arith.constant 0 : i32
    %c0_i32_1 = arith.constant 0 : i32
    return %c0_i32, %c0_i32_0 : i32, i32
  }
  func.func @transform_2(%arg0: i32) -> (i32, i32) {
    %c0_i32 = arith.constant 0 : i32
    %c0_i32_0 = arith.constant 0 : i32
    %c0_i32_1 = arith.constant 0 : i32
    return %c0_i32, %c0_i32_0 : i32, i32
  }
  func.func @transform_3(%arg0: i32) -> (i32, i32) {
    %c0_i32 = arith.constant 0 : i32
    %c0_i32_0 = arith.constant 0 : i32
    return %arg0, %c0_i32 : i32, i32
  }
  func.func @transform_4(%arg0: i32) -> (i32, i32, i32) {
    %c0_i32 = arith.constant 0 : i32
    %c0_i32_0 = arith.constant 0 : i32
    %c0_i32_1 = arith.constant 0 : i32
    return %arg0, %c0_i32, %c0_i32_0 : i32, i32, i32
  }
}

module attributes {stable_mosaic.version = 11 : i64} {
  func.func @_scale_shift_lrelu_kernel(%arg0: i32, %arg1: memref<256x16xbf16, #tpu.memory_space<vmem>>, %arg2: memref<1x16xf32, #tpu.memory_space<vmem>>, %arg3: memref<1x16xf32, #tpu.memory_space<vmem>>, %arg4: memref<256x16xbf16, #tpu.memory_space<vmem>>) attributes {dimension_semantics = [#tpu.dimension_semantics<parallel>], iteration_bounds = array<i64: 2>, scalar_prefetch = 0 : i64, scratch_operands = 0 : i64, tpu.core_type = #tpu.core_type<tc>, window_params = [{transform_indices = @transform_0, window_bounds = array<i64: 256, 16>}, {pipeline_mode = #tpu.pipeline_mode<synchronous>, transform_indices = @transform_1, window_bounds = array<i64: 1, 16>}, {pipeline_mode = #tpu.pipeline_mode<synchronous>, transform_indices = @transform_2, window_bounds = array<i64: 1, 16>}, {transform_indices = @transform_3, window_bounds = array<i64: 256, 16>}]} {
    %c0 = arith.constant 0 : index
    %c0_0 = arith.constant 0 : index
    %0 = vector.load %arg1[%c0, %c0_0] : memref<256x16xbf16, #tpu.memory_space<vmem>>, vector<256x16xbf16>
    %1 = arith.extf %0 : vector<256x16xbf16> to vector<256x16xf32>
    %c0_1 = arith.constant 0 : index
    %c0_2 = arith.constant 0 : index
    %2 = vector.load %arg2[%c0_1, %c0_2] : memref<1x16xf32, #tpu.memory_space<vmem>>, vector<1x16xf32>
    %3 = vector.broadcast %2 : vector<1x16xf32> to vector<256x16xf32>
    %4 = arith.mulf %1, %3 : vector<256x16xf32>
    %c0_3 = arith.constant 0 : index
    %c0_4 = arith.constant 0 : index
    %5 = vector.load %arg3[%c0_3, %c0_4] : memref<1x16xf32, #tpu.memory_space<vmem>>, vector<1x16xf32>
    %6 = vector.broadcast %5 : vector<1x16xf32> to vector<256x16xf32>
    %7 = arith.addf %4, %6 : vector<256x16xf32>
    %cst = arith.constant 0.000000e+00 : f32
    %8 = vector.broadcast %cst : f32 to vector<256x16xf32>
    %9 = arith.cmpf oge, %7, %8 : vector<256x16xf32>
    %cst_5 = arith.constant 2.000000e-01 : f32
    %10 = vector.broadcast %cst_5 : f32 to vector<256x16xf32>
    %11 = arith.mulf %10, %7 : vector<256x16xf32>
    %12 = arith.select %9, %7, %11 : vector<256x16xi1>, vector<256x16xf32>
    %13 = arith.truncf %12 : vector<256x16xf32> to vector<256x16xbf16>
    %c0_6 = arith.constant 0 : index
    %c0_7 = arith.constant 0 : index
    %14 = vector.load %arg4[%c0_6, %c0_7] : memref<256x16xbf16, #tpu.memory_space<vmem>>, vector<256x16xbf16>
    tpu.vector_store %arg4[%c0_6, %c0_7], %13 {strides = array<i32>} : memref<256x16xbf16, #tpu.memory_space<vmem>>, vector<256x16xbf16>,
    return
  }
  func.func @transform_0(%arg0: i32) -> (i32, i32) {
    %c0_i32 = arith.constant 0 : i32
    %c0_i32_0 = arith.constant 0 : i32
    return %arg0, %c0_i32 : i32, i32
  }
  func.func @transform_1(%arg0: i32) -> (i32, i32) {
    %c0_i32 = arith.constant 0 : i32
    %c0_i32_0 = arith.constant 0 : i32
    %c0_i32_1 = arith.constant 0 : i32
    return %c0_i32, %c0_i32_0 : i32, i32
  }
  func.func @transform_2(%arg0: i32) -> (i32, i32) {
    %c0_i32 = arith.constant 0 : i32
    %c0_i32_0 = arith.constant 0 : i32
    %c0_i32_1 = arith.constant 0 : i32
    return %c0_i32, %c0_i32_0 : i32, i32
  }
  func.func @transform_3(%arg0: i32) -> (i32, i32) {
    %c0_i32 = arith.constant 0 : i32
    %c0_i32_0 = arith.constant 0 : i32
    return %arg0, %c0_i32 : i32, i32
  }
}

module attributes {stable_mosaic.version = 11 : i64} {
  func.func @_mm_kernel(%arg0: i32, %arg1: memref<128x400xbf16, #tpu.memory_space<vmem>>, %arg2: memref<400x32xbf16, #tpu.memory_space<vmem>>, %arg3: memref<1x32xf32, #tpu.memory_space<vmem>>, %arg4: memref<128x32xbf16, #tpu.memory_space<vmem>>, %arg5: memref<1x2x32xf32, #tpu.memory_space<vmem>>) attributes {dimension_semantics = [#tpu.dimension_semantics<parallel>], iteration_bounds = array<i64: 1>, scalar_prefetch = 0 : i64, scratch_operands = 0 : i64, tpu.core_type = #tpu.core_type<tc>, window_params = [{transform_indices = @transform_0, window_bounds = array<i64: 128, 400>}, {pipeline_mode = #tpu.pipeline_mode<synchronous>, transform_indices = @transform_1, window_bounds = array<i64: 400, 32>}, {pipeline_mode = #tpu.pipeline_mode<synchronous>, transform_indices = @transform_2, window_bounds = array<i64: 1, 32>}, {transform_indices = @transform_3, window_bounds = array<i64: 128, 32>}, {transform_indices = @transform_4, window_bounds = array<i64: 1, 2, 32>}]} {
    %c0 = arith.constant 0 : index
    %c0_0 = arith.constant 0 : index
    %0 = vector.load %arg1[%c0, %c0_0] : memref<128x400xbf16, #tpu.memory_space<vmem>>, vector<128x400xbf16>
    %c0_1 = arith.constant 0 : index
    %c0_2 = arith.constant 0 : index
    %1 = vector.load %arg2[%c0_1, %c0_2] : memref<400x32xbf16, #tpu.memory_space<vmem>>, vector<400x32xbf16>
    %cst = arith.constant dense<0.000000e+00> : vector<128x32xf32>
    %2 = tpu.matmul %0, %1, %cst {dimension_numbers = #tpu.dot_dimension_numbers<[1], [0], [0], [1], [0, 0, 1, 1], [], []>} : vector<128x400xbf16>, vector<400x32xbf16>, vector<128x32xf32> -> vector<128x32xf32>
    %c0_3 = arith.constant 0 : index
    %c0_4 = arith.constant 0 : index
    %3 = vector.load %arg3[%c0_3, %c0_4] : memref<1x32xf32, #tpu.memory_space<vmem>>, vector<1x32xf32>
    %4 = vector.broadcast %3 : vector<1x32xf32> to vector<128x32xf32>
    %5 = arith.addf %2, %4 : vector<128x32xf32>
    %6 = tpu.iota {dimensions = array<i32: 0>} : vector<128x1xi32>
    %c128_i32 = arith.constant 128 : i32
    %7 = arith.muli %arg0, %c128_i32 : i32
    %8 = vector.broadcast %7 : i32 to vector<128x1xi32>
    %9 = arith.addi %6, %8 : vector<128x1xi32>
    %c128_i32_5 = arith.constant 128 : i32
    %10 = vector.broadcast %c128_i32_5 : i32 to vector<128x1xi32>
    %11 = arith.cmpi slt, %9, %10 : vector<128x1xi32>
    %cst_6 = arith.constant 0.000000e+00 : f32
    %12 = vector.shape_cast %11 : vector<128x1xi1> to vector<128x1xi1>
    %13 = vector.broadcast %12 : vector<128x1xi1> to vector<128x32xi1>
    %14 = vector.broadcast %cst_6 : f32 to vector<128x32xf32>
    %15 = arith.select %13, %5, %14 : vector<128x32xi1>, vector<128x32xf32>
    %cst_7 = arith.constant dense<0.000000e+00> : vector<32xf32>
    %16 = vector.multi_reduction <add>, %15, %cst_7 [0] : vector<128x32xf32> to vector<32xf32>
    %17 = vector.shape_cast %16 : vector<32xf32> to vector<1x32xf32>
    %c0_8 = arith.constant 0 : index
    %c0_9 = arith.constant 0 : index
    %c0_10 = arith.constant 0 : index
    %18 = vector.load %arg5[%c0_8, %c0_9, %c0_10] : memref<1x2x32xf32, #tpu.memory_space<vmem>>, vector<1x1x32xf32>
    %19 = vector.shape_cast %18 : vector<1x1x32xf32> to vector<1x32xf32>
    %20 = vector.shape_cast %17 : vector<1x32xf32> to vector<1x1x32xf32>
    tpu.vector_store %arg5[%c0_8, %c0_9, %c0_10], %20 {strides = array<i32>} : memref<1x2x32xf32, #tpu.memory_space<vmem>>, vector<1x1x32xf32>,
    %21 = arith.mulf %15, %15 : vector<128x32xf32>
    %cst_11 = arith.constant dense<0.000000e+00> : vector<32xf32>
    %22 = vector.multi_reduction <add>, %21, %cst_11 [0] : vector<128x32xf32> to vector<32xf32>
    %23 = vector.shape_cast %22 : vector<32xf32> to vector<1x32xf32>
    %c0_12 = arith.constant 0 : index
    %c1 = arith.constant 1 : index
    %c0_13 = arith.constant 0 : index
    %24 = vector.load %arg5[%c0_12, %c1, %c0_13] : memref<1x2x32xf32, #tpu.memory_space<vmem>>, vector<1x1x32xf32>
    %25 = vector.shape_cast %24 : vector<1x1x32xf32> to vector<1x32xf32>
    %26 = vector.shape_cast %23 : vector<1x32xf32> to vector<1x1x32xf32>
    tpu.vector_store %arg5[%c0_12, %c1, %c0_13], %26 {strides = array<i32>} : memref<1x2x32xf32, #tpu.memory_space<vmem>>, vector<1x1x32xf32>,
    %27 = arith.truncf %5 : vector<128x32xf32> to vector<128x32xbf16>
    %c0_14 = arith.constant 0 : index
    %c0_15 = arith.constant 0 : index
    %28 = vector.load %arg4[%c0_14, %c0_15] : memref<128x32xbf16, #tpu.memory_space<vmem>>, vector<128x32xbf16>
    tpu.vector_store %arg4[%c0_14, %c0_15], %27 {strides = array<i32>} : memref<128x32xbf16, #tpu.memory_space<vmem>>, vector<128x32xbf16>,
    return
  }
  func.func @transform_0(%arg0: i32) -> (i32, i32) {
    %c0_i32 = arith.constant 0 : i32
    %c0_i32_0 = arith.constant 0 : i32
    return %arg0, %c0_i32 : i32, i32
  }
  func.func @transform_1(%arg0: i32) -> (i32, i32) {
    %c0_i32 = arith.constant 0 : i32
    %c0_i32_0 = arith.constant 0 : i32
    %c0_i32_1 = arith.constant 0 : i32
    return %c0_i32, %c0_i32_0 : i32, i32
  }
  func.func @transform_2(%arg0: i32) -> (i32, i32) {
    %c0_i32 = arith.constant 0 : i32
    %c0_i32_0 = arith.constant 0 : i32
    %c0_i32_1 = arith.constant 0 : i32
    return %c0_i32, %c0_i32_0 : i32, i32
  }
  func.func @transform_3(%arg0: i32) -> (i32, i32) {
    %c0_i32 = arith.constant 0 : i32
    %c0_i32_0 = arith.constant 0 : i32
    return %arg0, %c0_i32 : i32, i32
  }
  func.func @transform_4(%arg0: i32) -> (i32, i32, i32) {
    %c0_i32 = arith.constant 0 : i32
    %c0_i32_0 = arith.constant 0 : i32
    %c0_i32_1 = arith.constant 0 : i32
    return %arg0, %c0_i32, %c0_i32_0 : i32, i32, i32
  }
}

module attributes {stable_mosaic.version = 11 : i64} {
  func.func @_scale_shift_lrelu_kernel(%arg0: i32, %arg1: memref<128x32xbf16, #tpu.memory_space<vmem>>, %arg2: memref<1x32xf32, #tpu.memory_space<vmem>>, %arg3: memref<1x32xf32, #tpu.memory_space<vmem>>, %arg4: memref<128x32xbf16, #tpu.memory_space<vmem>>) attributes {dimension_semantics = [#tpu.dimension_semantics<parallel>], iteration_bounds = array<i64: 1>, scalar_prefetch = 0 : i64, scratch_operands = 0 : i64, tpu.core_type = #tpu.core_type<tc>, window_params = [{transform_indices = @transform_0, window_bounds = array<i64: 128, 32>}, {pipeline_mode = #tpu.pipeline_mode<synchronous>, transform_indices = @transform_1, window_bounds = array<i64: 1, 32>}, {pipeline_mode = #tpu.pipeline_mode<synchronous>, transform_indices = @transform_2, window_bounds = array<i64: 1, 32>}, {transform_indices = @transform_3, window_bounds = array<i64: 128, 32>}]} {
    %c0 = arith.constant 0 : index
    %c0_0 = arith.constant 0 : index
    %0 = vector.load %arg1[%c0, %c0_0] : memref<128x32xbf16, #tpu.memory_space<vmem>>, vector<128x32xbf16>
    %1 = arith.extf %0 : vector<128x32xbf16> to vector<128x32xf32>
    %c0_1 = arith.constant 0 : index
    %c0_2 = arith.constant 0 : index
    %2 = vector.load %arg2[%c0_1, %c0_2] : memref<1x32xf32, #tpu.memory_space<vmem>>, vector<1x32xf32>
    %3 = vector.broadcast %2 : vector<1x32xf32> to vector<128x32xf32>
    %4 = arith.mulf %1, %3 : vector<128x32xf32>
    %c0_3 = arith.constant 0 : index
    %c0_4 = arith.constant 0 : index
    %5 = vector.load %arg3[%c0_3, %c0_4] : memref<1x32xf32, #tpu.memory_space<vmem>>, vector<1x32xf32>
    %6 = vector.broadcast %5 : vector<1x32xf32> to vector<128x32xf32>
    %7 = arith.addf %4, %6 : vector<128x32xf32>
    %cst = arith.constant 0.000000e+00 : f32
    %8 = vector.broadcast %cst : f32 to vector<128x32xf32>
    %9 = arith.cmpf oge, %7, %8 : vector<128x32xf32>
    %cst_5 = arith.constant 2.000000e-01 : f32
    %10 = vector.broadcast %cst_5 : f32 to vector<128x32xf32>
    %11 = arith.mulf %10, %7 : vector<128x32xf32>
    %12 = arith.select %9, %7, %11 : vector<128x32xi1>, vector<128x32xf32>
    %13 = arith.truncf %12 : vector<128x32xf32> to vector<128x32xbf16>
    %c0_6 = arith.constant 0 : index
    %c0_7 = arith.constant 0 : index
    %14 = vector.load %arg4[%c0_6, %c0_7] : memref<128x32xbf16, #tpu.memory_space<vmem>>, vector<128x32xbf16>
    tpu.vector_store %arg4[%c0_6, %c0_7], %13 {strides = array<i32>} : memref<128x32xbf16, #tpu.memory_space<vmem>>, vector<128x32xbf16>,
    return
  }
  func.func @transform_0(%arg0: i32) -> (i32, i32) {
    %c0_i32 = arith.constant 0 : i32
    %c0_i32_0 = arith.constant 0 : i32
    return %arg0, %c0_i32 : i32, i32
  }
  func.func @transform_1(%arg0: i32) -> (i32, i32) {
    %c0_i32 = arith.constant 0 : i32
    %c0_i32_0 = arith.constant 0 : i32
    %c0_i32_1 = arith.constant 0 : i32
    return %c0_i32, %c0_i32_0 : i32, i32
  }
  func.func @transform_2(%arg0: i32) -> (i32, i32) {
    %c0_i32 = arith.constant 0 : i32
    %c0_i32_0 = arith.constant 0 : i32
    %c0_i32_1 = arith.constant 0 : i32
    return %c0_i32, %c0_i32_0 : i32, i32
  }
  func.func @transform_3(%arg0: i32) -> (i32, i32) {
    %c0_i32 = arith.constant 0 : i32
    %c0_i32_0 = arith.constant 0 : i32
    return %arg0, %c0_i32 : i32, i32
  }
}

module attributes {stable_mosaic.version = 11 : i64} {
  func.func @_mm_kernel(%arg0: i32, %arg1: memref<32x800xbf16, #tpu.memory_space<vmem>>, %arg2: memref<800x64xbf16, #tpu.memory_space<vmem>>, %arg3: memref<1x64xf32, #tpu.memory_space<vmem>>, %arg4: memref<32x64xbf16, #tpu.memory_space<vmem>>, %arg5: memref<1x2x64xf32, #tpu.memory_space<vmem>>) attributes {dimension_semantics = [#tpu.dimension_semantics<parallel>], iteration_bounds = array<i64: 1>, scalar_prefetch = 0 : i64, scratch_operands = 0 : i64, tpu.core_type = #tpu.core_type<tc>, window_params = [{transform_indices = @transform_0, window_bounds = array<i64: 32, 800>}, {pipeline_mode = #tpu.pipeline_mode<synchronous>, transform_indices = @transform_1, window_bounds = array<i64: 800, 64>}, {pipeline_mode = #tpu.pipeline_mode<synchronous>, transform_indices = @transform_2, window_bounds = array<i64: 1, 64>}, {transform_indices = @transform_3, window_bounds = array<i64: 32, 64>}, {transform_indices = @transform_4, window_bounds = array<i64: 1, 2, 64>}]} {
    %c0 = arith.constant 0 : index
    %c0_0 = arith.constant 0 : index
    %0 = vector.load %arg1[%c0, %c0_0] : memref<32x800xbf16, #tpu.memory_space<vmem>>, vector<32x800xbf16>
    %c0_1 = arith.constant 0 : index
    %c0_2 = arith.constant 0 : index
    %1 = vector.load %arg2[%c0_1, %c0_2] : memref<800x64xbf16, #tpu.memory_space<vmem>>, vector<800x64xbf16>
    %cst = arith.constant dense<0.000000e+00> : vector<32x64xf32>
    %2 = tpu.matmul %0, %1, %cst {dimension_numbers = #tpu.dot_dimension_numbers<[1], [0], [0], [1], [0, 0, 1, 1], [], []>} : vector<32x800xbf16>, vector<800x64xbf16>, vector<32x64xf32> -> vector<32x64xf32>
    %c0_3 = arith.constant 0 : index
    %c0_4 = arith.constant 0 : index
    %3 = vector.load %arg3[%c0_3, %c0_4] : memref<1x64xf32, #tpu.memory_space<vmem>>, vector<1x64xf32>
    %4 = vector.broadcast %3 : vector<1x64xf32> to vector<32x64xf32>
    %5 = arith.addf %2, %4 : vector<32x64xf32>
    %6 = tpu.iota {dimensions = array<i32: 0>} : vector<32x1xi32>
    %c32_i32 = arith.constant 32 : i32
    %7 = arith.muli %arg0, %c32_i32 : i32
    %8 = vector.broadcast %7 : i32 to vector<32x1xi32>
    %9 = arith.addi %6, %8 : vector<32x1xi32>
    %c32_i32_5 = arith.constant 32 : i32
    %10 = vector.broadcast %c32_i32_5 : i32 to vector<32x1xi32>
    %11 = arith.cmpi slt, %9, %10 : vector<32x1xi32>
    %cst_6 = arith.constant 0.000000e+00 : f32
    %12 = vector.shape_cast %11 : vector<32x1xi1> to vector<32x1xi1>
    %13 = vector.broadcast %12 : vector<32x1xi1> to vector<32x64xi1>
    %14 = vector.broadcast %cst_6 : f32 to vector<32x64xf32>
    %15 = arith.select %13, %5, %14 : vector<32x64xi1>, vector<32x64xf32>
    %cst_7 = arith.constant dense<0.000000e+00> : vector<64xf32>
    %16 = vector.multi_reduction <add>, %15, %cst_7 [0] : vector<32x64xf32> to vector<64xf32>
    %17 = vector.shape_cast %16 : vector<64xf32> to vector<1x64xf32>
    %c0_8 = arith.constant 0 : index
    %c0_9 = arith.constant 0 : index
    %c0_10 = arith.constant 0 : index
    %18 = vector.load %arg5[%c0_8, %c0_9, %c0_10] : memref<1x2x64xf32, #tpu.memory_space<vmem>>, vector<1x1x64xf32>
    %19 = vector.shape_cast %18 : vector<1x1x64xf32> to vector<1x64xf32>
    %20 = vector.shape_cast %17 : vector<1x64xf32> to vector<1x1x64xf32>
    tpu.vector_store %arg5[%c0_8, %c0_9, %c0_10], %20 {strides = array<i32>} : memref<1x2x64xf32, #tpu.memory_space<vmem>>, vector<1x1x64xf32>,
    %21 = arith.mulf %15, %15 : vector<32x64xf32>
    %cst_11 = arith.constant dense<0.000000e+00> : vector<64xf32>
    %22 = vector.multi_reduction <add>, %21, %cst_11 [0] : vector<32x64xf32> to vector<64xf32>
    %23 = vector.shape_cast %22 : vector<64xf32> to vector<1x64xf32>
    %c0_12 = arith.constant 0 : index
    %c1 = arith.constant 1 : index
    %c0_13 = arith.constant 0 : index
    %24 = vector.load %arg5[%c0_12, %c1, %c0_13] : memref<1x2x64xf32, #tpu.memory_space<vmem>>, vector<1x1x64xf32>
    %25 = vector.shape_cast %24 : vector<1x1x64xf32> to vector<1x64xf32>
    %26 = vector.shape_cast %23 : vector<1x64xf32> to vector<1x1x64xf32>
    tpu.vector_store %arg5[%c0_12, %c1, %c0_13], %26 {strides = array<i32>} : memref<1x2x64xf32, #tpu.memory_space<vmem>>, vector<1x1x64xf32>,
    %27 = arith.truncf %5 : vector<32x64xf32> to vector<32x64xbf16>
    %c0_14 = arith.constant 0 : index
    %c0_15 = arith.constant 0 : index
    %28 = vector.load %arg4[%c0_14, %c0_15] : memref<32x64xbf16, #tpu.memory_space<vmem>>, vector<32x64xbf16>
    tpu.vector_store %arg4[%c0_14, %c0_15], %27 {strides = array<i32>} : memref<32x64xbf16, #tpu.memory_space<vmem>>, vector<32x64xbf16>,
    return
  }
  func.func @transform_0(%arg0: i32) -> (i32, i32) {
    %c0_i32 = arith.constant 0 : i32
    %c0_i32_0 = arith.constant 0 : i32
    return %arg0, %c0_i32 : i32, i32
  }
  func.func @transform_1(%arg0: i32) -> (i32, i32) {
    %c0_i32 = arith.constant 0 : i32
    %c0_i32_0 = arith.constant 0 : i32
    %c0_i32_1 = arith.constant 0 : i32
    return %c0_i32, %c0_i32_0 : i32, i32
  }
  func.func @transform_2(%arg0: i32) -> (i32, i32) {
    %c0_i32 = arith.constant 0 : i32
    %c0_i32_0 = arith.constant 0 : i32
    %c0_i32_1 = arith.constant 0 : i32
    return %c0_i32, %c0_i32_0 : i32, i32
  }
  func.func @transform_3(%arg0: i32) -> (i32, i32) {
    %c0_i32 = arith.constant 0 : i32
    %c0_i32_0 = arith.constant 0 : i32
    return %arg0, %c0_i32 : i32, i32
  }
  func.func @transform_4(%arg0: i32) -> (i32, i32, i32) {
    %c0_i32 = arith.constant 0 : i32
    %c0_i32_0 = arith.constant 0 : i32
    %c0_i32_1 = arith.constant 0 : i32
    return %arg0, %c0_i32, %c0_i32_0 : i32, i32, i32
  }
}

module attributes {stable_mosaic.version = 11 : i64} {
  func.func @_scale_shift_lrelu_kernel(%arg0: i32, %arg1: memref<32x64xbf16, #tpu.memory_space<vmem>>, %arg2: memref<1x64xf32, #tpu.memory_space<vmem>>, %arg3: memref<1x64xf32, #tpu.memory_space<vmem>>, %arg4: memref<32x64xbf16, #tpu.memory_space<vmem>>) attributes {dimension_semantics = [#tpu.dimension_semantics<parallel>], iteration_bounds = array<i64: 1>, scalar_prefetch = 0 : i64, scratch_operands = 0 : i64, tpu.core_type = #tpu.core_type<tc>, window_params = [{transform_indices = @transform_0, window_bounds = array<i64: 32, 64>}, {pipeline_mode = #tpu.pipeline_mode<synchronous>, transform_indices = @transform_1, window_bounds = array<i64: 1, 64>}, {pipeline_mode = #tpu.pipeline_mode<synchronous>, transform_indices = @transform_2, window_bounds = array<i64: 1, 64>}, {transform_indices = @transform_3, window_bounds = array<i64: 32, 64>}]} {
    %c0 = arith.constant 0 : index
    %c0_0 = arith.constant 0 : index
    %0 = vector.load %arg1[%c0, %c0_0] : memref<32x64xbf16, #tpu.memory_space<vmem>>, vector<32x64xbf16>
    %1 = arith.extf %0 : vector<32x64xbf16> to vector<32x64xf32>
    %c0_1 = arith.constant 0 : index
    %c0_2 = arith.constant 0 : index
    %2 = vector.load %arg2[%c0_1, %c0_2] : memref<1x64xf32, #tpu.memory_space<vmem>>, vector<1x64xf32>
    %3 = vector.broadcast %2 : vector<1x64xf32> to vector<32x64xf32>
    %4 = arith.mulf %1, %3 : vector<32x64xf32>
    %c0_3 = arith.constant 0 : index
    %c0_4 = arith.constant 0 : index
    %5 = vector.load %arg3[%c0_3, %c0_4] : memref<1x64xf32, #tpu.memory_space<vmem>>, vector<1x64xf32>
    %6 = vector.broadcast %5 : vector<1x64xf32> to vector<32x64xf32>
    %7 = arith.addf %4, %6 : vector<32x64xf32>
    %cst = arith.constant 0.000000e+00 : f32
    %8 = vector.broadcast %cst : f32 to vector<32x64xf32>
    %9 = arith.cmpf oge, %7, %8 : vector<32x64xf32>
    %cst_5 = arith.constant 2.000000e-01 : f32
    %10 = vector.broadcast %cst_5 : f32 to vector<32x64xf32>
    %11 = arith.mulf %10, %7 : vector<32x64xf32>
    %12 = arith.select %9, %7, %11 : vector<32x64xi1>, vector<32x64xf32>
    %13 = arith.truncf %12 : vector<32x64xf32> to vector<32x64xbf16>
    %c0_6 = arith.constant 0 : index
    %c0_7 = arith.constant 0 : index
    %14 = vector.load %arg4[%c0_6, %c0_7] : memref<32x64xbf16, #tpu.memory_space<vmem>>, vector<32x64xbf16>
    tpu.vector_store %arg4[%c0_6, %c0_7], %13 {strides = array<i32>} : memref<32x64xbf16, #tpu.memory_space<vmem>>, vector<32x64xbf16>,
    return
  }
  func.func @transform_0(%arg0: i32) -> (i32, i32) {
    %c0_i32 = arith.constant 0 : i32
    %c0_i32_0 = arith.constant 0 : i32
    return %arg0, %c0_i32 : i32, i32
  }
  func.func @transform_1(%arg0: i32) -> (i32, i32) {
    %c0_i32 = arith.constant 0 : i32
    %c0_i32_0 = arith.constant 0 : i32
    %c0_i32_1 = arith.constant 0 : i32
    return %c0_i32, %c0_i32_0 : i32, i32
  }
  func.func @transform_2(%arg0: i32) -> (i32, i32) {
    %c0_i32 = arith.constant 0 : i32
    %c0_i32_0 = arith.constant 0 : i32
    %c0_i32_1 = arith.constant 0 : i32
    return %c0_i32, %c0_i32_0 : i32, i32
  }
  func.func @transform_3(%arg0: i32) -> (i32, i32) {
    %c0_i32 = arith.constant 0 : i32
    %c0_i32_0 = arith.constant 0 : i32
    return %arg0, %c0_i32 : i32, i32
  }
}

</mosaic_0001>

<llo_original>
// kernel: netd_forward.7
$region0: #{netd_forward.7}
  #allocation0 [shape = 'u32[]', space=smem, size = 0x4, offset = 0x4, fixed_abs, tag = 'smem constant byte address 0x4 - core index']
  #allocation1 [shape = 'u32[144,128]{1,0:T(1,128)}', space=vmem, size = 0x12000, scoped, tag = 'internal scratch']
  %s0 = inlined_call_operand.vmem [shape: bf16[2048,75], index: 0, kind: input, shape index: {}]
  %s1 = inlined_call_operand.vmem [shape: bf16[75,8], index: 1, kind: input, shape index: {}]
  %s2 = inlined_call_operand.vmem [shape: f32[1,8], index: 2, kind: input, shape index: {}]
  %s3 = inlined_call_operand.vmem [shape: bf16[2048,8], index: 3, kind: output, shape index: {}]
  %s4 = sld [smem:[#allocation0]]
  $region45: #{netd_forward.7} parent=0
    _
  %s6 = ssub.s32 1, %s4
  %s7 = scalar_select 0, %s6, %s4
  loop: start=0, step=1, limit=6
  $region2: #{netd_forward.7} parent=0 // loop_pre_header
    _
  $region3: #{netd_forward.7} parent=0 // loop_header
    %s9 = sphi 0, %s13
    %p10 = scmp.ge.s32.totalorder %s9, 6
    %s19 = sphi 0, %s21
    %s22 = sphi 0, %s19
    %s23 = sphi 0, %s22
    %s39 = sphi 0, %s23
    %s43 = sphi 0, %s43
    %s45 = sphi 0, %s43
    %s46 = sphi 0, %s45
    %s60 = sphi 0, %s46
    %s64 = sphi 0, %s64
    %s66 = sphi 0, %s64
    %s67 = sphi 0, %s66
    %s81 = sphi 0, %s67
    %s87 = sphi 0, %s89
    %s90 = sphi 0, %s87
    %s91 = sphi 0, %s90
    %s107 = sphi 0, %s91
  $region4: #{netd_forward.7} parent=0 // loop_header_branch
    %12 = sbr.rel (%p10) target = $region8
  $region5: #{netd_forward.7} parent=0 // loop_body
    %s14 = ssub.s32 %s9, 1
    %s15 = ssub.s32 %s9, 2
    %s16 = sadd.s32 %s9, 1
    %s17 = ssub.s32 %s9, %s16
    %p18 = scmp.eq.s32.totalorder %s17, 0
    %s20 = sadd.s32 %s19, 1
    %s21 = scalar_select %p18, %s19, %s20
    %p24 = pneg %p18
    %p25 = scmp.eq.s32.totalorder %s9, 3
    %p26 = por %p24, %p25
    %p27 = scmp.ne.s32.totalorder %s19, %s22
    %p28 = scmp.eq.s32.totalorder %s9, 0
    %p29 = por %p27, %p28
    %p30 = scmp.ne.s32.totalorder %s19, %s22
    %p31 = scmp.eq.s32.totalorder %s14, 3
    %p32 = por %p30, %p31
    %p33 = scmp.ne.s32.totalorder %s22, %s23
    %p34 = scmp.eq.s32.totalorder %s14, 0
    %p35 = por %p33, %p34
    %p36 = scmp.ne.s32.totalorder %s22, %s23
    %p37 = scmp.eq.s32.totalorder %s15, 3
    %p38 = por %p36, %p37
    %p40 = scmp.ne.s32.totalorder %s23, %s39
    %p41 = scmp.eq.s32.totalorder %s15, 0
    %p42 = por %p40, %p41
    %s44 = sadd.s32 %s43, 1
    %p47 = scmp.eq.s32.totalorder %s9, 3
    %p48 = scmp.ne.s32.totalorder %s43, %s45
    %p49 = scmp.eq.s32.totalorder %s9, 0
    %p50 = por %p48, %p49
    %p51 = scmp.ne.s32.totalorder %s43, %s45
    %p52 = scmp.eq.s32.totalorder %s14, 3
    %p53 = por %p51, %p52
    %p54 = scmp.ne.s32.totalorder %s45, %s46
    %p55 = scmp.eq.s32.totalorder %s14, 0
    %p56 = por %p54, %p55
    %p57 = scmp.ne.s32.totalorder %s45, %s46
    %p58 = scmp.eq.s32.totalorder %s15, 3
    %p59 = por %p57, %p58
    %p61 = scmp.ne.s32.totalorder %s46, %s60
    %p62 = scmp.eq.s32.totalorder %s15, 0
    %p63 = por %p61, %p62
    %s65 = sadd.s32 %s64, 1
    %p68 = scmp.eq.s32.totalorder %s9, 3
    %p69 = scmp.ne.s32.totalorder %s64, %s66
    %p70 = scmp.eq.s32.totalorder %s9, 0
    %p71 = por %p69, %p70
    %p72 = scmp.ne.s32.totalorder %s64, %s66
    %p73 = scmp.eq.s32.totalorder %s14, 3
    %p74 = por %p72, %p73
    %p75 = scmp.ne.s32.totalorder %s66, %s67
    %p76 = scmp.eq.s32.totalorder %s14, 0
    %p77 = por %p75, %p76
    %p78 = scmp.ne.s32.totalorder %s66, %s67
    %p79 = scmp.eq.s32.totalorder %s15, 3
    %p80 = por %p78, %p79
    %p82 = scmp.ne.s32.totalorder %s67, %s81
    %p83 = scmp.eq.s32.totalorder %s15, 0
    %p84 = por %p82, %p83
    %s85 = ssub.s32 %s9, %s16
    %p86 = scmp.eq.s32.totalorder %s85, 0
    %s88 = sadd.s32 %s87, 1
    %s89 = scalar_select %p86, %s87, %s88
    %p92 = pneg %p86
    %p93 = scmp.eq.s32.totalorder %s9, 3
    %p94 = por %p92, %p93
    %p95 = scmp.ne.s32.totalorder %s87, %s90
    %p96 = scmp.eq.s32.totalorder %s9, 0
    %p97 = por %p95, %p96
    %p98 = scmp.ne.s32.totalorder %s87, %s90
    %p99 = scmp.eq.s32.totalorder %s14, 3
    %p100 = por %p98, %p99
    %p101 = scmp.ne.s32.totalorder %s90, %s91
    %p102 = scmp.eq.s32.totalorder %s14, 0
    %p103 = por %p101, %p102
    %p104 = scmp.ne.s32.totalorder %s90, %s91
    %p105 = scmp.eq.s32.totalorder %s15, 3
    %p106 = por %p104, %p105
    %p108 = scmp.ne.s32.totalorder %s91, %s107
    %p109 = scmp.eq.s32.totalorder %s15, 0
    %p110 = por %p108, %p109
    %p111 = scmp.le.s32.totalorder 1, %s9
    %p112 = scmp.lt.s32.totalorder %s9, 5
    %p113 = pnand %p111, %p112
    %p114 = pneg %p113
    // Predicated region
    $region9: #{netd_forward.7} parent=5 // pred_check
      _
    $region10: #{netd_forward.7} parent=5 // pred_check_branch
      %116 = sbr.rel (%p113) target = $region12
    $region11: #{netd_forward.7} parent=5 // pred_region
      %s117 = ssub.s32 %s9, 1
      // Predicated region
      $region13: #{netd_forward.7} parent=11 // pred_check
        %p118 = pneg %p56
      $region14: #{netd_forward.7} parent=11 // pred_check_branch
        %120 = sbr.rel (%p118) target = $region16
      $region15: #{netd_forward.7} parent=11 // pred_region
        _
      $region16: #{netd_forward.7} parent=11 // pred_fallthru
        _
      // Predicated region
      $region17: #{netd_forward.7} parent=11 // pred_check
        %p121 = pneg %p77
      $region18: #{netd_forward.7} parent=11 // pred_check_branch
        %123 = sbr.rel (%p121) target = $region20
      $region19: #{netd_forward.7} parent=11 // pred_region
        _
      $region20: #{netd_forward.7} parent=11 // pred_fallthru
        _
    $region12: #{netd_forward.7} parent=5 // pred_fallthru
      _
    %p124 = scmp.lt.s32.totalorder %s9, 4
    // Predicated region
    $region21: #{netd_forward.7} parent=5 // pred_check
      %p125 = pneg %p124
    $region22: #{netd_forward.7} parent=5 // pred_check_branch
      %127 = sbr.rel (%p125) target = $region24
    $region23: #{netd_forward.7} parent=5 // pred_region
      // Predicated region
      $region25: #{netd_forward.7} parent=23 // pred_check
        %p128 = pneg %p29
      $region26: #{netd_forward.7} parent=23 // pred_check_branch
        %130 = sbr.rel (%p128) target = $region28
      $region27: #{netd_forward.7} parent=23 // pred_region
        %s131 = smul.u32 64, %s9
        %p132 = scmp.lt.s32.totalorder %s131, 255
        %s133 = scalar_select %p132, %s131, 255
        %s134 = smul.addr %s133, 4
        %s135 = scalar_lea.vmem %s0, %s134
        %s136 = smul.u32 64, %s9
      $region28: #{netd_forward.7} parent=23 // pred_fallthru
        _
    $region24: #{netd_forward.7} parent=5 // pred_fallthru
      _
    %p137 = scmp.le.s32.totalorder 1, %s9
    %p138 = scmp.lt.s32.totalorder %s9, 5
    %p139 = pnand %p137, %p138
    %p140 = pneg %p139
    // Predicated region
    $region29: #{netd_forward.7} parent=5 // pred_check
      _
    $region30: #{netd_forward.7} parent=5 // pred_check_branch
      %142 = sbr.rel (%p139) target = $region32
    $region31: #{netd_forward.7} parent=5 // pred_region
      %s143 = ssub.s32 %s9, 1
      %s144 = smul.u32 64, %s14
      %p145 = scmp.lt.s32.totalorder %s144, 255
      %s146 = scalar_select %p145, %s144, 255
      %s147 = smul.addr %s146, 4
      %s148 = scalar_lea.vmem %s0, %s147
      %p149 = pneg %p35
      %p150 = pneg %p32
      %p151 = pneg %p56
      %p152 = pneg %p53
      %p153 = pneg %p77
      %p154 = pneg %p74
      %p155 = pneg %p103
      %p156 = pneg %p100
      %s157 = smul.u32 64, %s14
      %p158 = scmp.lt.s32.totalorder %s157, 255
      %s159 = scalar_select %p158, %s157, 255
      %s160 = smul.addr %s159, 4
      %s161 = scalar_lea.vmem %s3, %s160
      %s162 = smul.u32 64, %s14
      %p163 = scmp.lt.s32.totalorder %s162, 255
      %s164 = scalar_select %p163, %s162, 255
      %s165 = smul.addr %s164, 4
      %s166 = scalar_lea.vmem %s0, %s165
      %s167 = smul.u32 64, %s14
      %s168 = smul.u32 64, %s14
      %p169 = scmp.lt.s32.totalorder %s168, 255
      %s170 = scalar_select %p169, %s168, 255
      %s171 = smul.addr %s170, 4
      %s172 = scalar_lea.vmem %s3, %s171
      %s173 = smul.u32 64, %s14
      %v175 = vld [vmem:[%s166] sm:$0xf]
      %v176 = vld [vmem:[%s166 + $0x4] sm:$0xf]
      %v177 = vld [vmem:[%s166 + $0x8] sm:$0xf]
      %v178 = vld [vmem:[%s166 + $0xc] sm:$0xf]
      %v179 = vld [vmem:[%s166 + $0x10] sm:$0xf]
      %v180 = vld [vmem:[%s166 + $0x14] sm:$0xf]
      %v181 = vld [vmem:[%s166 + $0x18] sm:$0xf]
      %v182 = vld [vmem:[%s166 + $0x1c] sm:$0xf]
      %v183 = vld [vmem:[%s166 + $0x20] sm:$0xf]
      %v184 = vld [vmem:[%s166 + $0x24] sm:$0xf]
      %v185 = vld [vmem:[%s166 + $0x28] sm:$0xf]
      %v186 = vld [vmem:[%s166 + $0x2c] sm:$0xf]
      %v187 = vld [vmem:[%s166 + $0x30] sm:$0xf]
      %v188 = vld [vmem:[%s166 + $0x34] sm:$0xf]
      %v189 = vld [vmem:[%s166 + $0x38] sm:$0xf]
      %v190 = vld [vmem:[%s166 + $0x3c] sm:$0xf]
      %v191 = vld [vmem:[%s166 + $0x40] sm:$0xf]
      %v192 = vld [vmem:[%s166 + $0x44] sm:$0xf]
      %v193 = vld [vmem:[%s166 + $0x48] sm:$0xf]
      %v194 = vld [vmem:[%s166 + $0x4c] sm:$0xf]
      %v195 = vld [vmem:[%s166 + $0x50] sm:$0xf]
      %v196 = vld [vmem:[%s166 + $0x54] sm:$0xf]
      %v197 = vld [vmem:[%s166 + $0x58] sm:$0xf]
      %v198 = vld [vmem:[%s166 + $0x5c] sm:$0xf]
      %v199 = vld [vmem:[%s166 + $0x60] sm:$0xf]
      %v200 = vld [vmem:[%s166 + $0x64] sm:$0xf]
      %v201 = vld [vmem:[%s166 + $0x68] sm:$0xf]
      %v202 = vld [vmem:[%s166 + $0x6c] sm:$0xf]
      %v203 = vld [vmem:[%s166 + $0x70] sm:$0xf]
      %v204 = vld [vmem:[%s166 + $0x74] sm:$0xf]
      %v205 = vld [vmem:[%s166 + $0x78] sm:$0xf]
      %v206 = vld [vmem:[%s166 + $0x7c] sm:$0xf]
      %v207 = vld [vmem:[%s166 + $0x80] sm:$0xf]
      %v208 = vld [vmem:[%s166 + $0x84] sm:$0xf]
      %v209 = vld [vmem:[%s166 + $0x88] sm:$0xf]
      %v210 = vld [vmem:[%s166 + $0x8c] sm:$0xf]
      %v211 = vld [vmem:[%s166 + $0x90] sm:$0xf]
      %v212 = vld [vmem:[%s166 + $0x94] sm:$0xf]
      %v213 = vld [vmem:[%s166 + $0x98] sm:$0xf]
      %v214 = vld [vmem:[%s166 + $0x9c] sm:$0xf]
      %v215 = vld [vmem:[%s166 + $0xa0] sm:$0xf]
      %v216 = vld [vmem:[%s166 + $0xa4] sm:$0xf]
      %v217 = vld [vmem:[%s166 + $0xa8] sm:$0xf]
      %v218 = vld [vmem:[%s166 + $0xac] sm:$0xf]
      %v219 = vld [vmem:[%s166 + $0xb0] sm:$0xf]
      %v220 = vld [vmem:[%s166 + $0xb4] sm:$0xf]
      %v221 = vld [vmem:[%s166 + $0xb8] sm:$0xf]
      %v222 = vld [vmem:[%s166 + $0xbc] sm:$0xf]
      %v223 = vld [vmem:[%s166 + $0xc0] sm:$0xf]
      %v224 = vld [vmem:[%s166 + $0xc4] sm:$0xf]
      %v225 = vld [vmem:[%s166 + $0xc8] sm:$0xf]
      %v226 = vld [vmem:[%s166 + $0xcc] sm:$0xf]
      %v227 = vld [vmem:[%s166 + $0xd0] sm:$0xf]
      %v228 = vld [vmem:[%s166 + $0xd4] sm:$0xf]
      %v229 = vld [vmem:[%s166 + $0xd8] sm:$0xf]
      %v230 = vld [vmem:[%s166 + $0xdc] sm:$0xf]
      %v231 = vld [vmem:[%s166 + $0xe0] sm:$0xf]
      %v232 = vld [vmem:[%s166 + $0xe4] sm:$0xf]
      %v233 = vld [vmem:[%s166 + $0xe8] sm:$0xf]
      %v234 = vld [vmem:[%s166 + $0xec] sm:$0xf]
      %v235 = vld [vmem:[%s166 + $0xf0] sm:$0xf]
      %v236 = vld [vmem:[%s166 + $0xf4] sm:$0xf]
      %v237 = vld [vmem:[%s166 + $0xf8] sm:$0xf]
      %v238 = vld [vmem:[%s166 + $0xfc] sm:$0xf]
      %v239 = vld [vmem:[%s1] sm:$0xf]
      %v240 = vld [vmem:[%s1 + $0x4] sm:$0xf]
      %v241 = vld [vmem:[%s1 + $0x8] sm:$0xf]
      %v242 = vld [vmem:[%s1 + $0xc] sm:$0xf]
      %v243 = vld [vmem:[%s1 + $0x10] sm:$0xf]
      %v244 = vld [vmem:[%s1 + $0x14] sm:$0xf]
      %v245 = vld [vmem:[%s1 + $0x18] sm:$0xf]
      %v246 = vld [vmem:[%s1 + $0x1c] sm:$0xf]
      %v247 = vld [vmem:[%s1 + $0x20] sm:$0xf]
      %v248 = vld [vmem:[%s1 + $0x24] sm:$0x3]
      %v249 = vld [vmem:[%s2] sm:$0x1]
      %v251 = vlaneseq
      %v252 = vshrl.u32 %v251, 7
      %v253 = vsub.s32 0, %v252
      %v254 = vrot.slane %v249, %v253
      %v320 = vunpack.c.l.b16 %v175
      %v321 = vunpack.c.l.b16 %v176
      %v322 = vunpack.c.l.b16 %v177
      %v323 = vunpack.c.l.b16 %v178
      %v324 = vunpack.c.l.b16 %v179
      %v325 = vunpack.c.l.b16 %v180
      %v326 = vunpack.c.l.b16 %v181
      %v327 = vunpack.c.l.b16 %v182
      %v328 = vunpack.c.l.b16 %v183
      %v329 = vunpack.c.l.b16 %v184
      %v330 = vunpack.c.l.b16 %v185
      %v331 = vunpack.c.l.b16 %v186
      %v332 = vunpack.c.l.b16 %v187
      %v333 = vunpack.c.l.b16 %v188
      %v334 = vunpack.c.l.b16 %v189
      %v335 = vunpack.c.l.b16 %v190
      %v336 = vunpack.c.l.b16 %v191
      %v337 = vunpack.c.l.b16 %v192
      %v338 = vunpack.c.l.b16 %v193
      %v339 = vunpack.c.l.b16 %v194
      %v340 = vunpack.c.l.b16 %v195
      %v341 = vunpack.c.l.b16 %v196
      %v342 = vunpack.c.l.b16 %v197
      %v343 = vunpack.c.l.b16 %v198
      %v344 = vunpack.c.l.b16 %v199
      %v345 = vunpack.c.l.b16 %v200
      %v346 = vunpack.c.l.b16 %v201
      %v347 = vunpack.c.l.b16 %v202
      %v348 = vunpack.c.l.b16 %v203
      %v349 = vunpack.c.l.b16 %v204
      %v350 = vunpack.c.l.b16 %v205
      %v351 = vunpack.c.l.b16 %v206
      %v352 = vunpack.c.l.b16 %v207
      %v353 = vunpack.c.l.b16 %v208
      %v354 = vunpack.c.l.b16 %v209
      %v355 = vunpack.c.l.b16 %v210
      %v356 = vunpack.c.l.b16 %v211
      %v357 = vunpack.c.l.b16 %v212
      %v358 = vunpack.c.l.b16 %v213
      %v359 = vunpack.c.l.b16 %v214
      %v360 = vunpack.c.l.b16 %v215
      %v361 = vunpack.c.l.b16 %v216
      %v362 = vunpack.c.l.b16 %v217
      %v363 = vunpack.c.l.b16 %v218
      %v364 = vunpack.c.l.b16 %v219
      %v365 = vunpack.c.l.b16 %v220
      %v366 = vunpack.c.l.b16 %v221
      %v367 = vunpack.c.l.b16 %v222
      %v368 = vunpack.c.l.b16 %v223
      %v369 = vunpack.c.l.b16 %v224
      %v370 = vunpack.c.l.b16 %v225
      %v371 = vunpack.c.l.b16 %v226
      %v372 = vunpack.c.l.b16 %v227
      %v373 = vunpack.c.l.b16 %v228
      %v374 = vunpack.c.l.b16 %v229
      %v375 = vunpack.c.l.b16 %v230
      %v376 = vunpack.c.l.b16 %v231
      %v377 = vunpack.c.l.b16 %v232
      %v378 = vunpack.c.l.b16 %v233
      %v379 = vunpack.c.l.b16 %v234
      %v380 = vunpack.c.l.b16 %v235
      %v381 = vunpack.c.l.b16 %v236
      %v382 = vunpack.c.l.b16 %v237
      %v383 = vunpack.c.l.b16 %v238
      %v384 = vpack.c.b16 %v321, %v320
      %v385 = vpack.c.b16 %v323, %v322
      %v386 = vpack.c.b16 %v325, %v324
      %v387 = vpack.c.b16 %v327, %v326
      %v388 = vpack.c.b16 %v329, %v328
      %v389 = vpack.c.b16 %v331, %v330
      %v390 = vpack.c.b16 %v333, %v332
      %v391 = vpack.c.b16 %v335, %v334
      %v392 = vpack.c.b16 %v337, %v336
      %v393 = vpack.c.b16 %v339, %v338
      %v394 = vpack.c.b16 %v341, %v340
      %v395 = vpack.c.b16 %v343, %v342
      %v396 = vpack.c.b16 %v345, %v344
      %v397 = vpack.c.b16 %v347, %v346
      %v398 = vpack.c.b16 %v349, %v348
      %v399 = vpack.c.b16 %v351, %v350
      %v400 = vpack.c.b16 %v353, %v352
      %v401 = vpack.c.b16 %v355, %v354
      %v402 = vpack.c.b16 %v357, %v356
      %v403 = vpack.c.b16 %v359, %v358
      %v404 = vpack.c.b16 %v361, %v360
      %v405 = vpack.c.b16 %v363, %v362
      %v406 = vpack.c.b16 %v365, %v364
      %v407 = vpack.c.b16 %v367, %v366
      %v408 = vpack.c.b16 %v369, %v368
      %v409 = vpack.c.b16 %v371, %v370
      %v410 = vpack.c.b16 %v373, %v372
      %v411 = vpack.c.b16 %v375, %v374
      %v412 = vpack.c.b16 %v377, %v376
      %v413 = vpack.c.b16 %v379, %v378
      %v414 = vpack.c.b16 %v381, %v380
      %v415 = vpack.c.b16 %v383, %v382
      %v426 = vunpack.c.l.b16 %v239
      %v427 = vunpack.c.l.b16 %v240
      %v428 = vunpack.c.l.b16 %v241
      %v429 = vunpack.c.l.b16 %v242
      %v430 = vunpack.c.l.b16 %v243
      %v431 = vunpack.c.l.b16 %v244
      %v432 = vunpack.c.l.b16 %v245
      %v433 = vunpack.c.l.b16 %v246
      %v434 = vunpack.c.l.b16 %v247
      %v435 = vunpack.c.l.b16 %v248
      %v436 = vpack.c.b16 %v427, %v426
      %v437 = vpack.c.b16 %v429, %v428
      %v438 = vpack.c.b16 %v431, %v430
      %v439 = vpack.c.b16 %v433, %v432
      %v440 = vpack.c.b16 %v435, %v434
      %vm445 = vcmask 613376
      %v447 = vsel %vm445, %v384, 0
      %v450 = vsel %vm445, %v385, 0
      %v453 = vsel %vm445, %v386, 0
      %v456 = vsel %vm445, %v387, 0
      %v459 = vsel %vm445, %v388, 0
      %v462 = vsel %vm445, %v389, 0
      %v465 = vsel %vm445, %v390, 0
      %v468 = vsel %vm445, %v391, 0
      %v471 = vsel %vm445, %v392, 0
      %v474 = vsel %vm445, %v393, 0
      %v477 = vsel %vm445, %v394, 0
      %v480 = vsel %vm445, %v395, 0
      %v483 = vsel %vm445, %v396, 0
      %v486 = vsel %vm445, %v397, 0
      %v489 = vsel %vm445, %v398, 0
      %v492 = vsel %vm445, %v399, 0
      %v495 = vsel %vm445, %v400, 0
      %v498 = vsel %vm445, %v401, 0
      %v501 = vsel %vm445, %v402, 0
      %v504 = vsel %vm445, %v403, 0
      %v507 = vsel %vm445, %v404, 0
      %v510 = vsel %vm445, %v405, 0
      %v513 = vsel %vm445, %v406, 0
      %v516 = vsel %vm445, %v407, 0
      %v519 = vsel %vm445, %v408, 0
      %v522 = vsel %vm445, %v409, 0
      %v525 = vsel %vm445, %v410, 0
      %v528 = vsel %vm445, %v411, 0
      %v531 = vsel %vm445, %v412, 0
      %v534 = vsel %vm445, %v413, 0
      %v537 = vsel %vm445, %v414, 0
      %v540 = vsel %vm445, %v415, 0
      %vm542 = vcmask 1044480
      %vm543 = vcmask 1045504
      %v544 = vsel %vm542, 4294967295, 65535
      %v545 = vsel %vm543, %v544, 0
      %v547 = vand.u32 %v440, %v545
      %549 = vmatprep.subr.bf16.mxu0 0
      %550 = vmatpush1.bf16.msra.mxu0 %v436
      %551 = vmatprep.subr.bf16.mxu0 0
      %552 = vmatpush1.bf16.msra.mxu0 %v437
      %553 = vmatprep.subr.bf16.mxu0 0
      %554 = vmatpush1.bf16.msra.mxu0 %v438
      %555 = vmatprep.subr.bf16.mxu0 0
      %556 = vmatpush1.bf16.msra.mxu0 %v439
      %557 = vmatprep.subr.bf16.mxu0 0
      %558 = vmatpush1.bf16.msra.mxu0 %v547
      %559 = vmatprep.subr.bf16.mxu0 0
      %560 = vmatpush1.bf16.msra.mxu0 0
      %561 = vmatprep.subr.bf16.mxu0 0
      %562 = vmatpush1.bf16.msra.mxu0 0
      %563 = vmatprep.subr.bf16.mxu0 0
      %564 = vmatpush1.bf16.msra.mxu0 0
      %565 = vmatprep.subr.bf16.mxu0 0
      %566 = vmatpush1.bf16.msra.mxu0 0
      %567 = vmatprep.subr.bf16.mxu0 0
      %568 = vmatpush1.bf16.msra.mxu0 0
      %569 = vmatprep.subr.bf16.mxu0 0
      %570 = vmatpush1.bf16.msra.mxu0 0
      %571 = vmatprep.subr.bf16.mxu0 0
      %572 = vmatpush1.bf16.msra.mxu0 0
      %573 = vmatprep.subr.bf16.mxu0 0
      %574 = vmatpush1.bf16.msra.mxu0 0
      %575 = vmatprep.subr.bf16.mxu0 0
      %576 = vmatpush1.bf16.msra.mxu0 0
      %577 = vmatprep.subr.bf16.mxu0 0
      %578 = vmatpush1.bf16.msra.mxu0 0
      %579 = vmatprep.subr.bf16.mxu0 0
      %580 = vmatpush1.bf16.msra.mxu0 0
      %581 = vmatprep.mubr.bf16.mxu0 0
      %582 = vmatmul.mubr.bf16.gmra.mrb[0].mxu0 %v447
      %v583 = vpop.f32.mrb[0].mxu0
      %v584 = vadd.f32 %v254, %v583
      %v585 = vpop.f32.mrb[0].mxu0
      %v586 = vpop.f32.mrb[0].mxu0
      %v587 = vadd.f32 %v254, %v586
      %v588 = vpop.f32.mrb[0].mxu0
      %589 = vmatprep.mubr.bf16.mxu0 0
      %590 = vmatmul.mubr.bf16.gmra.mrb[0].mxu0 %v450
      %v591 = vpop.f32.mrb[0].mxu0
      %v592 = vadd.f32 %v254, %v591
      %v593 = vpop.f32.mrb[0].mxu0
      %v594 = vpop.f32.mrb[0].mxu0
      %v595 = vadd.f32 %v254, %v594
      %v596 = vpop.f32.mrb[0].mxu0
      %597 = vmatprep.mubr.bf16.mxu0 0
      %598 = vmatmul.mubr.bf16.gmra.mrb[0].mxu0 %v453
      %v599 = vpop.f32.mrb[0].mxu0
      %v600 = vadd.f32 %v254, %v599
      %v601 = vpop.f32.mrb[0].mxu0
      %v602 = vpop.f32.mrb[0].mxu0
      %v603 = vadd.f32 %v254, %v602
      %v604 = vpop.f32.mrb[0].mxu0
      %605 = vmatprep.mubr.bf16.mxu0 0
      %606 = vmatmul.mubr.bf16.gmra.mrb[0].mxu0 %v456
      %v607 = vpop.f32.mrb[0].mxu0
      %v608 = vadd.f32 %v254, %v607
      %v609 = vpop.f32.mrb[0].mxu0
      %v610 = vpop.f32.mrb[0].mxu0
      %v611 = vadd.f32 %v254, %v610
      %v612 = vpop.f32.mrb[0].mxu0
      %613 = vmatprep.mubr.bf16.mxu0 0
      %614 = vmatmul.mubr.bf16.gmra.mrb[0].mxu0 %v459
      %v615 = vpop.f32.mrb[0].mxu0
      %v616 = vadd.f32 %v254, %v615
      %v617 = vpop.f32.mrb[0].mxu0
      %v618 = vpop.f32.mrb[0].mxu0
      %v619 = vadd.f32 %v254, %v618
      %v620 = vpop.f32.mrb[0].mxu0
      %621 = vmatprep.mubr.bf16.mxu0 0
      %622 = vmatmul.mubr.bf16.gmra.mrb[0].mxu0 %v462
      %v623 = vpop.f32.mrb[0].mxu0
      %v624 = vadd.f32 %v254, %v623
      %v625 = vpop.f32.mrb[0].mxu0
      %v626 = vpop.f32.mrb[0].mxu0
      %v627 = vadd.f32 %v254, %v626
      %v628 = vpop.f32.mrb[0].mxu0
      %629 = vmatprep.mubr.bf16.mxu0 0
      %630 = vmatmul.mubr.bf16.gmra.mrb[0].mxu0 %v465
      %v631 = vpop.f32.mrb[0].mxu0
      %v632 = vadd.f32 %v254, %v631
      %v633 = vpop.f32.mrb[0].mxu0
      %v634 = vpop.f32.mrb[0].mxu0
      %v635 = vadd.f32 %v254, %v634
      %v636 = vpop.f32.mrb[0].mxu0
      %637 = vmatprep.mubr.bf16.mxu0 0
      %638 = vmatmul.mubr.bf16.gmra.mrb[0].mxu0 %v468
      %v639 = vpop.f32.mrb[0].mxu0
      %v640 = vadd.f32 %v254, %v639
      %v641 = vpop.f32.mrb[0].mxu0
      %v642 = vpop.f32.mrb[0].mxu0
      %v643 = vadd.f32 %v254, %v642
      %v644 = vpop.f32.mrb[0].mxu0
      %645 = vmatprep.mubr.bf16.mxu0 0
      %646 = vmatmul.mubr.bf16.gmra.mrb[0].mxu0 %v471
      %v647 = vpop.f32.mrb[0].mxu0
      %v648 = vadd.f32 %v254, %v647
      %v649 = vpop.f32.mrb[0].mxu0
      %v650 = vpop.f32.mrb[0].mxu0
      %v651 = vadd.f32 %v254, %v650
      %v652 = vpop.f32.mrb[0].mxu0
      %653 = vmatprep.mubr.bf16.mxu0 0
      %654 = vmatmul.mubr.bf16.gmra.mrb[0].mxu0 %v474
      %v655 = vpop.f32.mrb[0].mxu0
      %v656 = vadd.f32 %v254, %v655
      %v657 = vpop.f32.mrb[0].mxu0
      %v658 = vpop.f32.mrb[0].mxu0
      %v659 = vadd.f32 %v254, %v658
      %v660 = vpop.f32.mrb[0].mxu0
      %661 = vmatprep.mubr.bf16.mxu0 0
      %662 = vmatmul.mubr.bf16.gmra.mrb[0].mxu0 %v477
      %v663 = vpop.f32.mrb[0].mxu0
      %v664 = vadd.f32 %v254, %v663
      %v665 = vpop.f32.mrb[0].mxu0
      %v666 = vpop.f32.mrb[0].mxu0
      %v667 = vadd.f32 %v254, %v666
      %v668 = vpop.f32.mrb[0].mxu0
      %669 = vmatprep.mubr.bf16.mxu0 0
      %670 = vmatmul.mubr.bf16.gmra.mrb[0].mxu0 %v480
      %v671 = vpop.f32.mrb[0].mxu0
      %v672 = vadd.f32 %v254, %v671
      %v673 = vpop.f32.mrb[0].mxu0
      %v674 = vpop.f32.mrb[0].mxu0
      %v675 = vadd.f32 %v254, %v674
      %v676 = vpop.f32.mrb[0].mxu0
      %677 = vmatprep.mubr.bf16.mxu0 0
      %678 = vmatmul.mubr.bf16.gmra.mrb[0].mxu0 %v483
      %v679 = vpop.f32.mrb[0].mxu0
      %v680 = vadd.f32 %v254, %v679
      %v681 = vpop.f32.mrb[0].mxu0
      %v682 = vpop.f32.mrb[0].mxu0
      %v683 = vadd.f32 %v254, %v682
      %v684 = vpop.f32.mrb[0].mxu0
      %685 = vmatprep.mubr.bf16.mxu0 0
      %686 = vmatmul.mubr.bf16.gmra.mrb[0].mxu0 %v486
      %v687 = vpop.f32.mrb[0].mxu0
      %v688 = vadd.f32 %v254, %v687
      %v689 = vpop.f32.mrb[0].mxu0
      %v690 = vpop.f32.mrb[0].mxu0
      %v691 = vadd.f32 %v254, %v690
      %v692 = vpop.f32.mrb[0].mxu0
      %693 = vmatprep.mubr.bf16.mxu0 0
      %694 = vmatmul.mubr.bf16.gmra.mrb[0].mxu0 %v489
      %v695 = vpop.f32.mrb[0].mxu0
      %v696 = vadd.f32 %v254, %v695
      %v697 = vpop.f32.mrb[0].mxu0
      %v698 = vpop.f32.mrb[0].mxu0
      %v699 = vadd.f32 %v254, %v698
      %v700 = vpop.f32.mrb[0].mxu0
      %701 = vmatprep.mubr.bf16.mxu0 0
      %702 = vmatmul.mubr.bf16.gmra.mrb[0].mxu0 %v492
      %v703 = vpop.f32.mrb[0].mxu0
      %v704 = vadd.f32 %v254, %v703
      %v705 = vpop.f32.mrb[0].mxu0
      %v706 = vpop.f32.mrb[0].mxu0
      %v707 = vadd.f32 %v254, %v706
      %v708 = vpop.f32.mrb[0].mxu0
      %709 = vmatprep.mubr.bf16.mxu0 0
      %710 = vmatmul.mubr.bf16.gmra.mrb[0].mxu0 %v495
      %v711 = vpop.f32.mrb[0].mxu0
      %v712 = vadd.f32 %v254, %v711
      %v713 = vpop.f32.mrb[0].mxu0
      %v714 = vpop.f32.mrb[0].mxu0
      %v715 = vadd.f32 %v254, %v714
      %v716 = vpop.f32.mrb[0].mxu0
      %717 = vmatprep.mubr.bf16.mxu0 0
      %718 = vmatmul.mubr.bf16.gmra.mrb[0].mxu0 %v498
      %v719 = vpop.f32.mrb[0].mxu0
      %v720 = vadd.f32 %v254, %v719
      %v721 = vpop.f32.mrb[0].mxu0
      %v722 = vpop.f32.mrb[0].mxu0
      %v723 = vadd.f32 %v254, %v722
      %v724 = vpop.f32.mrb[0].mxu0
      %725 = vmatprep.mubr.bf16.mxu0 0
      %726 = vmatmul.mubr.bf16.gmra.mrb[0].mxu0 %v501
      %v727 = vpop.f32.mrb[0].mxu0
      %v728 = vadd.f32 %v254, %v727
      %v729 = vpop.f32.mrb[0].mxu0
      %v730 = vpop.f32.mrb[0].mxu0
      %v731 = vadd.f32 %v254, %v730
      %v732 = vpop.f32.mrb[0].mxu0
      %733 = vmatprep.mubr.bf16.mxu0 0
      %734 = vmatmul.mubr.bf16.gmra.mrb[0].mxu0 %v504
      %v735 = vpop.f32.mrb[0].mxu0
      %v736 = vadd.f32 %v254, %v735
      %v737 = vpop.f32.mrb[0].mxu0
      %v738 = vpop.f32.mrb[0].mxu0
      %v739 = vadd.f32 %v254, %v738
      %v740 = vpop.f32.mrb[0].mxu0
      %741 = vmatprep.mubr.bf16.mxu0 0
      %742 = vmatmul.mubr.bf16.gmra.mrb[0].mxu0 %v507
      %v743 = vpop.f32.mrb[0].mxu0
      %v744 = vadd.f32 %v254, %v743
      %v745 = vpop.f32.mrb[0].mxu0
      %v746 = vpop.f32.mrb[0].mxu0
      %v747 = vadd.f32 %v254, %v746
      %v748 = vpop.f32.mrb[0].mxu0
      %749 = vmatprep.mubr.bf16.mxu0 0
      %750 = vmatmul.mubr.bf16.gmra.mrb[0].mxu0 %v510
      %v751 = vpop.f32.mrb[0].mxu0
      %v752 = vadd.f32 %v254, %v751
      %v753 = vpop.f32.mrb[0].mxu0
      %v754 = vpop.f32.mrb[0].mxu0
      %v755 = vadd.f32 %v254, %v754
      %v756 = vpop.f32.mrb[0].mxu0
      %757 = vmatprep.mubr.bf16.mxu0 0
      %758 = vmatmul.mubr.bf16.gmra.mrb[0].mxu0 %v513
      %v759 = vpop.f32.mrb[0].mxu0
      %v760 = vadd.f32 %v254, %v759
      %v761 = vpop.f32.mrb[0].mxu0
      %v762 = vpop.f32.mrb[0].mxu0
      %v763 = vadd.f32 %v254, %v762
      %v764 = vpop.f32.mrb[0].mxu0
      %765 = vmatprep.mubr.bf16.mxu0 0
      %766 = vmatmul.mubr.bf16.gmra.mrb[0].mxu0 %v516
      %v767 = vpop.f32.mrb[0].mxu0
      %v768 = vadd.f32 %v254, %v767
      %v769 = vpop.f32.mrb[0].mxu0
      %v770 = vpop.f32.mrb[0].mxu0
      %v771 = vadd.f32 %v254, %v770
      %v772 = vpop.f32.mrb[0].mxu0
      %773 = vmatprep.mubr.bf16.mxu0 0
      %774 = vmatmul.mubr.bf16.gmra.mrb[0].mxu0 %v519
      %v775 = vpop.f32.mrb[0].mxu0
      %v776 = vadd.f32 %v254, %v775
      %v777 = vpop.f32.mrb[0].mxu0
      %v778 = vpop.f32.mrb[0].mxu0
      %v779 = vadd.f32 %v254, %v778
      %v780 = vpop.f32.mrb[0].mxu0
      %781 = vmatprep.mubr.bf16.mxu0 0
      %782 = vmatmul.mubr.bf16.gmra.mrb[0].mxu0 %v522
      %v783 = vpop.f32.mrb[0].mxu0
      %v784 = vadd.f32 %v254, %v783
      %v785 = vpop.f32.mrb[0].mxu0
      %v786 = vpop.f32.mrb[0].mxu0
      %v787 = vadd.f32 %v254, %v786
      %v788 = vpop.f32.mrb[0].mxu0
      %789 = vmatprep.mubr.bf16.mxu0 0
      %790 = vmatmul.mubr.bf16.gmra.mrb[0].mxu0 %v525
      %v791 = vpop.f32.mrb[0].mxu0
      %v792 = vadd.f32 %v254, %v791
      %v793 = vpop.f32.mrb[0].mxu0
      %v794 = vpop.f32.mrb[0].mxu0
      %v795 = vadd.f32 %v254, %v794
      %v796 = vpop.f32.mrb[0].mxu0
      %797 = vmatprep.mubr.bf16.mxu0 0
      %798 = vmatmul.mubr.bf16.gmra.mrb[0].mxu0 %v528
      %v799 = vpop.f32.mrb[0].mxu0
      %v800 = vadd.f32 %v254, %v799
      %v801 = vpop.f32.mrb[0].mxu0
      %v802 = vpop.f32.mrb[0].mxu0
      %v803 = vadd.f32 %v254, %v802
      %v804 = vpop.f32.mrb[0].mxu0
      %805 = vmatprep.mubr.bf16.mxu0 0
      %806 = vmatmul.mubr.bf16.gmra.mrb[0].mxu0 %v531
      %v807 = vpop.f32.mrb[0].mxu0
      %v808 = vadd.f32 %v254, %v807
      %v809 = vpop.f32.mrb[0].mxu0
      %v810 = vpop.f32.mrb[0].mxu0
      %v811 = vadd.f32 %v254, %v810
      %v812 = vpop.f32.mrb[0].mxu0
      %813 = vmatprep.mubr.bf16.mxu0 0
      %814 = vmatmul.mubr.bf16.gmra.mrb[0].mxu0 %v534
      %v815 = vpop.f32.mrb[0].mxu0
      %v816 = vadd.f32 %v254, %v815
      %v817 = vpop.f32.mrb[0].mxu0
      %v818 = vpop.f32.mrb[0].mxu0
      %v819 = vadd.f32 %v254, %v818
      %v820 = vpop.f32.mrb[0].mxu0
      %821 = vmatprep.mubr.bf16.mxu0 0
      %822 = vmatmul.mubr.bf16.gmra.mrb[0].mxu0 %v537
      %v823 = vpop.f32.mrb[0].mxu0
      %v824 = vadd.f32 %v254, %v823
      %v825 = vpop.f32.mrb[0].mxu0
      %v826 = vpop.f32.mrb[0].mxu0
      %v827 = vadd.f32 %v254, %v826
      %v828 = vpop.f32.mrb[0].mxu0
      %829 = vmatprep.mubr.bf16.mxu0 0
      %830 = vmatmul.mubr.bf16.gmra.mrb[0].mxu0 %v540
      %v831 = vpop.f32.mrb[0].mxu0
      %v832 = vadd.f32 %v254, %v831
      %v833 = vpop.f32.mrb[0].mxu0
      %v834 = vpop.f32.mrb[0].mxu0
      %v835 = vadd.f32 %v254, %v834
      %v836 = vpop.f32.mrb[0].mxu0
      %837 = vdwg.mxu0
      %vm838 = vcmp.ge.f32.partialorder %v584, 0.0
      %vm839 = vcmp.ge.f32.partialorder %v587, 0.0
      %vm840 = vcmp.ge.f32.partialorder %v592, 0.0
      %vm841 = vcmp.ge.f32.partialorder %v595, 0.0
      %vm842 = vcmp.ge.f32.partialorder %v600, 0.0
      %vm843 = vcmp.ge.f32.partialorder %v603, 0.0
      %vm844 = vcmp.ge.f32.partialorder %v608, 0.0
      %vm845 = vcmp.ge.f32.partialorder %v611, 0.0
      %vm846 = vcmp.ge.f32.partialorder %v616, 0.0
      %vm847 = vcmp.ge.f32.partialorder %v619, 0.0
      %vm848 = vcmp.ge.f32.partialorder %v624, 0.0
      %vm849 = vcmp.ge.f32.partialorder %v627, 0.0
      %vm850 = vcmp.ge.f32.partialorder %v632, 0.0
      %vm851 = vcmp.ge.f32.partialorder %v635, 0.0
      %vm852 = vcmp.ge.f32.partialorder %v640, 0.0
      %vm853 = vcmp.ge.f32.partialorder %v643, 0.0
      %vm854 = vcmp.ge.f32.partialorder %v648, 0.0
      %vm855 = vcmp.ge.f32.partialorder %v651, 0.0
      %vm856 = vcmp.ge.f32.partialorder %v656, 0.0
      %vm857 = vcmp.ge.f32.partialorder %v659, 0.0
      %vm858 = vcmp.ge.f32.partialorder %v664, 0.0
      %vm859 = vcmp.ge.f32.partialorder %v667, 0.0
      %vm860 = vcmp.ge.f32.partialorder %v672, 0.0
      %vm861 = vcmp.ge.f32.partialorder %v675, 0.0
      %vm862 = vcmp.ge.f32.partialorder %v680, 0.0
      %vm863 = vcmp.ge.f32.partialorder %v683, 0.0
      %vm864 = vcmp.ge.f32.partialorder %v688, 0.0
      %vm865 = vcmp.ge.f32.partialorder %v691, 0.0
      %vm866 = vcmp.ge.f32.partialorder %v696, 0.0
      %vm867 = vcmp.ge.f32.partialorder %v699, 0.0
      %vm868 = vcmp.ge.f32.partialorder %v704, 0.0
      %vm869 = vcmp.ge.f32.partialorder %v707, 0.0
      %vm870 = vcmp.ge.f32.partialorder %v712, 0.0
      %vm871 = vcmp.ge.f32.partialorder %v715, 0.0
      %vm872 = vcmp.ge.f32.partialorder %v720, 0.0
      %vm873 = vcmp.ge.f32.partialorder %v723, 0.0
      %vm874 = vcmp.ge.f32.partialorder %v728, 0.0
      %vm875 = vcmp.ge.f32.partialorder %v731, 0.0
      %vm876 = vcmp.ge.f32.partialorder %v736, 0.0
      %vm877 = vcmp.ge.f32.partialorder %v739, 0.0
      %vm878 = vcmp.ge.f32.partialorder %v744, 0.0
      %vm879 = vcmp.ge.f32.partialorder %v747, 0.0
      %vm880 = vcmp.ge.f32.partialorder %v752, 0.0
      %vm881 = vcmp.ge.f32.partialorder %v755, 0.0
      %vm882 = vcmp.ge.f32.partialorder %v760, 0.0
      %vm883 = vcmp.ge.f32.partialorder %v763, 0.0
      %vm884 = vcmp.ge.f32.partialorder %v768, 0.0
      %vm885 = vcmp.ge.f32.partialorder %v771, 0.0
      %vm886 = vcmp.ge.f32.partialorder %v776, 0.0
      %vm887 = vcmp.ge.f32.partialorder %v779, 0.0
      %vm888 = vcmp.ge.f32.partialorder %v784, 0.0
      %vm889 = vcmp.ge.f32.partialorder %v787, 0.0
      %vm890 = vcmp.ge.f32.partialorder %v792, 0.0
      %vm891 = vcmp.ge.f32.partialorder %v795, 0.0
      %vm892 = vcmp.ge.f32.partialorder %v800, 0.0
      %vm893 = vcmp.ge.f32.partialorder %v803, 0.0
      %vm894 = vcmp.ge.f32.partialorder %v808, 0.0
      %vm895 = vcmp.ge.f32.partialorder %v811, 0.0
      %vm896 = vcmp.ge.f32.partialorder %v816, 0.0
      %vm897 = vcmp.ge.f32.partialorder %v819, 0.0
      %vm898 = vcmp.ge.f32.partialorder %v824, 0.0
      %vm899 = vcmp.ge.f32.partialorder %v827, 0.0
      %vm900 = vcmp.ge.f32.partialorder %v832, 0.0
      %vm901 = vcmp.ge.f32.partialorder %v835, 0.0
      %v902 = vmul.f32 %v584, 0.2
      %v903 = vmul.f32 %v587, 0.2
      %v904 = vmul.f32 %v592, 0.2
      %v905 = vmul.f32 %v595, 0.2
      %v906 = vmul.f32 %v600, 0.2
      %v907 = vmul.f32 %v603, 0.2
      %v908 = vmul.f32 %v608, 0.2
      %v909 = vmul.f32 %v611, 0.2
      %v910 = vmul.f32 %v616, 0.2
      %v911 = vmul.f32 %v619, 0.2
      %v912 = vmul.f32 %v624, 0.2
      %v913 = vmul.f32 %v627, 0.2
      %v914 = vmul.f32 %v632, 0.2
      %v915 = vmul.f32 %v635, 0.2
      %v916 = vmul.f32 %v640, 0.2
      %v917 = vmul.f32 %v643, 0.2
      %v918 = vmul.f32 %v648, 0.2
      %v919 = vmul.f32 %v651, 0.2
      %v920 = vmul.f32 %v656, 0.2
      %v921 = vmul.f32 %v659, 0.2
      %v922 = vmul.f32 %v664, 0.2
      %v923 = vmul.f32 %v667, 0.2
      %v924 = vmul.f32 %v672, 0.2
      %v925 = vmul.f32 %v675, 0.2
      %v926 = vmul.f32 %v680, 0.2
      %v927 = vmul.f32 %v683, 0.2
      %v928 = vmul.f32 %v688, 0.2
      %v929 = vmul.f32 %v691, 0.2
      %v930 = vmul.f32 %v696, 0.2
      %v931 = vmul.f32 %v699, 0.2
      %v932 = vmul.f32 %v704, 0.2
      %v933 = vmul.f32 %v707, 0.2
      %v934 = vmul.f32 %v712, 0.2
      %v935 = vmul.f32 %v715, 0.2
      %v936 = vmul.f32 %v720, 0.2
      %v937 = vmul.f32 %v723, 0.2
      %v938 = vmul.f32 %v728, 0.2
      %v939 = vmul.f32 %v731, 0.2
      %v940 = vmul.f32 %v736, 0.2
      %v941 = vmul.f32 %v739, 0.2
      %v942 = vmul.f32 %v744, 0.2
      %v943 = vmul.f32 %v747, 0.2
      %v944 = vmul.f32 %v752, 0.2
      %v945 = vmul.f32 %v755, 0.2
      %v946 = vmul.f32 %v760, 0.2
      %v947 = vmul.f32 %v763, 0.2
      %v948 = vmul.f32 %v768, 0.2
      %v949 = vmul.f32 %v771, 0.2
      %v950 = vmul.f32 %v776, 0.2
      %v951 = vmul.f32 %v779, 0.2
      %v952 = vmul.f32 %v784, 0.2
      %v953 = vmul.f32 %v787, 0.2
      %v954 = vmul.f32 %v792, 0.2
      %v955 = vmul.f32 %v795, 0.2
      %v956 = vmul.f32 %v800, 0.2
      %v957 = vmul.f32 %v803, 0.2
      %v958 = vmul.f32 %v808, 0.2
      %v959 = vmul.f32 %v811, 0.2
      %v960 = vmul.f32 %v816, 0.2
      %v961 = vmul.f32 %v819, 0.2
      %v962 = vmul.f32 %v824, 0.2
      %v963 = vmul.f32 %v827, 0.2
      %v964 = vmul.f32 %v832, 0.2
      %v965 = vmul.f32 %v835, 0.2
      %v966 = vsel %vm838, %v584, %v902
      %v967 = vsel %vm839, %v587, %v903
      %v968 = vsel %vm840, %v592, %v904
      %v969 = vsel %vm841, %v595, %v905
      %v970 = vsel %vm842, %v600, %v906
      %v971 = vsel %vm843, %v603, %v907
      %v972 = vsel %vm844, %v608, %v908
      %v973 = vsel %vm845, %v611, %v909
      %v974 = vsel %vm846, %v616, %v910
      %v975 = vsel %vm847, %v619, %v911
      %v976 = vsel %vm848, %v624, %v912
      %v977 = vsel %vm849, %v627, %v913
      %v978 = vsel %vm850, %v632, %v914
      %v979 = vsel %vm851, %v635, %v915
      %v980 = vsel %vm852, %v640, %v916
      %v981 = vsel %vm853, %v643, %v917
      %v982 = vsel %vm854, %v648, %v918
      %v983 = vsel %vm855, %v651, %v919
      %v984 = vsel %vm856, %v656, %v920
      %v985 = vsel %vm857, %v659, %v921
      %v986 = vsel %vm858, %v664, %v922
      %v987 = vsel %vm859, %v667, %v923
      %v988 = vsel %vm860, %v672, %v924
      %v989 = vsel %vm861, %v675, %v925
      %v990 = vsel %vm862, %v680, %v926
      %v991 = vsel %vm863, %v683, %v927
      %v992 = vsel %vm864, %v688, %v928
      %v993 = vsel %vm865, %v691, %v929
      %v994 = vsel %vm866, %v696, %v930
      %v995 = vsel %vm867, %v699, %v931
      %v996 = vsel %vm868, %v704, %v932
      %v997 = vsel %vm869, %v707, %v933
      %v998 = vsel %vm870, %v712, %v934
      %v999 = vsel %vm871, %v715, %v935
      %v1000 = vsel %vm872, %v720, %v936
      %v1001 = vsel %vm873, %v723, %v937
      %v1002 = vsel %vm874, %v728, %v938
      %v1003 = vsel %vm875, %v731, %v939
      %v1004 = vsel %vm876, %v736, %v940
      %v1005 = vsel %vm877, %v739, %v941
      %v1006 = vsel %vm878, %v744, %v942
      %v1007 = vsel %vm879, %v747, %v943
      %v1008 = vsel %vm880, %v752, %v944
      %v1009 = vsel %vm881, %v755, %v945
      %v1010 = vsel %vm882, %v760, %v946
      %v1011 = vsel %vm883, %v763, %v947
      %v1012 = vsel %vm884, %v768, %v948
      %v1013 = vsel %vm885, %v771, %v949
      %v1014 = vsel %vm886, %v776, %v950
      %v1015 = vsel %vm887, %v779, %v951
      %v1016 = vsel %vm888, %v784, %v952
      %v1017 = vsel %vm889, %v787, %v953
      %v1018 = vsel %vm890, %v792, %v954
      %v1019 = vsel %vm891, %v795, %v955
      %v1020 = vsel %vm892, %v800, %v956
      %v1021 = vsel %vm893, %v803, %v957
      %v1022 = vsel %vm894, %v808, %v958
      %v1023 = vsel %vm895, %v811, %v959
      %v1024 = vsel %vm896, %v816, %v960
      %v1025 = vsel %vm897, %v819, %v961
      %v1026 = vsel %vm898, %v824, %v962
      %v1027 = vsel %vm899, %v827, %v963
      %v1028 = vsel %vm900, %v832, %v964
      %v1029 = vsel %vm901, %v835, %v965
      %v1030 = vpack.c.bf16 %v967, %v966
      %v1031 = vpack.c.bf16 %v969, %v968
      %v1032 = vpack.c.bf16 %v971, %v970
      %v1033 = vpack.c.bf16 %v973, %v972
      %v1034 = vpack.c.bf16 %v975, %v974
      %v1035 = vpack.c.bf16 %v977, %v976
      %v1036 = vpack.c.bf16 %v979, %v978
      %v1037 = vpack.c.bf16 %v981, %v980
      %v1038 = vpack.c.bf16 %v983, %v982
      %v1039 = vpack.c.bf16 %v985, %v984
      %v1040 = vpack.c.bf16 %v987, %v986
      %v1041 = vpack.c.bf16 %v989, %v988
      %v1042 = vpack.c.bf16 %v991, %v990
      %v1043 = vpack.c.bf16 %v993, %v992
      %v1044 = vpack.c.bf16 %v995, %v994
      %v1045 = vpack.c.bf16 %v997, %v996
      %v1046 = vpack.c.bf16 %v999, %v998
      %v1047 = vpack.c.bf16 %v1001, %v1000
      %v1048 = vpack.c.bf16 %v1003, %v1002
      %v1049 = vpack.c.bf16 %v1005, %v1004
      %v1050 = vpack.c.bf16 %v1007, %v1006
      %v1051 = vpack.c.bf16 %v1009, %v1008
      %v1052 = vpack.c.bf16 %v1011, %v1010
      %v1053 = vpack.c.bf16 %v1013, %v1012
      %v1054 = vpack.c.bf16 %v1015, %v1014
      %v1055 = vpack.c.bf16 %v1017, %v1016
      %v1056 = vpack.c.bf16 %v1019, %v1018
      %v1057 = vpack.c.bf16 %v1021, %v1020
      %v1058 = vpack.c.bf16 %v1023, %v1022
      %v1059 = vpack.c.bf16 %v1025, %v1024
      %v1060 = vpack.c.bf16 %v1027, %v1026
      %v1061 = vpack.c.bf16 %v1029, %v1028
      %v1094 = vunpack.c.l.b16 %v1030
      %v1095 = vunpack.c.h.b16 %v1030
      %v1096 = vunpack.c.l.b16 %v1031
      %v1097 = vunpack.c.h.b16 %v1031
      %v1098 = vunpack.c.l.b16 %v1032
      %v1099 = vunpack.c.h.b16 %v1032
      %v1100 = vunpack.c.l.b16 %v1033
      %v1101 = vunpack.c.h.b16 %v1033
      %v1102 = vunpack.c.l.b16 %v1034
      %v1103 = vunpack.c.h.b16 %v1034
      %v1104 = vunpack.c.l.b16 %v1035
      %v1105 = vunpack.c.h.b16 %v1035
      %v1106 = vunpack.c.l.b16 %v1036
      %v1107 = vunpack.c.h.b16 %v1036
      %v1108 = vunpack.c.l.b16 %v1037
      %v1109 = vunpack.c.h.b16 %v1037
      %v1110 = vunpack.c.l.b16 %v1038
      %v1111 = vunpack.c.h.b16 %v1038
      %v1112 = vunpack.c.l.b16 %v1039
      %v1113 = vunpack.c.h.b16 %v1039
      %v1114 = vunpack.c.l.b16 %v1040
      %v1115 = vunpack.c.h.b16 %v1040
      %v1116 = vunpack.c.l.b16 %v1041
      %v1117 = vunpack.c.h.b16 %v1041
      %v1118 = vunpack.c.l.b16 %v1042
      %v1119 = vunpack.c.h.b16 %v1042
      %v1120 = vunpack.c.l.b16 %v1043
      %v1121 = vunpack.c.h.b16 %v1043
      %v1122 = vunpack.c.l.b16 %v1044
      %v1123 = vunpack.c.h.b16 %v1044
      %v1124 = vunpack.c.l.b16 %v1045
      %v1125 = vunpack.c.h.b16 %v1045
      %v1126 = vunpack.c.l.b16 %v1046
      %v1127 = vunpack.c.h.b16 %v1046
      %v1128 = vunpack.c.l.b16 %v1047
      %v1129 = vunpack.c.h.b16 %v1047
      %v1130 = vunpack.c.l.b16 %v1048
      %v1131 = vunpack.c.h.b16 %v1048
      %v1132 = vunpack.c.l.b16 %v1049
      %v1133 = vunpack.c.h.b16 %v1049
      %v1134 = vunpack.c.l.b16 %v1050
      %v1135 = vunpack.c.h.b16 %v1050
      %v1136 = vunpack.c.l.b16 %v1051
      %v1137 = vunpack.c.h.b16 %v1051
      %v1138 = vunpack.c.l.b16 %v1052
      %v1139 = vunpack.c.h.b16 %v1052
      %v1140 = vunpack.c.l.b16 %v1053
      %v1141 = vunpack.c.h.b16 %v1053
      %v1142 = vunpack.c.l.b16 %v1054
      %v1143 = vunpack.c.h.b16 %v1054
      %v1144 = vunpack.c.l.b16 %v1055
      %v1145 = vunpack.c.h.b16 %v1055
      %v1146 = vunpack.c.l.b16 %v1056
      %v1147 = vunpack.c.h.b16 %v1056
      %v1148 = vunpack.c.l.b16 %v1057
      %v1149 = vunpack.c.h.b16 %v1057
      %v1150 = vunpack.c.l.b16 %v1058
      %v1151 = vunpack.c.h.b16 %v1058
      %v1152 = vunpack.c.l.b16 %v1059
      %v1153 = vunpack.c.h.b16 %v1059
      %v1154 = vunpack.c.l.b16 %v1060
      %v1155 = vunpack.c.h.b16 %v1060
      %v1156 = vunpack.c.l.b16 %v1061
      %v1157 = vunpack.c.h.b16 %v1061
      %v1158 = vpack.c.b16 %v1094, %v1094
      %v1159 = vpack.c.b16 %v1095, %v1095
      %v1160 = vpack.c.b16 %v1096, %v1096
      %v1161 = vpack.c.b16 %v1097, %v1097
      %v1162 = vpack.c.b16 %v1098, %v1098
      %v1163 = vpack.c.b16 %v1099, %v1099
      %v1164 = vpack.c.b16 %v1100, %v1100
      %v1165 = vpack.c.b16 %v1101, %v1101
      %v1166 = vpack.c.b16 %v1102, %v1102
      %v1167 = vpack.c.b16 %v1103, %v1103
      %v1168 = vpack.c.b16 %v1104, %v1104
      %v1169 = vpack.c.b16 %v1105, %v1105
      %v1170 = vpack.c.b16 %v1106, %v1106
      %v1171 = vpack.c.b16 %v1107, %v1107
      %v1172 = vpack.c.b16 %v1108, %v1108
      %v1173 = vpack.c.b16 %v1109, %v1109
      %v1174 = vpack.c.b16 %v1110, %v1110
      %v1175 = vpack.c.b16 %v1111, %v1111
      %v1176 = vpack.c.b16 %v1112, %v1112
      %v1177 = vpack.c.b16 %v1113, %v1113
      %v1178 = vpack.c.b16 %v1114, %v1114
      %v1179 = vpack.c.b16 %v1115, %v1115
      %v1180 = vpack.c.b16 %v1116, %v1116
      %v1181 = vpack.c.b16 %v1117, %v1117
      %v1182 = vpack.c.b16 %v1118, %v1118
      %v1183 = vpack.c.b16 %v1119, %v1119
      %v1184 = vpack.c.b16 %v1120, %v1120
      %v1185 = vpack.c.b16 %v1121, %v1121
      %v1186 = vpack.c.b16 %v1122, %v1122
      %v1187 = vpack.c.b16 %v1123, %v1123
      %v1188 = vpack.c.b16 %v1124, %v1124
      %v1189 = vpack.c.b16 %v1125, %v1125
      %v1190 = vpack.c.b16 %v1126, %v1126
      %v1191 = vpack.c.b16 %v1127, %v1127
      %v1192 = vpack.c.b16 %v1128, %v1128
      %v1193 = vpack.c.b16 %v1129, %v1129
      %v1194 = vpack.c.b16 %v1130, %v1130
      %v1195 = vpack.c.b16 %v1131, %v1131
      %v1196 = vpack.c.b16 %v1132, %v1132
      %v1197 = vpack.c.b16 %v1133, %v1133
      %v1198 = vpack.c.b16 %v1134, %v1134
      %v1199 = vpack.c.b16 %v1135, %v1135
      %v1200 = vpack.c.b16 %v1136, %v1136
      %v1201 = vpack.c.b16 %v1137, %v1137
      %v1202 = vpack.c.b16 %v1138, %v1138
      %v1203 = vpack.c.b16 %v1139, %v1139
      %v1204 = vpack.c.b16 %v1140, %v1140
      %v1205 = vpack.c.b16 %v1141, %v1141
      %v1206 = vpack.c.b16 %v1142, %v1142
      %v1207 = vpack.c.b16 %v1143, %v1143
      %v1208 = vpack.c.b16 %v1144, %v1144
      %v1209 = vpack.c.b16 %v1145, %v1145
      %v1210 = vpack.c.b16 %v1146, %v1146
      %v1211 = vpack.c.b16 %v1147, %v1147
      %v1212 = vpack.c.b16 %v1148, %v1148
      %v1213 = vpack.c.b16 %v1149, %v1149
      %v1214 = vpack.c.b16 %v1150, %v1150
      %v1215 = vpack.c.b16 %v1151, %v1151
      %v1216 = vpack.c.b16 %v1152, %v1152
      %v1217 = vpack.c.b16 %v1153, %v1153
      %v1218 = vpack.c.b16 %v1154, %v1154
      %v1219 = vpack.c.b16 %v1155, %v1155
      %v1220 = vpack.c.b16 %v1156, %v1156
      %v1221 = vpack.c.b16 %v1157, %v1157
      %vm1286 = vcmask 60416
      %1287 = vst.msk [vmem:[%s172] sm:$0xf] %vm1286, %v1158
      %1288 = vst.msk [vmem:[%s172 + $0x4] sm:$0xf] %vm1286, %v1159
      %1289 = vst.msk [vmem:[%s172 + $0x8] sm:$0xf] %vm1286, %v1160
      %1290 = vst.msk [vmem:[%s172 + $0xc] sm:$0xf] %vm1286, %v1161
      %1291 = vst.msk [vmem:[%s172 + $0x10] sm:$0xf] %vm1286, %v1162
      %1292 = vst.msk [vmem:[%s172 + $0x14] sm:$0xf] %vm1286, %v1163
      %1293 = vst.msk [vmem:[%s172 + $0x18] sm:$0xf] %vm1286, %v1164
      %1294 = vst.msk [vmem:[%s172 + $0x1c] sm:$0xf] %vm1286, %v1165
      %1295 = vst.msk [vmem:[%s172 + $0x20] sm:$0xf] %vm1286, %v1166
      %1296 = vst.msk [vmem:[%s172 + $0x24] sm:$0xf] %vm1286, %v1167
      %1297 = vst.msk [vmem:[%s172 + $0x28] sm:$0xf] %vm1286, %v1168
      %1298 = vst.msk [vmem:[%s172 + $0x2c] sm:$0xf] %vm1286, %v1169
      %1299 = vst.msk [vmem:[%s172 + $0x30] sm:$0xf] %vm1286, %v1170
      %1300 = vst.msk [vmem:[%s172 + $0x34] sm:$0xf] %vm1286, %v1171
      %1301 = vst.msk [vmem:[%s172 + $0x38] sm:$0xf] %vm1286, %v1172
      %1302 = vst.msk [vmem:[%s172 + $0x3c] sm:$0xf] %vm1286, %v1173
      %1303 = vst.msk [vmem:[%s172 + $0x40] sm:$0xf] %vm1286, %v1174
      %1304 = vst.msk [vmem:[%s172 + $0x44] sm:$0xf] %vm1286, %v1175
      %1305 = vst.msk [vmem:[%s172 + $0x48] sm:$0xf] %vm1286, %v1176
      %1306 = vst.msk [vmem:[%s172 + $0x4c] sm:$0xf] %vm1286, %v1177
      %1307 = vst.msk [vmem:[%s172 + $0x50] sm:$0xf] %vm1286, %v1178
      %1308 = vst.msk [vmem:[%s172 + $0x54] sm:$0xf] %vm1286, %v1179
      %1309 = vst.msk [vmem:[%s172 + $0x58] sm:$0xf] %vm1286, %v1180
      %1310 = vst.msk [vmem:[%s172 + $0x5c] sm:$0xf] %vm1286, %v1181
      %1311 = vst.msk [vmem:[%s172 + $0x60] sm:$0xf] %vm1286, %v1182
      %1312 = vst.msk [vmem:[%s172 + $0x64] sm:$0xf] %vm1286, %v1183
      %1313 = vst.msk [vmem:[%s172 + $0x68] sm:$0xf] %vm1286, %v1184
      %1314 = vst.msk [vmem:[%s172 + $0x6c] sm:$0xf] %vm1286, %v1185
      %1315 = vst.msk [vmem:[%s172 + $0x70] sm:$0xf] %vm1286, %v1186
      %1316 = vst.msk [vmem:[%s172 + $0x74] sm:$0xf] %vm1286, %v1187
      %1317 = vst.msk [vmem:[%s172 + $0x78] sm:$0xf] %vm1286, %v1188
      %1318 = vst.msk [vmem:[%s172 + $0x7c] sm:$0xf] %vm1286, %v1189
      %1319 = vst.msk [vmem:[%s172 + $0x80] sm:$0xf] %vm1286, %v1190
      %1320 = vst.msk [vmem:[%s172 + $0x84] sm:$0xf] %vm1286, %v1191
      %1321 = vst.msk [vmem:[%s172 + $0x88] sm:$0xf] %vm1286, %v1192
      %1322 = vst.msk [vmem:[%s172 + $0x8c] sm:$0xf] %vm1286, %v1193
      %1323 = vst.msk [vmem:[%s172 + $0x90] sm:$0xf] %vm1286, %v1194
      %1324 = vst.msk [vmem:[%s172 + $0x94] sm:$0xf] %vm1286, %v1195
      %1325 = vst.msk [vmem:[%s172 + $0x98] sm:$0xf] %vm1286, %v1196
      %1326 = vst.msk [vmem:[%s172 + $0x9c] sm:$0xf] %vm1286, %v1197
      %1327 = vst.msk [vmem:[%s172 + $0xa0] sm:$0xf] %vm1286, %v1198
      %1328 = vst.msk [vmem:[%s172 + $0xa4] sm:$0xf] %vm1286, %v1199
      %1329 = vst.msk [vmem:[%s172 + $0xa8] sm:$0xf] %vm1286, %v1200
      %1330 = vst.msk [vmem:[%s172 + $0xac] sm:$0xf] %vm1286, %v1201
      %1331 = vst.msk [vmem:[%s172 + $0xb0] sm:$0xf] %vm1286, %v1202
      %1332 = vst.msk [vmem:[%s172 + $0xb4] sm:$0xf] %vm1286, %v1203
      %1333 = vst.msk [vmem:[%s172 + $0xb8] sm:$0xf] %vm1286, %v1204
      %1334 = vst.msk [vmem:[%s172 + $0xbc] sm:$0xf] %vm1286, %v1205
      %1335 = vst.msk [vmem:[%s172 + $0xc0] sm:$0xf] %vm1286, %v1206
      %1336 = vst.msk [vmem:[%s172 + $0xc4] sm:$0xf] %vm1286, %v1207
      %1337 = vst.msk [vmem:[%s172 + $0xc8] sm:$0xf] %vm1286, %v1208
      %1338 = vst.msk [vmem:[%s172 + $0xcc] sm:$0xf] %vm1286, %v1209
      %1339 = vst.msk [vmem:[%s172 + $0xd0] sm:$0xf] %vm1286, %v1210
      %1340 = vst.msk [vmem:[%s172 + $0xd4] sm:$0xf] %vm1286, %v1211
      %1341 = vst.msk [vmem:[%s172 + $0xd8] sm:$0xf] %vm1286, %v1212
      %1342 = vst.msk [vmem:[%s172 + $0xdc] sm:$0xf] %vm1286, %v1213
      %1343 = vst.msk [vmem:[%s172 + $0xe0] sm:$0xf] %vm1286, %v1214
      %1344 = vst.msk [vmem:[%s172 + $0xe4] sm:$0xf] %vm1286, %v1215
      %1345 = vst.msk [vmem:[%s172 + $0xe8] sm:$0xf] %vm1286, %v1216
      %1346 = vst.msk [vmem:[%s172 + $0xec] sm:$0xf] %vm1286, %v1217
      %1347 = vst.msk [vmem:[%s172 + $0xf0] sm:$0xf] %vm1286, %v1218
      %1348 = vst.msk [vmem:[%s172 + $0xf4] sm:$0xf] %vm1286, %v1219
      %1349 = vst.msk [vmem:[%s172 + $0xf8] sm:$0xf] %vm1286, %v1220
      %1350 = vst.msk [vmem:[%s172 + $0xfc] sm:$0xf] %vm1286, %v1221
      %s1351 = smul.u32 64, %s14
      %p1352 = scmp.lt.s32.totalorder %s1351, 255
      %s1353 = scalar_select %p1352, %s1351, 255
      %s1354 = smul.addr %s1353, 4
      %s1355 = scalar_lea.vmem %s3, %s1354
      // Predicated region
      $region33: #{netd_forward.7} parent=31 // pred_check
        %p1356 = pneg %p100
      $region34: #{netd_forward.7} parent=31 // pred_check_branch
        %1358 = sbr.rel (%p1356) target = $region36
      $region35: #{netd_forward.7} parent=31 // pred_region
        %s1359 = smul.u32 64, %s14
      $region36: #{netd_forward.7} parent=31 // pred_fallthru
        _
    $region32: #{netd_forward.7} parent=5 // pred_fallthru
      _
    %p1360 = scmp.le.s32.totalorder 2, %s9
    // Predicated region
    $region37: #{netd_forward.7} parent=5 // pred_check
      %p1361 = pneg %p1360
    $region38: #{netd_forward.7} parent=5 // pred_check_branch
      %1363 = sbr.rel (%p1361) target = $region40
    $region39: #{netd_forward.7} parent=5 // pred_region
      %s1364 = ssub.s32 %s9, 2
      // Predicated region
      $region41: #{netd_forward.7} parent=39 // pred_check
        %p1365 = pneg %p106
      $region42: #{netd_forward.7} parent=39 // pred_check_branch
        %1367 = sbr.rel (%p1365) target = $region44
      $region43: #{netd_forward.7} parent=39 // pred_region
        %s1368 = smul.u32 64, %s15
        %p1369 = scmp.lt.s32.totalorder %s1368, 255
        %s1370 = scalar_select %p1369, %s1368, 255
        %s1371 = smul.addr %s1370, 4
        %s1372 = scalar_lea.vmem %s3, %s1371
      $region44: #{netd_forward.7} parent=39 // pred_fallthru
        _
    $region40: #{netd_forward.7} parent=5 // pred_fallthru
      _
  $region6: #{netd_forward.7} parent=0 // loop_footer
    %s13 = sadd.s32 1, %s9
  $region7: #{netd_forward.7} parent=0 // loop_footer_branch
    %8 = sbr.rel target = $region3
  $region8: #{netd_forward.7} parent=0 // loop_exit
    _

// kernel: netd_forward.8
$region0: #{netd_forward.8}
  #allocation0 [shape = 'u32[]', space=smem, size = 0x4, offset = 0x4, fixed_abs, tag = 'smem constant byte address 0x4 - core index']
  #allocation1 [shape = 'u32[144,128]{1,0:T(1,128)}', space=vmem, size = 0x12000, scoped, tag = 'internal scratch']
  %s0 = inlined_call_operand.vmem [shape: bf16[512,200], index: 0, kind: input, shape index: {}]
  %s1 = inlined_call_operand.vmem [shape: bf16[200,16], index: 1, kind: input, shape index: {}]
  %s2 = inlined_call_operand.vmem [shape: f32[1,16], index: 2, kind: input, shape index: {}]
  %s3 = inlined_call_operand.vmem [shape: bf16[512,16], index: 3, kind: output, shape index: {0}]
  %s4 = inlined_call_operand.vmem [shape: f32[2,2,16], index: 4, kind: output, shape index: {1}]
  %5 = xla_tuple %s3, %s4
  %s6 = sld [smem:[#allocation0]]
  $region53: #{netd_forward.8} parent=0
    _
  %s8 = ssub.s32 1, %s6
  %s9 = scalar_select 0, %s8, %s6
  loop: start=0, step=1, limit=4
  $region2: #{netd_forward.8} parent=0 // loop_pre_header
    _
  $region3: #{netd_forward.8} parent=0 // loop_header
    %s11 = sphi 0, %s15
    %p12 = scmp.ge.s32.totalorder %s11, 4
    %s21 = sphi 0, %s23
    %s24 = sphi 0, %s21
    %s25 = sphi 0, %s24
    %s41 = sphi 0, %s25
    %s45 = sphi 0, %s45
    %s47 = sphi 0, %s45
    %s48 = sphi 0, %s47
    %s62 = sphi 0, %s48
    %s66 = sphi 0, %s66
    %s68 = sphi 0, %s66
    %s69 = sphi 0, %s68
    %s83 = sphi 0, %s69
    %s89 = sphi 0, %s91
    %s92 = sphi 0, %s89
    %s93 = sphi 0, %s92
    %s109 = sphi 0, %s93
    %s115 = sphi 0, %s117
    %s118 = sphi 0, %s115
    %s119 = sphi 0, %s118
    %s135 = sphi 0, %s119
  $region4: #{netd_forward.8} parent=0 // loop_header_branch
    %14 = sbr.rel (%p12) target = $region8
  $region5: #{netd_forward.8} parent=0 // loop_body
    %s16 = ssub.s32 %s11, 1
    %s17 = ssub.s32 %s11, 2
    %s18 = sadd.s32 %s11, 1
    %s19 = ssub.s32 %s11, %s18
    %p20 = scmp.eq.s32.totalorder %s19, 0
    %s22 = sadd.s32 %s21, 1
    %s23 = scalar_select %p20, %s21, %s22
    %p26 = pneg %p20
    %p27 = scmp.eq.s32.totalorder %s11, 1
    %p28 = por %p26, %p27
    %p29 = scmp.ne.s32.totalorder %s21, %s24
    %p30 = scmp.eq.s32.totalorder %s11, 0
    %p31 = por %p29, %p30
    %p32 = scmp.ne.s32.totalorder %s21, %s24
    %p33 = scmp.eq.s32.totalorder %s16, 1
    %p34 = por %p32, %p33
    %p35 = scmp.ne.s32.totalorder %s24, %s25
    %p36 = scmp.eq.s32.totalorder %s16, 0
    %p37 = por %p35, %p36
    %p38 = scmp.ne.s32.totalorder %s24, %s25
    %p39 = scmp.eq.s32.totalorder %s17, 1
    %p40 = por %p38, %p39
    %p42 = scmp.ne.s32.totalorder %s25, %s41
    %p43 = scmp.eq.s32.totalorder %s17, 0
    %p44 = por %p42, %p43
    %s46 = sadd.s32 %s45, 1
    %p49 = scmp.eq.s32.totalorder %s11, 1
    %p50 = scmp.ne.s32.totalorder %s45, %s47
    %p51 = scmp.eq.s32.totalorder %s11, 0
    %p52 = por %p50, %p51
    %p53 = scmp.ne.s32.totalorder %s45, %s47
    %p54 = scmp.eq.s32.totalorder %s16, 1
    %p55 = por %p53, %p54
    %p56 = scmp.ne.s32.totalorder %s47, %s48
    %p57 = scmp.eq.s32.totalorder %s16, 0
    %p58 = por %p56, %p57
    %p59 = scmp.ne.s32.totalorder %s47, %s48
    %p60 = scmp.eq.s32.totalorder %s17, 1
    %p61 = por %p59, %p60
    %p63 = scmp.ne.s32.totalorder %s48, %s62
    %p64 = scmp.eq.s32.totalorder %s17, 0
    %p65 = por %p63, %p64
    %s67 = sadd.s32 %s66, 1
    %p70 = scmp.eq.s32.totalorder %s11, 1
    %p71 = scmp.ne.s32.totalorder %s66, %s68
    %p72 = scmp.eq.s32.totalorder %s11, 0
    %p73 = por %p71, %p72
    %p74 = scmp.ne.s32.totalorder %s66, %s68
    %p75 = scmp.eq.s32.totalorder %s16, 1
    %p76 = por %p74, %p75
    %p77 = scmp.ne.s32.totalorder %s68, %s69
    %p78 = scmp.eq.s32.totalorder %s16, 0
    %p79 = por %p77, %p78
    %p80 = scmp.ne.s32.totalorder %s68, %s69
    %p81 = scmp.eq.s32.totalorder %s17, 1
    %p82 = por %p80, %p81
    %p84 = scmp.ne.s32.totalorder %s69, %s83
    %p85 = scmp.eq.s32.totalorder %s17, 0
    %p86 = por %p84, %p85
    %s87 = ssub.s32 %s11, %s18
    %p88 = scmp.eq.s32.totalorder %s87, 0
    %s90 = sadd.s32 %s89, 1
    %s91 = scalar_select %p88, %s89, %s90
    %p94 = pneg %p88
    %p95 = scmp.eq.s32.totalorder %s11, 1
    %p96 = por %p94, %p95
    %p97 = scmp.ne.s32.totalorder %s89, %s92
    %p98 = scmp.eq.s32.totalorder %s11, 0
    %p99 = por %p97, %p98
    %p100 = scmp.ne.s32.totalorder %s89, %s92
    %p101 = scmp.eq.s32.totalorder %s16, 1
    %p102 = por %p100, %p101
    %p103 = scmp.ne.s32.totalorder %s92, %s93
    %p104 = scmp.eq.s32.totalorder %s16, 0
    %p105 = por %p103, %p104
    %p106 = scmp.ne.s32.totalorder %s92, %s93
    %p107 = scmp.eq.s32.totalorder %s17, 1
    %p108 = por %p106, %p107
    %p110 = scmp.ne.s32.totalorder %s93, %s109
    %p111 = scmp.eq.s32.totalorder %s17, 0
    %p112 = por %p110, %p111
    %s113 = ssub.s32 %s11, %s18
    %p114 = scmp.eq.s32.totalorder %s113, 0
    %s116 = sadd.s32 %s115, 1
    %s117 = scalar_select %p114, %s115, %s116
    %p120 = pneg %p114
    %p121 = scmp.eq.s32.totalorder %s11, 1
    %p122 = por %p120, %p121
    %p123 = scmp.ne.s32.totalorder %s115, %s118
    %p124 = scmp.eq.s32.totalorder %s11, 0
    %p125 = por %p123, %p124
    %p126 = scmp.ne.s32.totalorder %s115, %s118
    %p127 = scmp.eq.s32.totalorder %s16, 1
    %p128 = por %p126, %p127
    %p129 = scmp.ne.s32.totalorder %s118, %s119
    %p130 = scmp.eq.s32.totalorder %s16, 0
    %p131 = por %p129, %p130
    %p132 = scmp.ne.s32.totalorder %s118, %s119
    %p133 = scmp.eq.s32.totalorder %s17, 1
    %p134 = por %p132, %p133
    %p136 = scmp.ne.s32.totalorder %s119, %s135
    %p137 = scmp.eq.s32.totalorder %s17, 0
    %p138 = por %p136, %p137
    %p139 = scmp.le.s32.totalorder 1, %s11
    %p140 = scmp.lt.s32.totalorder %s11, 3
    %p141 = pnand %p139, %p140
    %p142 = pneg %p141
    // Predicated region
    $region9: #{netd_forward.8} parent=5 // pred_check
      _
    $region10: #{netd_forward.8} parent=5 // pred_check_branch
      %144 = sbr.rel (%p141) target = $region12
    $region11: #{netd_forward.8} parent=5 // pred_region
      %s145 = ssub.s32 %s11, 1
      // Predicated region
      $region13: #{netd_forward.8} parent=11 // pred_check
        %p146 = pneg %p58
      $region14: #{netd_forward.8} parent=11 // pred_check_branch
        %148 = sbr.rel (%p146) target = $region16
      $region15: #{netd_forward.8} parent=11 // pred_region
        _
      $region16: #{netd_forward.8} parent=11 // pred_fallthru
        _
      // Predicated region
      $region17: #{netd_forward.8} parent=11 // pred_check
        %p149 = pneg %p79
      $region18: #{netd_forward.8} parent=11 // pred_check_branch
        %151 = sbr.rel (%p149) target = $region20
      $region19: #{netd_forward.8} parent=11 // pred_region
        _
      $region20: #{netd_forward.8} parent=11 // pred_fallthru
        _
    $region12: #{netd_forward.8} parent=5 // pred_fallthru
      _
    %p152 = scmp.lt.s32.totalorder %s11, 2
    // Predicated region
    $region21: #{netd_forward.8} parent=5 // pred_check
      %p153 = pneg %p152
    $region22: #{netd_forward.8} parent=5 // pred_check_branch
      %155 = sbr.rel (%p153) target = $region24
    $region23: #{netd_forward.8} parent=5 // pred_region
      // Predicated region
      $region25: #{netd_forward.8} parent=23 // pred_check
        %p156 = pneg %p31
      $region26: #{netd_forward.8} parent=23 // pred_check_branch
        %158 = sbr.rel (%p156) target = $region28
      $region27: #{netd_forward.8} parent=23 // pred_region
        %s159 = smul.u32 32, %s11
        %p160 = scmp.lt.s32.totalorder %s159, 63
        %s161 = scalar_select %p160, %s159, 63
        %s162 = smul.addr %s161, 2
        %s163 = smul.addr %s162, 4
        %s164 = scalar_lea.vmem %s0, %s163
        %s165 = smul.u32 32, %s11
      $region28: #{netd_forward.8} parent=23 // pred_fallthru
        _
    $region24: #{netd_forward.8} parent=5 // pred_fallthru
      _
    %p166 = scmp.le.s32.totalorder 1, %s11
    %p167 = scmp.lt.s32.totalorder %s11, 3
    %p168 = pnand %p166, %p167
    %p169 = pneg %p168
    // Predicated region
    $region29: #{netd_forward.8} parent=5 // pred_check
      _
    $region30: #{netd_forward.8} parent=5 // pred_check_branch
      %171 = sbr.rel (%p168) target = $region32
    $region31: #{netd_forward.8} parent=5 // pred_region
      %s172 = ssub.s32 %s11, 1
      %s173 = smul.u32 32, %s16
      %p174 = scmp.lt.s32.totalorder %s173, 63
      %s175 = scalar_select %p174, %s173, 63
      %s176 = smul.addr %s175, 2
      %s177 = smul.addr %s176, 4
      %s178 = scalar_lea.vmem %s0, %s177
      %p179 = pneg %p37
      %p180 = pneg %p34
      %p181 = pneg %p58
      %p182 = pneg %p55
      %p183 = pneg %p79
      %p184 = pneg %p76
      %p185 = pneg %p105
      %p186 = pneg %p102
      %s187 = smul.u32 32, %s16
      %p188 = scmp.lt.s32.totalorder %s187, 63
      %s189 = scalar_select %p188, %s187, 63
      %s190 = smul.addr %s189, 4
      %s191 = scalar_lea.vmem %s3, %s190
      %p192 = pneg %p131
      %p193 = pneg %p128
      %p194 = scmp.lt.s32.totalorder %s16, 1
      %s195 = scalar_select %p194, %s16, 1
      %s196 = smul.addr %s195, 2
      %s197 = scalar_lea.vmem %s4, %s196
      %s198 = smul.u32 32, %s16
      %p199 = scmp.lt.s32.totalorder %s198, 63
      %s200 = scalar_select %p199, %s198, 63
      %s201 = smul.addr %s200, 2
      %s202 = smul.addr %s201, 4
      %s203 = scalar_lea.vmem %s0, %s202
      %s204 = smul.u32 32, %s16
      %s205 = smul.u32 32, %s16
      %p206 = scmp.lt.s32.totalorder %s205, 63
      %s207 = scalar_select %p206, %s205, 63
      %s208 = smul.addr %s207, 4
      %s209 = scalar_lea.vmem %s3, %s208
      %s210 = smul.u32 32, %s16
      %p211 = scmp.lt.s32.totalorder %s16, 1
      %s212 = scalar_select %p211, %s16, 1
      %s213 = smul.addr %s212, 2
      %s214 = scalar_lea.vmem %s4, %s213
      %v216 = vld [vmem:[%s203] sm:$0xff]
      %v217 = vld [vmem:[%s203 + $0x8] sm:$0xff]
      %v218 = vld [vmem:[%s203 + $0x10] sm:$0xff]
      %v219 = vld [vmem:[%s203 + $0x18] sm:$0xff]
      %v220 = vld [vmem:[%s203 + $0x20] sm:$0xff]
      %v221 = vld [vmem:[%s203 + $0x28] sm:$0xff]
      %v222 = vld [vmem:[%s203 + $0x30] sm:$0xff]
      %v223 = vld [vmem:[%s203 + $0x38] sm:$0xff]
      %v224 = vld [vmem:[%s203 + $0x40] sm:$0xff]
      %v225 = vld [vmem:[%s203 + $0x48] sm:$0xff]
      %v226 = vld [vmem:[%s203 + $0x50] sm:$0xff]
      %v227 = vld [vmem:[%s203 + $0x58] sm:$0xff]
      %v228 = vld [vmem:[%s203 + $0x60] sm:$0xff]
      %v229 = vld [vmem:[%s203 + $0x68] sm:$0xff]
      %v230 = vld [vmem:[%s203 + $0x70] sm:$0xff]
      %v231 = vld [vmem:[%s203 + $0x78] sm:$0xff]
      %v232 = vld [vmem:[%s203 + $0x80] sm:$0xff]
      %v233 = vld [vmem:[%s203 + $0x88] sm:$0xff]
      %v234 = vld [vmem:[%s203 + $0x90] sm:$0xff]
      %v235 = vld [vmem:[%s203 + $0x98] sm:$0xff]
      %v236 = vld [vmem:[%s203 + $0xa0] sm:$0xff]
      %v237 = vld [vmem:[%s203 + $0xa8] sm:$0xff]
      %v238 = vld [vmem:[%s203 + $0xb0] sm:$0xff]
      %v239 = vld [vmem:[%s203 + $0xb8] sm:$0xff]
      %v240 = vld [vmem:[%s203 + $0xc0] sm:$0xff]
      %v241 = vld [vmem:[%s203 + $0xc8] sm:$0xff]
      %v242 = vld [vmem:[%s203 + $0xd0] sm:$0xff]
      %v243 = vld [vmem:[%s203 + $0xd8] sm:$0xff]
      %v244 = vld [vmem:[%s203 + $0xe0] sm:$0xff]
      %v245 = vld [vmem:[%s203 + $0xe8] sm:$0xff]
      %v246 = vld [vmem:[%s203 + $0xf0] sm:$0xff]
      %v247 = vld [vmem:[%s203 + $0xf8] sm:$0xff]
      %v248 = vld [vmem:[%s1] sm:$0xf]
      %v249 = vld [vmem:[%s1 + $0x4] sm:$0xf]
      %v250 = vld [vmem:[%s1 + $0x8] sm:$0xf]
      %v251 = vld [vmem:[%s1 + $0xc] sm:$0xf]
      %v252 = vld [vmem:[%s1 + $0x10] sm:$0xf]
      %v253 = vld [vmem:[%s1 + $0x14] sm:$0xf]
      %v254 = vld [vmem:[%s1 + $0x18] sm:$0xf]
      %v255 = vld [vmem:[%s1 + $0x1c] sm:$0xf]
      %v256 = vld [vmem:[%s1 + $0x20] sm:$0xf]
      %v257 = vld [vmem:[%s1 + $0x24] sm:$0xf]
      %v258 = vld [vmem:[%s1 + $0x28] sm:$0xf]
      %v259 = vld [vmem:[%s1 + $0x2c] sm:$0xf]
      %v260 = vld [vmem:[%s1 + $0x30] sm:$0xf]
      %v261 = vld [vmem:[%s1 + $0x34] sm:$0xf]
      %v262 = vld [vmem:[%s1 + $0x38] sm:$0xf]
      %v263 = vld [vmem:[%s1 + $0x3c] sm:$0xf]
      %v264 = vld [vmem:[%s1 + $0x40] sm:$0xf]
      %v265 = vld [vmem:[%s1 + $0x44] sm:$0xf]
      %v266 = vld [vmem:[%s1 + $0x48] sm:$0xf]
      %v267 = vld [vmem:[%s1 + $0x4c] sm:$0xf]
      %v268 = vld [vmem:[%s1 + $0x50] sm:$0xf]
      %v269 = vld [vmem:[%s1 + $0x54] sm:$0xf]
      %v270 = vld [vmem:[%s1 + $0x58] sm:$0xf]
      %v271 = vld [vmem:[%s1 + $0x5c] sm:$0xf]
      %v272 = vld [vmem:[%s1 + $0x60] sm:$0xf]
      %v273 = vld [vmem:[%s2] sm:$0x1]
      %v275 = vlaneseq
      %v276 = vshrl.u32 %v275, 7
      %v277 = vsub.s32 0, %v276
      %v278 = vrot.slane %v273, %v277
      %v312 = vunpack.c.l.b16 %v216
      %v313 = vunpack.c.h.b16 %v216
      %v314 = vunpack.c.l.b16 %v217
      %v315 = vunpack.c.h.b16 %v217
      %v316 = vunpack.c.l.b16 %v218
      %v317 = vunpack.c.h.b16 %v218
      %v318 = vunpack.c.l.b16 %v219
      %v319 = vunpack.c.h.b16 %v219
      %v320 = vunpack.c.l.b16 %v220
      %v321 = vunpack.c.h.b16 %v220
      %v322 = vunpack.c.l.b16 %v221
      %v323 = vunpack.c.h.b16 %v221
      %v324 = vunpack.c.l.b16 %v222
      %v325 = vunpack.c.h.b16 %v222
      %v326 = vunpack.c.l.b16 %v223
      %v327 = vunpack.c.h.b16 %v223
      %v328 = vunpack.c.l.b16 %v224
      %v329 = vunpack.c.h.b16 %v224
      %v330 = vunpack.c.l.b16 %v225
      %v331 = vunpack.c.h.b16 %v225
      %v332 = vunpack.c.l.b16 %v226
      %v333 = vunpack.c.h.b16 %v226
      %v334 = vunpack.c.l.b16 %v227
      %v335 = vunpack.c.h.b16 %v227
      %v336 = vunpack.c.l.b16 %v228
      %v337 = vunpack.c.h.b16 %v228
      %v338 = vunpack.c.l.b16 %v229
      %v339 = vunpack.c.h.b16 %v229
      %v340 = vunpack.c.l.b16 %v230
      %v341 = vunpack.c.h.b16 %v230
      %v342 = vunpack.c.l.b16 %v231
      %v343 = vunpack.c.h.b16 %v231
      %v344 = vunpack.c.l.b16 %v232
      %v345 = vunpack.c.h.b16 %v232
      %v346 = vunpack.c.l.b16 %v233
      %v347 = vunpack.c.h.b16 %v233
      %v348 = vunpack.c.l.b16 %v234
      %v349 = vunpack.c.h.b16 %v234
      %v350 = vunpack.c.l.b16 %v235
      %v351 = vunpack.c.h.b16 %v235
      %v352 = vunpack.c.l.b16 %v236
      %v353 = vunpack.c.h.b16 %v236
      %v354 = vunpack.c.l.b16 %v237
      %v355 = vunpack.c.h.b16 %v237
      %v356 = vunpack.c.l.b16 %v238
      %v357 = vunpack.c.h.b16 %v238
      %v358 = vunpack.c.l.b16 %v239
      %v359 = vunpack.c.h.b16 %v239
      %v360 = vunpack.c.l.b16 %v240
      %v361 = vunpack.c.h.b16 %v240
      %v362 = vunpack.c.l.b16 %v241
      %v363 = vunpack.c.h.b16 %v241
      %v364 = vunpack.c.l.b16 %v242
      %v365 = vunpack.c.h.b16 %v242
      %v366 = vunpack.c.l.b16 %v243
      %v367 = vunpack.c.h.b16 %v243
      %v368 = vunpack.c.l.b16 %v244
      %v369 = vunpack.c.h.b16 %v244
      %v370 = vunpack.c.l.b16 %v245
      %v371 = vunpack.c.h.b16 %v245
      %v372 = vunpack.c.l.b16 %v246
      %v373 = vunpack.c.h.b16 %v246
      %v374 = vunpack.c.l.b16 %v247
      %v375 = vunpack.c.h.b16 %v247
      %v376 = vpack.c.b16 %v314, %v312
      %v377 = vpack.c.b16 %v315, %v313
      %v378 = vpack.c.b16 %v318, %v316
      %v379 = vpack.c.b16 %v319, %v317
      %v380 = vpack.c.b16 %v322, %v320
      %v381 = vpack.c.b16 %v323, %v321
      %v382 = vpack.c.b16 %v326, %v324
      %v383 = vpack.c.b16 %v327, %v325
      %v384 = vpack.c.b16 %v330, %v328
      %v385 = vpack.c.b16 %v331, %v329
      %v386 = vpack.c.b16 %v334, %v332
      %v387 = vpack.c.b16 %v335, %v333
      %v388 = vpack.c.b16 %v338, %v336
      %v389 = vpack.c.b16 %v339, %v337
      %v390 = vpack.c.b16 %v342, %v340
      %v391 = vpack.c.b16 %v343, %v341
      %v392 = vpack.c.b16 %v346, %v344
      %v393 = vpack.c.b16 %v347, %v345
      %v394 = vpack.c.b16 %v350, %v348
      %v395 = vpack.c.b16 %v351, %v349
      %v396 = vpack.c.b16 %v354, %v352
      %v397 = vpack.c.b16 %v355, %v353
      %v398 = vpack.c.b16 %v358, %v356
      %v399 = vpack.c.b16 %v359, %v357
      %v400 = vpack.c.b16 %v362, %v360
      %v401 = vpack.c.b16 %v363, %v361
      %v402 = vpack.c.b16 %v366, %v364
      %v403 = vpack.c.b16 %v367, %v365
      %v404 = vpack.c.b16 %v370, %v368
      %v405 = vpack.c.b16 %v371, %v369
      %v406 = vpack.c.b16 %v374, %v372
      %v407 = vpack.c.b16 %v375, %v373
      %v449 = vunpack.c.l.b16 %v248
      %v450 = vunpack.c.l.b16 %v249
      %v451 = vunpack.c.l.b16 %v250
      %v452 = vunpack.c.l.b16 %v251
      %v453 = vunpack.c.l.b16 %v252
      %v454 = vunpack.c.l.b16 %v253
      %v455 = vunpack.c.l.b16 %v254
      %v456 = vunpack.c.l.b16 %v255
      %v457 = vunpack.c.l.b16 %v256
      %v458 = vunpack.c.l.b16 %v257
      %v459 = vunpack.c.l.b16 %v258
      %v460 = vunpack.c.l.b16 %v259
      %v461 = vunpack.c.l.b16 %v260
      %v462 = vunpack.c.l.b16 %v261
      %v463 = vunpack.c.l.b16 %v262
      %v464 = vunpack.c.l.b16 %v263
      %v465 = vunpack.c.l.b16 %v264
      %v466 = vunpack.c.l.b16 %v265
      %v467 = vunpack.c.l.b16 %v266
      %v468 = vunpack.c.l.b16 %v267
      %v469 = vunpack.c.l.b16 %v268
      %v470 = vunpack.c.l.b16 %v269
      %v471 = vunpack.c.l.b16 %v270
      %v472 = vunpack.c.l.b16 %v271
      %v473 = vunpack.c.l.b16 %v272
      %v474 = vpack.c.b16 %v450, %v449
      %v475 = vpack.c.b16 %v452, %v451
      %v476 = vpack.c.b16 %v454, %v453
      %v477 = vpack.c.b16 %v456, %v455
      %v478 = vpack.c.b16 %v458, %v457
      %v479 = vpack.c.b16 %v460, %v459
      %v480 = vpack.c.b16 %v462, %v461
      %v481 = vpack.c.b16 %v464, %v463
      %v482 = vpack.c.b16 %v466, %v465
      %v483 = vpack.c.b16 %v468, %v467
      %v484 = vpack.c.b16 %v470, %v469
      %v485 = vpack.c.b16 %v472, %v471
      %v486 = vpack.c.b16 %v473, %v473
      %vm499 = vcmask 588800
      %v501 = vsel %vm499, %v377, 0
      %v504 = vsel %vm499, %v379, 0
      %v507 = vsel %vm499, %v381, 0
      %v510 = vsel %vm499, %v383, 0
      %v513 = vsel %vm499, %v385, 0
      %v516 = vsel %vm499, %v387, 0
      %v519 = vsel %vm499, %v389, 0
      %v522 = vsel %vm499, %v391, 0
      %v525 = vsel %vm499, %v393, 0
      %v528 = vsel %vm499, %v395, 0
      %v531 = vsel %vm499, %v397, 0
      %v534 = vsel %vm499, %v399, 0
      %v537 = vsel %vm499, %v401, 0
      %v540 = vsel %vm499, %v403, 0
      %v543 = vsel %vm499, %v405, 0
      %v546 = vsel %vm499, %v407, 0
      %vm548 = vcmask 1043456
      %v550 = vsel %vm548, %v486, 0
      %552 = vmatprep.subr.bf16.mxu0 0
      %553 = vmatpush1.bf16.msra.mxu0 %v474
      %554 = vmatprep.subr.bf16.mxu0 0
      %555 = vmatpush1.bf16.msra.mxu0 %v475
      %556 = vmatprep.subr.bf16.mxu0 0
      %557 = vmatpush1.bf16.msra.mxu0 %v476
      %558 = vmatprep.subr.bf16.mxu0 0
      %559 = vmatpush1.bf16.msra.mxu0 %v477
      %560 = vmatprep.subr.bf16.mxu0 0
      %561 = vmatpush1.bf16.msra.mxu0 %v478
      %562 = vmatprep.subr.bf16.mxu0 0
      %563 = vmatpush1.bf16.msra.mxu0 %v479
      %564 = vmatprep.subr.bf16.mxu0 0
      %565 = vmatpush1.bf16.msra.mxu0 %v480
      %566 = vmatprep.subr.bf16.mxu0 0
      %567 = vmatpush1.bf16.msra.mxu0 %v481
      %568 = vmatprep.subr.bf16.mxu0 0
      %569 = vmatpush1.bf16.msra.mxu0 %v482
      %570 = vmatprep.subr.bf16.mxu0 0
      %571 = vmatpush1.bf16.msra.mxu0 %v483
      %572 = vmatprep.subr.bf16.mxu0 0
      %573 = vmatpush1.bf16.msra.mxu0 %v484
      %574 = vmatprep.subr.bf16.mxu0 0
      %575 = vmatpush1.bf16.msra.mxu0 %v485
      %576 = vmatprep.subr.bf16.mxu0 0
      %577 = vmatpush1.bf16.msra.mxu0 %v550
      %578 = vmatprep.subr.bf16.mxu0 0
      %579 = vmatpush1.bf16.msra.mxu0 0
      %580 = vmatprep.subr.bf16.mxu0 0
      %581 = vmatpush1.bf16.msra.mxu0 0
      %582 = vmatprep.subr.bf16.mxu0 0
      %583 = vmatpush1.bf16.msra.mxu0 0
      %584 = vmatprep.mubr.bf16.mxu0 %v501
      %585 = vmatmul.mubr.bf16.gmra.mrb[0].mxu0 %v376
      %v586 = vpop.f32.mrb[0].mxu0
      %v587 = vadd.f32 %v278, %v586
      %v588 = vpop.f32.mrb[0].mxu0
      %v589 = vpop.f32.mrb[0].mxu0
      %v590 = vadd.f32 %v278, %v589
      %v591 = vpop.f32.mrb[0].mxu0
      %592 = vmatprep.mubr.bf16.mxu0 %v504
      %593 = vmatmul.mubr.bf16.gmra.mrb[0].mxu0 %v378
      %v594 = vpop.f32.mrb[0].mxu0
      %v595 = vadd.f32 %v278, %v594
      %v596 = vpop.f32.mrb[0].mxu0
      %v597 = vpop.f32.mrb[0].mxu0
      %v598 = vadd.f32 %v278, %v597
      %v599 = vpop.f32.mrb[0].mxu0
      %600 = vmatprep.mubr.bf16.mxu0 %v507
      %601 = vmatmul.mubr.bf16.gmra.mrb[0].mxu0 %v380
      %v602 = vpop.f32.mrb[0].mxu0
      %v603 = vadd.f32 %v278, %v602
      %v604 = vpop.f32.mrb[0].mxu0
      %v605 = vpop.f32.mrb[0].mxu0
      %v606 = vadd.f32 %v278, %v605
      %v607 = vpop.f32.mrb[0].mxu0
      %608 = vmatprep.mubr.bf16.mxu0 %v510
      %609 = vmatmul.mubr.bf16.gmra.mrb[0].mxu0 %v382
      %v610 = vpop.f32.mrb[0].mxu0
      %v611 = vadd.f32 %v278, %v610
      %v612 = vpop.f32.mrb[0].mxu0
      %v613 = vpop.f32.mrb[0].mxu0
      %v614 = vadd.f32 %v278, %v613
      %v615 = vpop.f32.mrb[0].mxu0
      %616 = vmatprep.mubr.bf16.mxu0 %v513
      %617 = vmatmul.mubr.bf16.gmra.mrb[0].mxu0 %v384
      %v618 = vpop.f32.mrb[0].mxu0
      %v619 = vadd.f32 %v278, %v618
      %v620 = vpop.f32.mrb[0].mxu0
      %v621 = vpop.f32.mrb[0].mxu0
      %v622 = vadd.f32 %v278, %v621
      %v623 = vpop.f32.mrb[0].mxu0
      %624 = vmatprep.mubr.bf16.mxu0 %v516
      %625 = vmatmul.mubr.bf16.gmra.mrb[0].mxu0 %v386
      %v626 = vpop.f32.mrb[0].mxu0
      %v627 = vadd.f32 %v278, %v626
      %v628 = vpop.f32.mrb[0].mxu0
      %v629 = vpop.f32.mrb[0].mxu0
      %v630 = vadd.f32 %v278, %v629
      %v631 = vpop.f32.mrb[0].mxu0
      %632 = vmatprep.mubr.bf16.mxu0 %v519
      %633 = vmatmul.mubr.bf16.gmra.mrb[0].mxu0 %v388
      %v634 = vpop.f32.mrb[0].mxu0
      %v635 = vadd.f32 %v278, %v634
      %v636 = vpop.f32.mrb[0].mxu0
      %v637 = vpop.f32.mrb[0].mxu0
      %v638 = vadd.f32 %v278, %v637
      %v639 = vpop.f32.mrb[0].mxu0
      %640 = vmatprep.mubr.bf16.mxu0 %v522
      %641 = vmatmul.mubr.bf16.gmra.mrb[0].mxu0 %v390
      %v642 = vpop.f32.mrb[0].mxu0
      %v643 = vadd.f32 %v278, %v642
      %v644 = vpop.f32.mrb[0].mxu0
      %v645 = vpop.f32.mrb[0].mxu0
      %v646 = vadd.f32 %v278, %v645
      %v647 = vpop.f32.mrb[0].mxu0
      %648 = vmatprep.mubr.bf16.mxu0 %v525
      %649 = vmatmul.mubr.bf16.gmra.mrb[0].mxu0 %v392
      %v650 = vpop.f32.mrb[0].mxu0
      %v651 = vadd.f32 %v278, %v650
      %v652 = vpop.f32.mrb[0].mxu0
      %v653 = vpop.f32.mrb[0].mxu0
      %v654 = vadd.f32 %v278, %v653
      %v655 = vpop.f32.mrb[0].mxu0
      %656 = vmatprep.mubr.bf16.mxu0 %v528
      %657 = vmatmul.mubr.bf16.gmra.mrb[0].mxu0 %v394
      %v658 = vpop.f32.mrb[0].mxu0
      %v659 = vadd.f32 %v278, %v658
      %v660 = vpop.f32.mrb[0].mxu0
      %v661 = vpop.f32.mrb[0].mxu0
      %v662 = vadd.f32 %v278, %v661
      %v663 = vpop.f32.mrb[0].mxu0
      %664 = vmatprep.mubr.bf16.mxu0 %v531
      %665 = vmatmul.mubr.bf16.gmra.mrb[0].mxu0 %v396
      %v666 = vpop.f32.mrb[0].mxu0
      %v667 = vadd.f32 %v278, %v666
      %v668 = vpop.f32.mrb[0].mxu0
      %v669 = vpop.f32.mrb[0].mxu0
      %v670 = vadd.f32 %v278, %v669
      %v671 = vpop.f32.mrb[0].mxu0
      %672 = vmatprep.mubr.bf16.mxu0 %v534
      %673 = vmatmul.mubr.bf16.gmra.mrb[0].mxu0 %v398
      %v674 = vpop.f32.mrb[0].mxu0
      %v675 = vadd.f32 %v278, %v674
      %v676 = vpop.f32.mrb[0].mxu0
      %v677 = vpop.f32.mrb[0].mxu0
      %v678 = vadd.f32 %v278, %v677
      %v679 = vpop.f32.mrb[0].mxu0
      %680 = vmatprep.mubr.bf16.mxu0 %v537
      %681 = vmatmul.mubr.bf16.gmra.mrb[0].mxu0 %v400
      %v682 = vpop.f32.mrb[0].mxu0
      %v683 = vadd.f32 %v278, %v682
      %v684 = vpop.f32.mrb[0].mxu0
      %v685 = vpop.f32.mrb[0].mxu0
      %v686 = vadd.f32 %v278, %v685
      %v687 = vpop.f32.mrb[0].mxu0
      %688 = vmatprep.mubr.bf16.mxu0 %v540
      %689 = vmatmul.mubr.bf16.gmra.mrb[0].mxu0 %v402
      %v690 = vpop.f32.mrb[0].mxu0
      %v691 = vadd.f32 %v278, %v690
      %v692 = vpop.f32.mrb[0].mxu0
      %v693 = vpop.f32.mrb[0].mxu0
      %v694 = vadd.f32 %v278, %v693
      %v695 = vpop.f32.mrb[0].mxu0
      %696 = vmatprep.mubr.bf16.mxu0 %v543
      %697 = vmatmul.mubr.bf16.gmra.mrb[0].mxu0 %v404
      %v698 = vpop.f32.mrb[0].mxu0
      %v699 = vadd.f32 %v278, %v698
      %v700 = vpop.f32.mrb[0].mxu0
      %v701 = vpop.f32.mrb[0].mxu0
      %v702 = vadd.f32 %v278, %v701
      %v703 = vpop.f32.mrb[0].mxu0
      %704 = vmatprep.mubr.bf16.mxu0 %v546
      %705 = vmatmul.mubr.bf16.gmra.mrb[0].mxu0 %v406
      %v706 = vpop.f32.mrb[0].mxu0
      %v707 = vadd.f32 %v278, %v706
      %v708 = vpop.f32.mrb[0].mxu0
      %v709 = vpop.f32.mrb[0].mxu0
      %v710 = vadd.f32 %v278, %v709
      %v711 = vpop.f32.mrb[0].mxu0
      %712 = vdwg.mxu0
      %v713 = vlaneseq
      %v714 = vshrl.u32 %v713, 7
      %v715 = vadd.s32 %v714, 8
      %v716 = vadd.s32 %v714, 16
      %v717 = vadd.s32 %v714, 24
      %v718 = vadd.s32 %v714, 32
      %v719 = vadd.s32 %v714, 40
      %v720 = vadd.s32 %v714, 48
      %v721 = vadd.s32 %v714, 56
      %v722 = vadd.s32 %v714, 64
      %v723 = vadd.s32 %v714, 72
      %v724 = vadd.s32 %v714, 80
      %v725 = vadd.s32 %v714, 88
      %v726 = vadd.s32 %v714, 96
      %v727 = vadd.s32 %v714, 104
      %v728 = vadd.s32 %v714, 112
      %v729 = vadd.s32 %v714, 120
      %v730 = vadd.s32 %v714, 128
      %v731 = vadd.s32 %v714, 136
      %v732 = vadd.s32 %v714, 144
      %v733 = vadd.s32 %v714, 152
      %v734 = vadd.s32 %v714, 160
      %v735 = vadd.s32 %v714, 168
      %v736 = vadd.s32 %v714, 176
      %v737 = vadd.s32 %v714, 184
      %v738 = vadd.s32 %v714, 192
      %v739 = vadd.s32 %v714, 200
      %v740 = vadd.s32 %v714, 208
      %v741 = vadd.s32 %v714, 216
      %v742 = vadd.s32 %v714, 224
      %v743 = vadd.s32 %v714, 232
      %v744 = vadd.s32 %v714, 240
      %v745 = vadd.s32 %v714, 248
      %s746 = smul.u32 %s16, 256
      %v747 = vstv %s746
      %v748 = vadd.s32 %v714, %v747
      %v749 = vadd.s32 %v715, %v747
      %v750 = vadd.s32 %v716, %v747
      %v751 = vadd.s32 %v717, %v747
      %v752 = vadd.s32 %v718, %v747
      %v753 = vadd.s32 %v719, %v747
      %v754 = vadd.s32 %v720, %v747
      %v755 = vadd.s32 %v721, %v747
      %v756 = vadd.s32 %v722, %v747
      %v757 = vadd.s32 %v723, %v747
      %v758 = vadd.s32 %v724, %v747
      %v759 = vadd.s32 %v725, %v747
      %v760 = vadd.s32 %v726, %v747
      %v761 = vadd.s32 %v727, %v747
      %v762 = vadd.s32 %v728, %v747
      %v763 = vadd.s32 %v729, %v747
      %v764 = vadd.s32 %v730, %v747
      %v765 = vadd.s32 %v731, %v747
      %v766 = vadd.s32 %v732, %v747
      %v767 = vadd.s32 %v733, %v747
      %v768 = vadd.s32 %v734, %v747
      %v769 = vadd.s32 %v735, %v747
      %v770 = vadd.s32 %v736, %v747
      %v771 = vadd.s32 %v737, %v747
      %v772 = vadd.s32 %v738, %v747
      %v773 = vadd.s32 %v739, %v747
      %v774 = vadd.s32 %v740, %v747
      %v775 = vadd.s32 %v741, %v747
      %v776 = vadd.s32 %v742, %v747
      %v777 = vadd.s32 %v743, %v747
      %v778 = vadd.s32 %v744, %v747
      %v779 = vadd.s32 %v745, %v747
      %vm780 = vcmp.lt.s32.totalorder %v748, 512
      %vm781 = vcmp.lt.s32.totalorder %v749, 512
      %vm782 = vcmp.lt.s32.totalorder %v750, 512
      %vm783 = vcmp.lt.s32.totalorder %v751, 512
      %vm784 = vcmp.lt.s32.totalorder %v752, 512
      %vm785 = vcmp.lt.s32.totalorder %v753, 512
      %vm786 = vcmp.lt.s32.totalorder %v754, 512
      %vm787 = vcmp.lt.s32.totalorder %v755, 512
      %vm788 = vcmp.lt.s32.totalorder %v756, 512
      %vm789 = vcmp.lt.s32.totalorder %v757, 512
      %vm790 = vcmp.lt.s32.totalorder %v758, 512
      %vm791 = vcmp.lt.s32.totalorder %v759, 512
      %vm792 = vcmp.lt.s32.totalorder %v760, 512
      %vm793 = vcmp.lt.s32.totalorder %v761, 512
      %vm794 = vcmp.lt.s32.totalorder %v762, 512
      %vm795 = vcmp.lt.s32.totalorder %v763, 512
      %vm796 = vcmp.lt.s32.totalorder %v764, 512
      %vm797 = vcmp.lt.s32.totalorder %v765, 512
      %vm798 = vcmp.lt.s32.totalorder %v766, 512
      %vm799 = vcmp.lt.s32.totalorder %v767, 512
      %vm800 = vcmp.lt.s32.totalorder %v768, 512
      %vm801 = vcmp.lt.s32.totalorder %v769, 512
      %vm802 = vcmp.lt.s32.totalorder %v770, 512
      %vm803 = vcmp.lt.s32.totalorder %v771, 512
      %vm804 = vcmp.lt.s32.totalorder %v772, 512
      %vm805 = vcmp.lt.s32.totalorder %v773, 512
      %vm806 = vcmp.lt.s32.totalorder %v774, 512
      %vm807 = vcmp.lt.s32.totalorder %v775, 512
      %vm808 = vcmp.lt.s32.totalorder %v776, 512
      %vm809 = vcmp.lt.s32.totalorder %v777, 512
      %vm810 = vcmp.lt.s32.totalorder %v778, 512
      %vm811 = vcmp.lt.s32.totalorder %v779, 512
      %v812 = vsel %vm780, 1, 0
      %v813 = vsel %vm781, 1, 0
      %v814 = vsel %vm782, 1, 0
      %v815 = vsel %vm783, 1, 0
      %v816 = vsel %vm784, 1, 0
      %v817 = vsel %vm785, 1, 0
      %v818 = vsel %vm786, 1, 0
      %v819 = vsel %vm787, 1, 0
      %v820 = vsel %vm788, 1, 0
      %v821 = vsel %vm789, 1, 0
      %v822 = vsel %vm790, 1, 0
      %v823 = vsel %vm791, 1, 0
      %v824 = vsel %vm792, 1, 0
      %v825 = vsel %vm793, 1, 0
      %v826 = vsel %vm794, 1, 0
      %v827 = vsel %vm795, 1, 0
      %v828 = vsel %vm796, 1, 0
      %v829 = vsel %vm797, 1, 0
      %v830 = vsel %vm798, 1, 0
      %v831 = vsel %vm799, 1, 0
      %v832 = vsel %vm800, 1, 0
      %v833 = vsel %vm801, 1, 0
      %v834 = vsel %vm802, 1, 0
      %v835 = vsel %vm803, 1, 0
      %v836 = vsel %vm804, 1, 0
      %v837 = vsel %vm805, 1, 0
      %v838 = vsel %vm806, 1, 0
      %v839 = vsel %vm807, 1, 0
      %v840 = vsel %vm808, 1, 0
      %v841 = vsel %vm809, 1, 0
      %v842 = vsel %vm810, 1, 0
      %v843 = vsel %vm811, 1, 0
      %vm844 = vcmp.eq.s32.totalorder %v812, 1
      %vm845 = vcmp.eq.s32.totalorder %v813, 1
      %vm846 = vcmp.eq.s32.totalorder %v814, 1
      %vm847 = vcmp.eq.s32.totalorder %v815, 1
      %vm848 = vcmp.eq.s32.totalorder %v816, 1
      %vm849 = vcmp.eq.s32.totalorder %v817, 1
      %vm850 = vcmp.eq.s32.totalorder %v818, 1
      %vm851 = vcmp.eq.s32.totalorder %v819, 1
      %vm852 = vcmp.eq.s32.totalorder %v820, 1
      %vm853 = vcmp.eq.s32.totalorder %v821, 1
      %vm854 = vcmp.eq.s32.totalorder %v822, 1
      %vm855 = vcmp.eq.s32.totalorder %v823, 1
      %vm856 = vcmp.eq.s32.totalorder %v824, 1
      %vm857 = vcmp.eq.s32.totalorder %v825, 1
      %vm858 = vcmp.eq.s32.totalorder %v826, 1
      %vm859 = vcmp.eq.s32.totalorder %v827, 1
      %vm860 = vcmp.eq.s32.totalorder %v828, 1
      %vm861 = vcmp.eq.s32.totalorder %v829, 1
      %vm862 = vcmp.eq.s32.totalorder %v830, 1
      %vm863 = vcmp.eq.s32.totalorder %v831, 1
      %vm864 = vcmp.eq.s32.totalorder %v832, 1
      %vm865 = vcmp.eq.s32.totalorder %v833, 1
      %vm866 = vcmp.eq.s32.totalorder %v834, 1
      %vm867 = vcmp.eq.s32.totalorder %v835, 1
      %vm868 = vcmp.eq.s32.totalorder %v836, 1
      %vm869 = vcmp.eq.s32.totalorder %v837, 1
      %vm870 = vcmp.eq.s32.totalorder %v838, 1
      %vm871 = vcmp.eq.s32.totalorder %v839, 1
      %vm872 = vcmp.eq.s32.totalorder %v840, 1
      %vm873 = vcmp.eq.s32.totalorder %v841, 1
      %vm874 = vcmp.eq.s32.totalorder %v842, 1
      %vm875 = vcmp.eq.s32.totalorder %v843, 1
      %v876 = vsel %vm844, %v587, 0.0
      %v877 = vsel %vm845, %v590, 0.0
      %v878 = vsel %vm846, %v595, 0.0
      %v879 = vsel %vm847, %v598, 0.0
      %v880 = vsel %vm848, %v603, 0.0
      %v881 = vsel %vm849, %v606, 0.0
      %v882 = vsel %vm850, %v611, 0.0
      %v883 = vsel %vm851, %v614, 0.0
      %v884 = vsel %vm852, %v619, 0.0
      %v885 = vsel %vm853, %v622, 0.0
      %v886 = vsel %vm854, %v627, 0.0
      %v887 = vsel %vm855, %v630, 0.0
      %v888 = vsel %vm856, %v635, 0.0
      %v889 = vsel %vm857, %v638, 0.0
      %v890 = vsel %vm858, %v643, 0.0
      %v891 = vsel %vm859, %v646, 0.0
      %v892 = vsel %vm860, %v651, 0.0
      %v893 = vsel %vm861, %v654, 0.0
      %v894 = vsel %vm862, %v659, 0.0
      %v895 = vsel %vm863, %v662, 0.0
      %v896 = vsel %vm864, %v667, 0.0
      %v897 = vsel %vm865, %v670, 0.0
      %v898 = vsel %vm866, %v675, 0.0
      %v899 = vsel %vm867, %v678, 0.0
      %v900 = vsel %vm868, %v683, 0.0
      %v901 = vsel %vm869, %v686, 0.0
      %v902 = vsel %vm870, %v691, 0.0
      %v903 = vsel %vm871, %v694, 0.0
      %v904 = vsel %vm872, %v699, 0.0
      %v905 = vsel %vm873, %v702, 0.0
      %v906 = vsel %vm874, %v707, 0.0
      %v907 = vsel %vm875, %v710, 0.0
      %vm908 = vcmask 130048
      %v909 = vsel %vm908, %v876, 0.0
      %v910 = vsel %vm908, %v877, 0.0
      %v911 = vadd.f32 %v909, %v910
      %v912 = vsel %vm908, %v878, 0.0
      %v913 = vadd.f32 %v911, %v912
      %v914 = vsel %vm908, %v879, 0.0
      %v915 = vadd.f32 %v913, %v914
      %v916 = vsel %vm908, %v880, 0.0
      %v917 = vadd.f32 %v915, %v916
      %v918 = vsel %vm908, %v881, 0.0
      %v919 = vadd.f32 %v917, %v918
      %v920 = vsel %vm908, %v882, 0.0
      %v921 = vadd.f32 %v919, %v920
      %v922 = vsel %vm908, %v883, 0.0
      %v923 = vadd.f32 %v921, %v922
      %v924 = vsel %vm908, %v884, 0.0
      %v925 = vadd.f32 %v923, %v924
      %v926 = vsel %vm908, %v885, 0.0
      %v927 = vadd.f32 %v925, %v926
      %v928 = vsel %vm908, %v886, 0.0
      %v929 = vadd.f32 %v927, %v928
      %v930 = vsel %vm908, %v887, 0.0
      %v931 = vadd.f32 %v929, %v930
      %v932 = vsel %vm908, %v888, 0.0
      %v933 = vadd.f32 %v931, %v932
      %v934 = vsel %vm908, %v889, 0.0
      %v935 = vadd.f32 %v933, %v934
      %v936 = vsel %vm908, %v890, 0.0
      %v937 = vadd.f32 %v935, %v936
      %v938 = vsel %vm908, %v891, 0.0
      %v939 = vadd.f32 %v937, %v938
      %v940 = vsel %vm908, %v892, 0.0
      %v941 = vadd.f32 %v939, %v940
      %v942 = vsel %vm908, %v893, 0.0
      %v943 = vadd.f32 %v941, %v942
      %v944 = vsel %vm908, %v894, 0.0
      %v945 = vadd.f32 %v943, %v944
      %v946 = vsel %vm908, %v895, 0.0
      %v947 = vadd.f32 %v945, %v946
      %v948 = vsel %vm908, %v896, 0.0
      %v949 = vadd.f32 %v947, %v948
      %v950 = vsel %vm908, %v897, 0.0
      %v951 = vadd.f32 %v949, %v950
      %v952 = vsel %vm908, %v898, 0.0
      %v953 = vadd.f32 %v951, %v952
      %v954 = vsel %vm908, %v899, 0.0
      %v955 = vadd.f32 %v953, %v954
      %v956 = vsel %vm908, %v900, 0.0
      %v957 = vadd.f32 %v955, %v956
      %v958 = vsel %vm908, %v901, 0.0
      %v959 = vadd.f32 %v957, %v958
      %v960 = vsel %vm908, %v902, 0.0
      %v961 = vadd.f32 %v959, %v960
      %v962 = vsel %vm908, %v903, 0.0
      %v963 = vadd.f32 %v961, %v962
      %v964 = vsel %vm908, %v904, 0.0
      %v965 = vadd.f32 %v963, %v964
      %v966 = vsel %vm908, %v905, 0.0
      %v967 = vadd.f32 %v965, %v966
      %v968 = vsel %vm908, %v906, 0.0
      %v969 = vadd.f32 %v967, %v968
      %v970 = vsel %vm908, %v907, 0.0
      %v971 = vadd.f32 %v969, %v970
      %v972 = vrot.slane %v971, 4
      %v973 = vadd.f32 %v971, %v972
      %v974 = vrot.slane %v973, 2
      %v975 = vadd.f32 %v973, %v974
      %v976 = vrot.slane %v975, 1
      %v977 = vadd.f32 %v975, %v976
      %vm978 = vcmask 122880
      %979 = vst.msk [vmem:[%s214] sm:$0x1] %vm978, %v977
      %v980 = vmul.f32 %v876, %v876
      %v981 = vmul.f32 %v877, %v877
      %v982 = vmul.f32 %v878, %v878
      %v983 = vmul.f32 %v879, %v879
      %v984 = vmul.f32 %v880, %v880
      %v985 = vmul.f32 %v881, %v881
      %v986 = vmul.f32 %v882, %v882
      %v987 = vmul.f32 %v883, %v883
      %v988 = vmul.f32 %v884, %v884
      %v989 = vmul.f32 %v885, %v885
      %v990 = vmul.f32 %v886, %v886
      %v991 = vmul.f32 %v887, %v887
      %v992 = vmul.f32 %v888, %v888
      %v993 = vmul.f32 %v889, %v889
      %v994 = vmul.f32 %v890, %v890
      %v995 = vmul.f32 %v891, %v891
      %v996 = vmul.f32 %v892, %v892
      %v997 = vmul.f32 %v893, %v893
      %v998 = vmul.f32 %v894, %v894
      %v999 = vmul.f32 %v895, %v895
      %v1000 = vmul.f32 %v896, %v896
      %v1001 = vmul.f32 %v897, %v897
      %v1002 = vmul.f32 %v898, %v898
      %v1003 = vmul.f32 %v899, %v899
      %v1004 = vmul.f32 %v900, %v900
      %v1005 = vmul.f32 %v901, %v901
      %v1006 = vmul.f32 %v902, %v902
      %v1007 = vmul.f32 %v903, %v903
      %v1008 = vmul.f32 %v904, %v904
      %v1009 = vmul.f32 %v905, %v905
      %v1010 = vmul.f32 %v906, %v906
      %v1011 = vmul.f32 %v907, %v907
      %v1012 = vsel %vm908, %v980, 0.0
      %v1013 = vsel %vm908, %v981, 0.0
      %v1014 = vadd.f32 %v1012, %v1013
      %v1015 = vsel %vm908, %v982, 0.0
      %v1016 = vadd.f32 %v1014, %v1015
      %v1017 = vsel %vm908, %v983, 0.0
      %v1018 = vadd.f32 %v1016, %v1017
      %v1019 = vsel %vm908, %v984, 0.0
      %v1020 = vadd.f32 %v1018, %v1019
      %v1021 = vsel %vm908, %v985, 0.0
      %v1022 = vadd.f32 %v1020, %v1021
      %v1023 = vsel %vm908, %v986, 0.0
      %v1024 = vadd.f32 %v1022, %v1023
      %v1025 = vsel %vm908, %v987, 0.0
      %v1026 = vadd.f32 %v1024, %v1025
      %v1027 = vsel %vm908, %v988, 0.0
      %v1028 = vadd.f32 %v1026, %v1027
      %v1029 = vsel %vm908, %v989, 0.0
      %v1030 = vadd.f32 %v1028, %v1029
      %v1031 = vsel %vm908, %v990, 0.0
      %v1032 = vadd.f32 %v1030, %v1031
      %v1033 = vsel %vm908, %v991, 0.0
      %v1034 = vadd.f32 %v1032, %v1033
      %v1035 = vsel %vm908, %v992, 0.0
      %v1036 = vadd.f32 %v1034, %v1035
      %v1037 = vsel %vm908, %v993, 0.0
      %v1038 = vadd.f32 %v1036, %v1037
      %v1039 = vsel %vm908, %v994, 0.0
      %v1040 = vadd.f32 %v1038, %v1039
      %v1041 = vsel %vm908, %v995, 0.0
      %v1042 = vadd.f32 %v1040, %v1041
      %v1043 = vsel %vm908, %v996, 0.0
      %v1044 = vadd.f32 %v1042, %v1043
      %v1045 = vsel %vm908, %v997, 0.0
      %v1046 = vadd.f32 %v1044, %v1045
      %v1047 = vsel %vm908, %v998, 0.0
      %v1048 = vadd.f32 %v1046, %v1047
      %v1049 = vsel %vm908, %v999, 0.0
      %v1050 = vadd.f32 %v1048, %v1049
      %v1051 = vsel %vm908, %v1000, 0.0
      %v1052 = vadd.f32 %v1050, %v1051
      %v1053 = vsel %vm908, %v1001, 0.0
      %v1054 = vadd.f32 %v1052, %v1053
      %v1055 = vsel %vm908, %v1002, 0.0
      %v1056 = vadd.f32 %v1054, %v1055
      %v1057 = vsel %vm908, %v1003, 0.0
      %v1058 = vadd.f32 %v1056, %v1057
      %v1059 = vsel %vm908, %v1004, 0.0
      %v1060 = vadd.f32 %v1058, %v1059
      %v1061 = vsel %vm908, %v1005, 0.0
      %v1062 = vadd.f32 %v1060, %v1061
      %v1063 = vsel %vm908, %v1006, 0.0
      %v1064 = vadd.f32 %v1062, %v1063
      %v1065 = vsel %vm908, %v1007, 0.0
      %v1066 = vadd.f32 %v1064, %v1065
      %v1067 = vsel %vm908, %v1008, 0.0
      %v1068 = vadd.f32 %v1066, %v1067
      %v1069 = vsel %vm908, %v1009, 0.0
      %v1070 = vadd.f32 %v1068, %v1069
      %v1071 = vsel %vm908, %v1010, 0.0
      %v1072 = vadd.f32 %v1070, %v1071
      %v1073 = vsel %vm908, %v1011, 0.0
      %v1074 = vadd.f32 %v1072, %v1073
      %v1075 = vrot.slane %v1074, 4
      %v1076 = vadd.f32 %v1074, %v1075
      %v1077 = vrot.slane %v1076, 2
      %v1078 = vadd.f32 %v1076, %v1077
      %v1079 = vrot.slane %v1078, 1
      %v1080 = vadd.f32 %v1078, %v1079
      %1081 = vst.msk [vmem:[%s214 + $0x1] sm:$0x1] %vm978, %v1080
      %v1082 = vpack.c.bf16 %v590, %v587
      %v1083 = vpack.c.bf16 %v598, %v595
      %v1084 = vpack.c.bf16 %v606, %v603
      %v1085 = vpack.c.bf16 %v614, %v611
      %v1086 = vpack.c.bf16 %v622, %v619
      %v1087 = vpack.c.bf16 %v630, %v627
      %v1088 = vpack.c.bf16 %v638, %v635
      %v1089 = vpack.c.bf16 %v646, %v643
      %v1090 = vpack.c.bf16 %v654, %v651
      %v1091 = vpack.c.bf16 %v662, %v659
      %v1092 = vpack.c.bf16 %v670, %v667
      %v1093 = vpack.c.bf16 %v678, %v675
      %v1094 = vpack.c.bf16 %v686, %v683
      %v1095 = vpack.c.bf16 %v694, %v691
      %v1096 = vpack.c.bf16 %v702, %v699
      %v1097 = vpack.c.bf16 %v710, %v707
      %v1114 = vunpack.c.l.b16 %v1082
      %v1115 = vunpack.c.h.b16 %v1082
      %v1116 = vunpack.c.l.b16 %v1083
      %v1117 = vunpack.c.h.b16 %v1083
      %v1118 = vunpack.c.l.b16 %v1084
      %v1119 = vunpack.c.h.b16 %v1084
      %v1120 = vunpack.c.l.b16 %v1085
      %v1121 = vunpack.c.h.b16 %v1085
      %v1122 = vunpack.c.l.b16 %v1086
      %v1123 = vunpack.c.h.b16 %v1086
      %v1124 = vunpack.c.l.b16 %v1087
      %v1125 = vunpack.c.h.b16 %v1087
      %v1126 = vunpack.c.l.b16 %v1088
      %v1127 = vunpack.c.h.b16 %v1088
      %v1128 = vunpack.c.l.b16 %v1089
      %v1129 = vunpack.c.h.b16 %v1089
      %v1130 = vunpack.c.l.b16 %v1090
      %v1131 = vunpack.c.h.b16 %v1090
      %v1132 = vunpack.c.l.b16 %v1091
      %v1133 = vunpack.c.h.b16 %v1091
      %v1134 = vunpack.c.l.b16 %v1092
      %v1135 = vunpack.c.h.b16 %v1092
      %v1136 = vunpack.c.l.b16 %v1093
      %v1137 = vunpack.c.h.b16 %v1093
      %v1138 = vunpack.c.l.b16 %v1094
      %v1139 = vunpack.c.h.b16 %v1094
      %v1140 = vunpack.c.l.b16 %v1095
      %v1141 = vunpack.c.h.b16 %v1095
      %v1142 = vunpack.c.l.b16 %v1096
      %v1143 = vunpack.c.h.b16 %v1096
      %v1144 = vunpack.c.l.b16 %v1097
      %v1145 = vunpack.c.h.b16 %v1097
      %v1146 = vpack.c.b16 %v1114, %v1114
      %v1147 = vpack.c.b16 %v1115, %v1115
      %v1148 = vpack.c.b16 %v1116, %v1116
      %v1149 = vpack.c.b16 %v1117, %v1117
      %v1150 = vpack.c.b16 %v1118, %v1118
      %v1151 = vpack.c.b16 %v1119, %v1119
      %v1152 = vpack.c.b16 %v1120, %v1120
      %v1153 = vpack.c.b16 %v1121, %v1121
      %v1154 = vpack.c.b16 %v1122, %v1122
      %v1155 = vpack.c.b16 %v1123, %v1123
      %v1156 = vpack.c.b16 %v1124, %v1124
      %v1157 = vpack.c.b16 %v1125, %v1125
      %v1158 = vpack.c.b16 %v1126, %v1126
      %v1159 = vpack.c.b16 %v1127, %v1127
      %v1160 = vpack.c.b16 %v1128, %v1128
      %v1161 = vpack.c.b16 %v1129, %v1129
      %v1162 = vpack.c.b16 %v1130, %v1130
      %v1163 = vpack.c.b16 %v1131, %v1131
      %v1164 = vpack.c.b16 %v1132, %v1132
      %v1165 = vpack.c.b16 %v1133, %v1133
      %v1166 = vpack.c.b16 %v1134, %v1134
      %v1167 = vpack.c.b16 %v1135, %v1135
      %v1168 = vpack.c.b16 %v1136, %v1136
      %v1169 = vpack.c.b16 %v1137, %v1137
      %v1170 = vpack.c.b16 %v1138, %v1138
      %v1171 = vpack.c.b16 %v1139, %v1139
      %v1172 = vpack.c.b16 %v1140, %v1140
      %v1173 = vpack.c.b16 %v1141, %v1141
      %v1174 = vpack.c.b16 %v1142, %v1142
      %v1175 = vpack.c.b16 %v1143, %v1143
      %v1176 = vpack.c.b16 %v1144, %v1144
      %v1177 = vpack.c.b16 %v1145, %v1145
      %vm1210 = vcmask 125952
      %1211 = vst.msk [vmem:[%s209] sm:$0xf] %vm1210, %v1146
      %1212 = vst.msk [vmem:[%s209 + $0x4] sm:$0xf] %vm1210, %v1147
      %1213 = vst.msk [vmem:[%s209 + $0x8] sm:$0xf] %vm1210, %v1148
      %1214 = vst.msk [vmem:[%s209 + $0xc] sm:$0xf] %vm1210, %v1149
      %1215 = vst.msk [vmem:[%s209 + $0x10] sm:$0xf] %vm1210, %v1150
      %1216 = vst.msk [vmem:[%s209 + $0x14] sm:$0xf] %vm1210, %v1151
      %1217 = vst.msk [vmem:[%s209 + $0x18] sm:$0xf] %vm1210, %v1152
      %1218 = vst.msk [vmem:[%s209 + $0x1c] sm:$0xf] %vm1210, %v1153
      %1219 = vst.msk [vmem:[%s209 + $0x20] sm:$0xf] %vm1210, %v1154
      %1220 = vst.msk [vmem:[%s209 + $0x24] sm:$0xf] %vm1210, %v1155
      %1221 = vst.msk [vmem:[%s209 + $0x28] sm:$0xf] %vm1210, %v1156
      %1222 = vst.msk [vmem:[%s209 + $0x2c] sm:$0xf] %vm1210, %v1157
      %1223 = vst.msk [vmem:[%s209 + $0x30] sm:$0xf] %vm1210, %v1158
      %1224 = vst.msk [vmem:[%s209 + $0x34] sm:$0xf] %vm1210, %v1159
      %1225 = vst.msk [vmem:[%s209 + $0x38] sm:$0xf] %vm1210, %v1160
      %1226 = vst.msk [vmem:[%s209 + $0x3c] sm:$0xf] %vm1210, %v1161
      %1227 = vst.msk [vmem:[%s209 + $0x40] sm:$0xf] %vm1210, %v1162
      %1228 = vst.msk [vmem:[%s209 + $0x44] sm:$0xf] %vm1210, %v1163
      %1229 = vst.msk [vmem:[%s209 + $0x48] sm:$0xf] %vm1210, %v1164
      %1230 = vst.msk [vmem:[%s209 + $0x4c] sm:$0xf] %vm1210, %v1165
      %1231 = vst.msk [vmem:[%s209 + $0x50] sm:$0xf] %vm1210, %v1166
      %1232 = vst.msk [vmem:[%s209 + $0x54] sm:$0xf] %vm1210, %v1167
      %1233 = vst.msk [vmem:[%s209 + $0x58] sm:$0xf] %vm1210, %v1168
      %1234 = vst.msk [vmem:[%s209 + $0x5c] sm:$0xf] %vm1210, %v1169
      %1235 = vst.msk [vmem:[%s209 + $0x60] sm:$0xf] %vm1210, %v1170
      %1236 = vst.msk [vmem:[%s209 + $0x64] sm:$0xf] %vm1210, %v1171
      %1237 = vst.msk [vmem:[%s209 + $0x68] sm:$0xf] %vm1210, %v1172
      %1238 = vst.msk [vmem:[%s209 + $0x6c] sm:$0xf] %vm1210, %v1173
      %1239 = vst.msk [vmem:[%s209 + $0x70] sm:$0xf] %vm1210, %v1174
      %1240 = vst.msk [vmem:[%s209 + $0x74] sm:$0xf] %vm1210, %v1175
      %1241 = vst.msk [vmem:[%s209 + $0x78] sm:$0xf] %vm1210, %v1176
      %1242 = vst.msk [vmem:[%s209 + $0x7c] sm:$0xf] %vm1210, %v1177
      %s1243 = smul.u32 32, %s16
      %p1244 = scmp.lt.s32.totalorder %s1243, 63
      %s1245 = scalar_select %p1244, %s1243, 63
      %s1246 = smul.addr %s1245, 4
      %s1247 = scalar_lea.vmem %s3, %s1246
      %p1248 = scmp.lt.s32.totalorder %s16, 1
      %s1249 = scalar_select %p1248, %s16, 1
      %s1250 = smul.addr %s1249, 2
      %s1251 = scalar_lea.vmem %s4, %s1250
      // Predicated region
      $region33: #{netd_forward.8} parent=31 // pred_check
        %p1252 = pneg %p102
      $region34: #{netd_forward.8} parent=31 // pred_check_branch
        %1254 = sbr.rel (%p1252) target = $region36
      $region35: #{netd_forward.8} parent=31 // pred_region
        %s1255 = smul.u32 32, %s16
      $region36: #{netd_forward.8} parent=31 // pred_fallthru
        _
      // Predicated region
      $region37: #{netd_forward.8} parent=31 // pred_check
        %p1256 = pneg %p128
      $region38: #{netd_forward.8} parent=31 // pred_check_branch
        %1258 = sbr.rel (%p1256) target = $region40
      $region39: #{netd_forward.8} parent=31 // pred_region
        _
      $region40: #{netd_forward.8} parent=31 // pred_fallthru
        _
    $region32: #{netd_forward.8} parent=5 // pred_fallthru
      _
    %p1259 = scmp.le.s32.totalorder 2, %s11
    // Predicated region
    $region41: #{netd_forward.8} parent=5 // pred_check
      %p1260 = pneg %p1259
    $region42: #{netd_forward.8} parent=5 // pred_check_branch
      %1262 = sbr.rel (%p1260) target = $region44
    $region43: #{netd_forward.8} parent=5 // pred_region
      %s1263 = ssub.s32 %s11, 2
      // Predicated region
      $region45: #{netd_forward.8} parent=43 // pred_check
        %p1264 = pneg %p108
      $region46: #{netd_forward.8} parent=43 // pred_check_branch
        %1266 = sbr.rel (%p1264) target = $region48
      $region47: #{netd_forward.8} parent=43 // pred_region
        %s1267 = smul.u32 32, %s17
        %p1268 = scmp.lt.s32.totalorder %s1267, 63
        %s1269 = scalar_select %p1268, %s1267, 63
        %s1270 = smul.addr %s1269, 4
        %s1271 = scalar_lea.vmem %s3, %s1270
      $region48: #{netd_forward.8} parent=43 // pred_fallthru
        _
      // Predicated region
      $region49: #{netd_forward.8} parent=43 // pred_check
        %p1272 = pneg %p134
      $region50: #{netd_forward.8} parent=43 // pred_check_branch
        %1274 = sbr.rel (%p1272) target = $region52
      $region51: #{netd_forward.8} parent=43 // pred_region
        %p1275 = scmp.lt.s32.totalorder %s17, 1
        %s1276 = scalar_select %p1275, %s17, 1
        %s1277 = smul.addr %s1276, 2
        %s1278 = scalar_lea.vmem %s4, %s1277
      $region52: #{netd_forward.8} parent=43 // pred_fallthru
        _
    $region44: #{netd_forward.8} parent=5 // pred_fallthru
      _
  $region6: #{netd_forward.8} parent=0 // loop_footer
    %s15 = sadd.s32 1, %s11
  $region7: #{netd_forward.8} parent=0 // loop_footer_branch
    %10 = sbr.rel target = $region3
  $region8: #{netd_forward.8} parent=0 // loop_exit
    _

// kernel: netd_forward.9
$region0: #{netd_forward.9}
  #allocation0 [shape = 'u32[]', space=smem, size = 0x4, offset = 0x4, fixed_abs, tag = 'smem constant byte address 0x4 - core index']
  #allocation1 [shape = 'u32[144,128]{1,0:T(1,128)}', space=vmem, size = 0x12000, scoped, tag = 'internal scratch']
  %s0 = inlined_call_operand.vmem [shape: bf16[512,16], index: 0, kind: input, shape index: {}]
  %s1 = inlined_call_operand.vmem [shape: f32[1,16], index: 1, kind: input, shape index: {}]
  %s2 = inlined_call_operand.vmem [shape: f32[1,16], index: 2, kind: input, shape index: {}]
  %s3 = inlined_call_operand.vmem [shape: bf16[512,16], index: 3, kind: output, shape index: {}]
  %s4 = sld [smem:[#allocation0]]
  $region45: #{netd_forward.9} parent=0
    _
  %s6 = ssub.s32 1, %s4
  %s7 = scalar_select 0, %s6, %s4
  loop: start=0, step=1, limit=4
  $region2: #{netd_forward.9} parent=0 // loop_pre_header
    _
  $region3: #{netd_forward.9} parent=0 // loop_header
    %s9 = sphi 0, %s13
    %p10 = scmp.ge.s32.totalorder %s9, 4
    %s19 = sphi 0, %s21
    %s22 = sphi 0, %s19
    %s23 = sphi 0, %s22
    %s39 = sphi 0, %s23
    %s43 = sphi 0, %s43
    %s45 = sphi 0, %s43
    %s46 = sphi 0, %s45
    %s60 = sphi 0, %s46
    %s64 = sphi 0, %s64
    %s66 = sphi 0, %s64
    %s67 = sphi 0, %s66
    %s81 = sphi 0, %s67
    %s87 = sphi 0, %s89
    %s90 = sphi 0, %s87
    %s91 = sphi 0, %s90
    %s107 = sphi 0, %s91
  $region4: #{netd_forward.9} parent=0 // loop_header_branch
    %12 = sbr.rel (%p10) target = $region8
  $region5: #{netd_forward.9} parent=0 // loop_body
    %s14 = ssub.s32 %s9, 1
    %s15 = ssub.s32 %s9, 2
    %s16 = sadd.s32 %s9, 1
    %s17 = ssub.s32 %s9, %s16
    %p18 = scmp.eq.s32.totalorder %s17, 0
    %s20 = sadd.s32 %s19, 1
    %s21 = scalar_select %p18, %s19, %s20
    %p24 = pneg %p18
    %p25 = scmp.eq.s32.totalorder %s9, 1
    %p26 = por %p24, %p25
    %p27 = scmp.ne.s32.totalorder %s19, %s22
    %p28 = scmp.eq.s32.totalorder %s9, 0
    %p29 = por %p27, %p28
    %p30 = scmp.ne.s32.totalorder %s19, %s22
    %p31 = scmp.eq.s32.totalorder %s14, 1
    %p32 = por %p30, %p31
    %p33 = scmp.ne.s32.totalorder %s22, %s23
    %p34 = scmp.eq.s32.totalorder %s14, 0
    %p35 = por %p33, %p34
    %p36 = scmp.ne.s32.totalorder %s22, %s23
    %p37 = scmp.eq.s32.totalorder %s15, 1
    %p38 = por %p36, %p37
    %p40 = scmp.ne.s32.totalorder %s23, %s39
    %p41 = scmp.eq.s32.totalorder %s15, 0
    %p42 = por %p40, %p41
    %s44 = sadd.s32 %s43, 1
    %p47 = scmp.eq.s32.totalorder %s9, 1
    %p48 = scmp.ne.s32.totalorder %s43, %s45
    %p49 = scmp.eq.s32.totalorder %s9, 0
    %p50 = por %p48, %p49
    %p51 = scmp.ne.s32.totalorder %s43, %s45
    %p52 = scmp.eq.s32.totalorder %s14, 1
    %p53 = por %p51, %p52
    %p54 = scmp.ne.s32.totalorder %s45, %s46
    %p55 = scmp.eq.s32.totalorder %s14, 0
    %p56 = por %p54, %p55
    %p57 = scmp.ne.s32.totalorder %s45, %s46
    %p58 = scmp.eq.s32.totalorder %s15, 1
    %p59 = por %p57, %p58
    %p61 = scmp.ne.s32.totalorder %s46, %s60
    %p62 = scmp.eq.s32.totalorder %s15, 0
    %p63 = por %p61, %p62
    %s65 = sadd.s32 %s64, 1
    %p68 = scmp.eq.s32.totalorder %s9, 1
    %p69 = scmp.ne.s32.totalorder %s64, %s66
    %p70 = scmp.eq.s32.totalorder %s9, 0
    %p71 = por %p69, %p70
    %p72 = scmp.ne.s32.totalorder %s64, %s66
    %p73 = scmp.eq.s32.totalorder %s14, 1
    %p74 = por %p72, %p73
    %p75 = scmp.ne.s32.totalorder %s66, %s67
    %p76 = scmp.eq.s32.totalorder %s14, 0
    %p77 = por %p75, %p76
    %p78 = scmp.ne.s32.totalorder %s66, %s67
    %p79 = scmp.eq.s32.totalorder %s15, 1
    %p80 = por %p78, %p79
    %p82 = scmp.ne.s32.totalorder %s67, %s81
    %p83 = scmp.eq.s32.totalorder %s15, 0
    %p84 = por %p82, %p83
    %s85 = ssub.s32 %s9, %s16
    %p86 = scmp.eq.s32.totalorder %s85, 0
    %s88 = sadd.s32 %s87, 1
    %s89 = scalar_select %p86, %s87, %s88
    %p92 = pneg %p86
    %p93 = scmp.eq.s32.totalorder %s9, 1
    %p94 = por %p92, %p93
    %p95 = scmp.ne.s32.totalorder %s87, %s90
    %p96 = scmp.eq.s32.totalorder %s9, 0
    %p97 = por %p95, %p96
    %p98 = scmp.ne.s32.totalorder %s87, %s90
    %p99 = scmp.eq.s32.totalorder %s14, 1
    %p100 = por %p98, %p99
    %p101 = scmp.ne.s32.totalorder %s90, %s91
    %p102 = scmp.eq.s32.totalorder %s14, 0
    %p103 = por %p101, %p102
    %p104 = scmp.ne.s32.totalorder %s90, %s91
    %p105 = scmp.eq.s32.totalorder %s15, 1
    %p106 = por %p104, %p105
    %p108 = scmp.ne.s32.totalorder %s91, %s107
    %p109 = scmp.eq.s32.totalorder %s15, 0
    %p110 = por %p108, %p109
    %p111 = scmp.le.s32.totalorder 1, %s9
    %p112 = scmp.lt.s32.totalorder %s9, 3
    %p113 = pnand %p111, %p112
    %p114 = pneg %p113
    // Predicated region
    $region9: #{netd_forward.9} parent=5 // pred_check
      _
    $region10: #{netd_forward.9} parent=5 // pred_check_branch
      %116 = sbr.rel (%p113) target = $region12
    $region11: #{netd_forward.9} parent=5 // pred_region
      %s117 = ssub.s32 %s9, 1
      // Predicated region
      $region13: #{netd_forward.9} parent=11 // pred_check
        %p118 = pneg %p56
      $region14: #{netd_forward.9} parent=11 // pred_check_branch
        %120 = sbr.rel (%p118) target = $region16
      $region15: #{netd_forward.9} parent=11 // pred_region
        _
      $region16: #{netd_forward.9} parent=11 // pred_fallthru
        _
      // Predicated region
      $region17: #{netd_forward.9} parent=11 // pred_check
        %p121 = pneg %p77
      $region18: #{netd_forward.9} parent=11 // pred_check_branch
        %123 = sbr.rel (%p121) target = $region20
      $region19: #{netd_forward.9} parent=11 // pred_region
        _
      $region20: #{netd_forward.9} parent=11 // pred_fallthru
        _
    $region12: #{netd_forward.9} parent=5 // pred_fallthru
      _
    %p124 = scmp.lt.s32.totalorder %s9, 2
    // Predicated region
    $region21: #{netd_forward.9} parent=5 // pred_check
      %p125 = pneg %p124
    $region22: #{netd_forward.9} parent=5 // pred_check_branch
      %127 = sbr.rel (%p125) target = $region24
    $region23: #{netd_forward.9} parent=5 // pred_region
      // Predicated region
      $region25: #{netd_forward.9} parent=23 // pred_check
        %p128 = pneg %p29
      $region26: #{netd_forward.9} parent=23 // pred_check_branch
        %130 = sbr.rel (%p128) target = $region28
      $region27: #{netd_forward.9} parent=23 // pred_region
        %s131 = smul.u32 32, %s9
        %p132 = scmp.lt.s32.totalorder %s131, 63
        %s133 = scalar_select %p132, %s131, 63
        %s134 = smul.addr %s133, 4
        %s135 = scalar_lea.vmem %s0, %s134
        %s136 = smul.u32 32, %s9
      $region28: #{netd_forward.9} parent=23 // pred_fallthru
        _
    $region24: #{netd_forward.9} parent=5 // pred_fallthru
      _
    %p137 = scmp.le.s32.totalorder 1, %s9
    %p138 = scmp.lt.s32.totalorder %s9, 3
    %p139 = pnand %p137, %p138
    %p140 = pneg %p139
    // Predicated region
    $region29: #{netd_forward.9} parent=5 // pred_check
      _
    $region30: #{netd_forward.9} parent=5 // pred_check_branch
      %142 = sbr.rel (%p139) target = $region32
    $region31: #{netd_forward.9} parent=5 // pred_region
      %s143 = ssub.s32 %s9, 1
      %s144 = smul.u32 32, %s14
      %p145 = scmp.lt.s32.totalorder %s144, 63
      %s146 = scalar_select %p145, %s144, 63
      %s147 = smul.addr %s146, 4
      %s148 = scalar_lea.vmem %s0, %s147
      %p149 = pneg %p35
      %p150 = pneg %p32
      %p151 = pneg %p56
      %p152 = pneg %p53
      %p153 = pneg %p77
      %p154 = pneg %p74
      %p155 = pneg %p103
      %p156 = pneg %p100
      %s157 = smul.u32 32, %s14
      %p158 = scmp.lt.s32.totalorder %s157, 63
      %s159 = scalar_select %p158, %s157, 63
      %s160 = smul.addr %s159, 4
      %s161 = scalar_lea.vmem %s3, %s160
      %s162 = smul.u32 32, %s14
      %p163 = scmp.lt.s32.totalorder %s162, 63
      %s164 = scalar_select %p163, %s162, 63
      %s165 = smul.addr %s164, 4
      %s166 = scalar_lea.vmem %s0, %s165
      %s167 = smul.u32 32, %s14
      %s168 = smul.u32 32, %s14
      %p169 = scmp.lt.s32.totalorder %s168, 63
      %s170 = scalar_select %p169, %s168, 63
      %s171 = smul.addr %s170, 4
      %s172 = scalar_lea.vmem %s3, %s171
      %s173 = smul.u32 32, %s14
      %v174 = vld [vmem:[%s166] sm:$0xf]
      %v175 = vld [vmem:[%s166 + $0x4] sm:$0xf]
      %v176 = vld [vmem:[%s166 + $0x8] sm:$0xf]
      %v177 = vld [vmem:[%s166 + $0xc] sm:$0xf]
      %v178 = vld [vmem:[%s166 + $0x10] sm:$0xf]
      %v179 = vld [vmem:[%s166 + $0x14] sm:$0xf]
      %v180 = vld [vmem:[%s166 + $0x18] sm:$0xf]
      %v181 = vld [vmem:[%s166 + $0x1c] sm:$0xf]
      %v182 = vld [vmem:[%s166 + $0x20] sm:$0xf]
      %v183 = vld [vmem:[%s166 + $0x24] sm:$0xf]
      %v184 = vld [vmem:[%s166 + $0x28] sm:$0xf]
      %v185 = vld [vmem:[%s166 + $0x2c] sm:$0xf]
      %v186 = vld [vmem:[%s166 + $0x30] sm:$0xf]
      %v187 = vld [vmem:[%s166 + $0x34] sm:$0xf]
      %v188 = vld [vmem:[%s166 + $0x38] sm:$0xf]
      %v189 = vld [vmem:[%s166 + $0x3c] sm:$0xf]
      %v190 = vld [vmem:[%s166 + $0x40] sm:$0xf]
      %v191 = vld [vmem:[%s166 + $0x44] sm:$0xf]
      %v192 = vld [vmem:[%s166 + $0x48] sm:$0xf]
      %v193 = vld [vmem:[%s166 + $0x4c] sm:$0xf]
      %v194 = vld [vmem:[%s166 + $0x50] sm:$0xf]
      %v195 = vld [vmem:[%s166 + $0x54] sm:$0xf]
      %v196 = vld [vmem:[%s166 + $0x58] sm:$0xf]
      %v197 = vld [vmem:[%s166 + $0x5c] sm:$0xf]
      %v198 = vld [vmem:[%s166 + $0x60] sm:$0xf]
      %v199 = vld [vmem:[%s166 + $0x64] sm:$0xf]
      %v200 = vld [vmem:[%s166 + $0x68] sm:$0xf]
      %v201 = vld [vmem:[%s166 + $0x6c] sm:$0xf]
      %v202 = vld [vmem:[%s166 + $0x70] sm:$0xf]
      %v203 = vld [vmem:[%s166 + $0x74] sm:$0xf]
      %v204 = vld [vmem:[%s166 + $0x78] sm:$0xf]
      %v205 = vld [vmem:[%s166 + $0x7c] sm:$0xf]
      %v206 = vunpack.c.l.bf16 %v174
      %v207 = vunpack.c.l.bf16 %v175
      %v208 = vunpack.c.l.bf16 %v176
      %v209 = vunpack.c.l.bf16 %v177
      %v210 = vunpack.c.l.bf16 %v178
      %v211 = vunpack.c.l.bf16 %v179
      %v212 = vunpack.c.l.bf16 %v180
      %v213 = vunpack.c.l.bf16 %v181
      %v214 = vunpack.c.l.bf16 %v182
      %v215 = vunpack.c.l.bf16 %v183
      %v216 = vunpack.c.l.bf16 %v184
      %v217 = vunpack.c.l.bf16 %v185
      %v218 = vunpack.c.l.bf16 %v186
      %v219 = vunpack.c.l.bf16 %v187
      %v220 = vunpack.c.l.bf16 %v188
      %v221 = vunpack.c.l.bf16 %v189
      %v222 = vunpack.c.l.bf16 %v190
      %v223 = vunpack.c.l.bf16 %v191
      %v224 = vunpack.c.l.bf16 %v192
      %v225 = vunpack.c.l.bf16 %v193
      %v226 = vunpack.c.l.bf16 %v194
      %v227 = vunpack.c.l.bf16 %v195
      %v228 = vunpack.c.l.bf16 %v196
      %v229 = vunpack.c.l.bf16 %v197
      %v230 = vunpack.c.l.bf16 %v198
      %v231 = vunpack.c.l.bf16 %v199
      %v232 = vunpack.c.l.bf16 %v200
      %v233 = vunpack.c.l.bf16 %v201
      %v234 = vunpack.c.l.bf16 %v202
      %v235 = vunpack.c.l.bf16 %v203
      %v236 = vunpack.c.l.bf16 %v204
      %v237 = vunpack.c.l.bf16 %v205
      %v238 = vld [vmem:[%s1] sm:$0x1]
      %v240 = vlaneseq
      %v241 = vshrl.u32 %v240, 7
      %v242 = vsub.s32 0, %v241
      %v243 = vrot.slane %v238, %v242
      %v245 = vmul.f32 %v206, %v243
      %v246 = vmul.f32 %v207, %v243
      %v247 = vmul.f32 %v208, %v243
      %v248 = vmul.f32 %v209, %v243
      %v249 = vmul.f32 %v210, %v243
      %v250 = vmul.f32 %v211, %v243
      %v251 = vmul.f32 %v212, %v243
      %v252 = vmul.f32 %v213, %v243
      %v253 = vmul.f32 %v214, %v243
      %v254 = vmul.f32 %v215, %v243
      %v255 = vmul.f32 %v216, %v243
      %v256 = vmul.f32 %v217, %v243
      %v257 = vmul.f32 %v218, %v243
      %v258 = vmul.f32 %v219, %v243
      %v259 = vmul.f32 %v220, %v243
      %v260 = vmul.f32 %v221, %v243
      %v261 = vmul.f32 %v222, %v243
      %v262 = vmul.f32 %v223, %v243
      %v263 = vmul.f32 %v224, %v243
      %v264 = vmul.f32 %v225, %v243
      %v265 = vmul.f32 %v226, %v243
      %v266 = vmul.f32 %v227, %v243
      %v267 = vmul.f32 %v228, %v243
      %v268 = vmul.f32 %v229, %v243
      %v269 = vmul.f32 %v230, %v243
      %v270 = vmul.f32 %v231, %v243
      %v271 = vmul.f32 %v232, %v243
      %v272 = vmul.f32 %v233, %v243
      %v273 = vmul.f32 %v234, %v243
      %v274 = vmul.f32 %v235, %v243
      %v275 = vmul.f32 %v236, %v243
      %v276 = vmul.f32 %v237, %v243
      %v277 = vld [vmem:[%s2] sm:$0x1]
      %v279 = vlaneseq
      %v280 = vshrl.u32 %v279, 7
      %v281 = vsub.s32 0, %v280
      %v282 = vrot.slane %v277, %v281
      %v284 = vadd.f32 %v245, %v282
      %v285 = vadd.f32 %v246, %v282
      %v286 = vadd.f32 %v247, %v282
      %v287 = vadd.f32 %v248, %v282
      %v288 = vadd.f32 %v249, %v282
      %v289 = vadd.f32 %v250, %v282
      %v290 = vadd.f32 %v251, %v282
      %v291 = vadd.f32 %v252, %v282
      %v292 = vadd.f32 %v253, %v282
      %v293 = vadd.f32 %v254, %v282
      %v294 = vadd.f32 %v255, %v282
      %v295 = vadd.f32 %v256, %v282
      %v296 = vadd.f32 %v257, %v282
      %v297 = vadd.f32 %v258, %v282
      %v298 = vadd.f32 %v259, %v282
      %v299 = vadd.f32 %v260, %v282
      %v300 = vadd.f32 %v261, %v282
      %v301 = vadd.f32 %v262, %v282
      %v302 = vadd.f32 %v263, %v282
      %v303 = vadd.f32 %v264, %v282
      %v304 = vadd.f32 %v265, %v282
      %v305 = vadd.f32 %v266, %v282
      %v306 = vadd.f32 %v267, %v282
      %v307 = vadd.f32 %v268, %v282
      %v308 = vadd.f32 %v269, %v282
      %v309 = vadd.f32 %v270, %v282
      %v310 = vadd.f32 %v271, %v282
      %v311 = vadd.f32 %v272, %v282
      %v312 = vadd.f32 %v273, %v282
      %v313 = vadd.f32 %v274, %v282
      %v314 = vadd.f32 %v275, %v282
      %v315 = vadd.f32 %v276, %v282
      %vm316 = vcmp.ge.f32.partialorder %v284, 0.0
      %vm317 = vcmp.ge.f32.partialorder %v285, 0.0
      %vm318 = vcmp.ge.f32.partialorder %v286, 0.0
      %vm319 = vcmp.ge.f32.partialorder %v287, 0.0
      %vm320 = vcmp.ge.f32.partialorder %v288, 0.0
      %vm321 = vcmp.ge.f32.partialorder %v289, 0.0
      %vm322 = vcmp.ge.f32.partialorder %v290, 0.0
      %vm323 = vcmp.ge.f32.partialorder %v291, 0.0
      %vm324 = vcmp.ge.f32.partialorder %v292, 0.0
      %vm325 = vcmp.ge.f32.partialorder %v293, 0.0
      %vm326 = vcmp.ge.f32.partialorder %v294, 0.0
      %vm327 = vcmp.ge.f32.partialorder %v295, 0.0
      %vm328 = vcmp.ge.f32.partialorder %v296, 0.0
      %vm329 = vcmp.ge.f32.partialorder %v297, 0.0
      %vm330 = vcmp.ge.f32.partialorder %v298, 0.0
      %vm331 = vcmp.ge.f32.partialorder %v299, 0.0
      %vm332 = vcmp.ge.f32.partialorder %v300, 0.0
      %vm333 = vcmp.ge.f32.partialorder %v301, 0.0
      %vm334 = vcmp.ge.f32.partialorder %v302, 0.0
      %vm335 = vcmp.ge.f32.partialorder %v303, 0.0
      %vm336 = vcmp.ge.f32.partialorder %v304, 0.0
      %vm337 = vcmp.ge.f32.partialorder %v305, 0.0
      %vm338 = vcmp.ge.f32.partialorder %v306, 0.0
      %vm339 = vcmp.ge.f32.partialorder %v307, 0.0
      %vm340 = vcmp.ge.f32.partialorder %v308, 0.0
      %vm341 = vcmp.ge.f32.partialorder %v309, 0.0
      %vm342 = vcmp.ge.f32.partialorder %v310, 0.0
      %vm343 = vcmp.ge.f32.partialorder %v311, 0.0
      %vm344 = vcmp.ge.f32.partialorder %v312, 0.0
      %vm345 = vcmp.ge.f32.partialorder %v313, 0.0
      %vm346 = vcmp.ge.f32.partialorder %v314, 0.0
      %vm347 = vcmp.ge.f32.partialorder %v315, 0.0
      %v348 = vmul.f32 %v284, 0.2
      %v349 = vmul.f32 %v285, 0.2
      %v350 = vmul.f32 %v286, 0.2
      %v351 = vmul.f32 %v287, 0.2
      %v352 = vmul.f32 %v288, 0.2
      %v353 = vmul.f32 %v289, 0.2
      %v354 = vmul.f32 %v290, 0.2
      %v355 = vmul.f32 %v291, 0.2
      %v356 = vmul.f32 %v292, 0.2
      %v357 = vmul.f32 %v293, 0.2
      %v358 = vmul.f32 %v294, 0.2
      %v359 = vmul.f32 %v295, 0.2
      %v360 = vmul.f32 %v296, 0.2
      %v361 = vmul.f32 %v297, 0.2
      %v362 = vmul.f32 %v298, 0.2
      %v363 = vmul.f32 %v299, 0.2
      %v364 = vmul.f32 %v300, 0.2
      %v365 = vmul.f32 %v301, 0.2
      %v366 = vmul.f32 %v302, 0.2
      %v367 = vmul.f32 %v303, 0.2
      %v368 = vmul.f32 %v304, 0.2
      %v369 = vmul.f32 %v305, 0.2
      %v370 = vmul.f32 %v306, 0.2
      %v371 = vmul.f32 %v307, 0.2
      %v372 = vmul.f32 %v308, 0.2
      %v373 = vmul.f32 %v309, 0.2
      %v374 = vmul.f32 %v310, 0.2
      %v375 = vmul.f32 %v311, 0.2
      %v376 = vmul.f32 %v312, 0.2
      %v377 = vmul.f32 %v313, 0.2
      %v378 = vmul.f32 %v314, 0.2
      %v379 = vmul.f32 %v315, 0.2
      %v380 = vsel %vm316, %v284, %v348
      %v381 = vsel %vm317, %v285, %v349
      %v382 = vsel %vm318, %v286, %v350
      %v383 = vsel %vm319, %v287, %v351
      %v384 = vsel %vm320, %v288, %v352
      %v385 = vsel %vm321, %v289, %v353
      %v386 = vsel %vm322, %v290, %v354
      %v387 = vsel %vm323, %v291, %v355
      %v388 = vsel %vm324, %v292, %v356
      %v389 = vsel %vm325, %v293, %v357
      %v390 = vsel %vm326, %v294, %v358
      %v391 = vsel %vm327, %v295, %v359
      %v392 = vsel %vm328, %v296, %v360
      %v393 = vsel %vm329, %v297, %v361
      %v394 = vsel %vm330, %v298, %v362
      %v395 = vsel %vm331, %v299, %v363
      %v396 = vsel %vm332, %v300, %v364
      %v397 = vsel %vm333, %v301, %v365
      %v398 = vsel %vm334, %v302, %v366
      %v399 = vsel %vm335, %v303, %v367
      %v400 = vsel %vm336, %v304, %v368
      %v401 = vsel %vm337, %v305, %v369
      %v402 = vsel %vm338, %v306, %v370
      %v403 = vsel %vm339, %v307, %v371
      %v404 = vsel %vm340, %v308, %v372
      %v405 = vsel %vm341, %v309, %v373
      %v406 = vsel %vm342, %v310, %v374
      %v407 = vsel %vm343, %v311, %v375
      %v408 = vsel %vm344, %v312, %v376
      %v409 = vsel %vm345, %v313, %v377
      %v410 = vsel %vm346, %v314, %v378
      %v411 = vsel %vm347, %v315, %v379
      %v412 = vpack.c.bf16 %v381, %v380
      %v413 = vpack.c.bf16 %v383, %v382
      %v414 = vpack.c.bf16 %v385, %v384
      %v415 = vpack.c.bf16 %v387, %v386
      %v416 = vpack.c.bf16 %v389, %v388
      %v417 = vpack.c.bf16 %v391, %v390
      %v418 = vpack.c.bf16 %v393, %v392
      %v419 = vpack.c.bf16 %v395, %v394
      %v420 = vpack.c.bf16 %v397, %v396
      %v421 = vpack.c.bf16 %v399, %v398
      %v422 = vpack.c.bf16 %v401, %v400
      %v423 = vpack.c.bf16 %v403, %v402
      %v424 = vpack.c.bf16 %v405, %v404
      %v425 = vpack.c.bf16 %v407, %v406
      %v426 = vpack.c.bf16 %v409, %v408
      %v427 = vpack.c.bf16 %v411, %v410
      %v444 = vunpack.c.l.b16 %v412
      %v445 = vunpack.c.h.b16 %v412
      %v446 = vunpack.c.l.b16 %v413
      %v447 = vunpack.c.h.b16 %v413
      %v448 = vunpack.c.l.b16 %v414
      %v449 = vunpack.c.h.b16 %v414
      %v450 = vunpack.c.l.b16 %v415
      %v451 = vunpack.c.h.b16 %v415
      %v452 = vunpack.c.l.b16 %v416
      %v453 = vunpack.c.h.b16 %v416
      %v454 = vunpack.c.l.b16 %v417
      %v455 = vunpack.c.h.b16 %v417
      %v456 = vunpack.c.l.b16 %v418
      %v457 = vunpack.c.h.b16 %v418
      %v458 = vunpack.c.l.b16 %v419
      %v459 = vunpack.c.h.b16 %v419
      %v460 = vunpack.c.l.b16 %v420
      %v461 = vunpack.c.h.b16 %v420
      %v462 = vunpack.c.l.b16 %v421
      %v463 = vunpack.c.h.b16 %v421
      %v464 = vunpack.c.l.b16 %v422
      %v465 = vunpack.c.h.b16 %v422
      %v466 = vunpack.c.l.b16 %v423
      %v467 = vunpack.c.h.b16 %v423
      %v468 = vunpack.c.l.b16 %v424
      %v469 = vunpack.c.h.b16 %v424
      %v470 = vunpack.c.l.b16 %v425
      %v471 = vunpack.c.h.b16 %v425
      %v472 = vunpack.c.l.b16 %v426
      %v473 = vunpack.c.h.b16 %v426
      %v474 = vunpack.c.l.b16 %v427
      %v475 = vunpack.c.h.b16 %v427
      %v476 = vpack.c.b16 %v444, %v444
      %v477 = vpack.c.b16 %v445, %v445
      %v478 = vpack.c.b16 %v446, %v446
      %v479 = vpack.c.b16 %v447, %v447
      %v480 = vpack.c.b16 %v448, %v448
      %v481 = vpack.c.b16 %v449, %v449
      %v482 = vpack.c.b16 %v450, %v450
      %v483 = vpack.c.b16 %v451, %v451
      %v484 = vpack.c.b16 %v452, %v452
      %v485 = vpack.c.b16 %v453, %v453
      %v486 = vpack.c.b16 %v454, %v454
      %v487 = vpack.c.b16 %v455, %v455
      %v488 = vpack.c.b16 %v456, %v456
      %v489 = vpack.c.b16 %v457, %v457
      %v490 = vpack.c.b16 %v458, %v458
      %v491 = vpack.c.b16 %v459, %v459
      %v492 = vpack.c.b16 %v460, %v460
      %v493 = vpack.c.b16 %v461, %v461
      %v494 = vpack.c.b16 %v462, %v462
      %v495 = vpack.c.b16 %v463, %v463
      %v496 = vpack.c.b16 %v464, %v464
      %v497 = vpack.c.b16 %v465, %v465
      %v498 = vpack.c.b16 %v466, %v466
      %v499 = vpack.c.b16 %v467, %v467
      %v500 = vpack.c.b16 %v468, %v468
      %v501 = vpack.c.b16 %v469, %v469
      %v502 = vpack.c.b16 %v470, %v470
      %v503 = vpack.c.b16 %v471, %v471
      %v504 = vpack.c.b16 %v472, %v472
      %v505 = vpack.c.b16 %v473, %v473
      %v506 = vpack.c.b16 %v474, %v474
      %v507 = vpack.c.b16 %v475, %v475
      %vm540 = vcmask 125952
      %541 = vst.msk [vmem:[%s172] sm:$0xf] %vm540, %v476
      %542 = vst.msk [vmem:[%s172 + $0x4] sm:$0xf] %vm540, %v477
      %543 = vst.msk [vmem:[%s172 + $0x8] sm:$0xf] %vm540, %v478
      %544 = vst.msk [vmem:[%s172 + $0xc] sm:$0xf] %vm540, %v479
      %545 = vst.msk [vmem:[%s172 + $0x10] sm:$0xf] %vm540, %v480
      %546 = vst.msk [vmem:[%s172 + $0x14] sm:$0xf] %vm540, %v481
      %547 = vst.msk [vmem:[%s172 + $0x18] sm:$0xf] %vm540, %v482
      %548 = vst.msk [vmem:[%s172 + $0x1c] sm:$0xf] %vm540, %v483
      %549 = vst.msk [vmem:[%s172 + $0x20] sm:$0xf] %vm540, %v484
      %550 = vst.msk [vmem:[%s172 + $0x24] sm:$0xf] %vm540, %v485
      %551 = vst.msk [vmem:[%s172 + $0x28] sm:$0xf] %vm540, %v486
      %552 = vst.msk [vmem:[%s172 + $0x2c] sm:$0xf] %vm540, %v487
      %553 = vst.msk [vmem:[%s172 + $0x30] sm:$0xf] %vm540, %v488
      %554 = vst.msk [vmem:[%s172 + $0x34] sm:$0xf] %vm540, %v489
      %555 = vst.msk [vmem:[%s172 + $0x38] sm:$0xf] %vm540, %v490
      %556 = vst.msk [vmem:[%s172 + $0x3c] sm:$0xf] %vm540, %v491
      %557 = vst.msk [vmem:[%s172 + $0x40] sm:$0xf] %vm540, %v492
      %558 = vst.msk [vmem:[%s172 + $0x44] sm:$0xf] %vm540, %v493
      %559 = vst.msk [vmem:[%s172 + $0x48] sm:$0xf] %vm540, %v494
      %560 = vst.msk [vmem:[%s172 + $0x4c] sm:$0xf] %vm540, %v495
      %561 = vst.msk [vmem:[%s172 + $0x50] sm:$0xf] %vm540, %v496
      %562 = vst.msk [vmem:[%s172 + $0x54] sm:$0xf] %vm540, %v497
      %563 = vst.msk [vmem:[%s172 + $0x58] sm:$0xf] %vm540, %v498
      %564 = vst.msk [vmem:[%s172 + $0x5c] sm:$0xf] %vm540, %v499
      %565 = vst.msk [vmem:[%s172 + $0x60] sm:$0xf] %vm540, %v500
      %566 = vst.msk [vmem:[%s172 + $0x64] sm:$0xf] %vm540, %v501
      %567 = vst.msk [vmem:[%s172 + $0x68] sm:$0xf] %vm540, %v502
      %568 = vst.msk [vmem:[%s172 + $0x6c] sm:$0xf] %vm540, %v503
      %569 = vst.msk [vmem:[%s172 + $0x70] sm:$0xf] %vm540, %v504
      %570 = vst.msk [vmem:[%s172 + $0x74] sm:$0xf] %vm540, %v505
      %571 = vst.msk [vmem:[%s172 + $0x78] sm:$0xf] %vm540, %v506
      %572 = vst.msk [vmem:[%s172 + $0x7c] sm:$0xf] %vm540, %v507
      %s573 = smul.u32 32, %s14
      %p574 = scmp.lt.s32.totalorder %s573, 63
      %s575 = scalar_select %p574, %s573, 63
      %s576 = smul.addr %s575, 4
      %s577 = scalar_lea.vmem %s3, %s576
      // Predicated region
      $region33: #{netd_forward.9} parent=31 // pred_check
        %p578 = pneg %p100
      $region34: #{netd_forward.9} parent=31 // pred_check_branch
        %580 = sbr.rel (%p578) target = $region36
      $region35: #{netd_forward.9} parent=31 // pred_region
        %s581 = smul.u32 32, %s14
      $region36: #{netd_forward.9} parent=31 // pred_fallthru
        _
    $region32: #{netd_forward.9} parent=5 // pred_fallthru
      _
    %p582 = scmp.le.s32.totalorder 2, %s9
    // Predicated region
    $region37: #{netd_forward.9} parent=5 // pred_check
      %p583 = pneg %p582
    $region38: #{netd_forward.9} parent=5 // pred_check_branch
      %585 = sbr.rel (%p583) target = $region40
    $region39: #{netd_forward.9} parent=5 // pred_region
      %s586 = ssub.s32 %s9, 2
      // Predicated region
      $region41: #{netd_forward.9} parent=39 // pred_check
        %p587 = pneg %p106
      $region42: #{netd_forward.9} parent=39 // pred_check_branch
        %589 = sbr.rel (%p587) target = $region44
      $region43: #{netd_forward.9} parent=39 // pred_region
        %s590 = smul.u32 32, %s15
        %p591 = scmp.lt.s32.totalorder %s590, 63
        %s592 = scalar_select %p591, %s590, 63
        %s593 = smul.addr %s592, 4
        %s594 = scalar_lea.vmem %s3, %s593
      $region44: #{netd_forward.9} parent=39 // pred_fallthru
        _
    $region40: #{netd_forward.9} parent=5 // pred_fallthru
      _
  $region6: #{netd_forward.9} parent=0 // loop_footer
    %s13 = sadd.s32 1, %s9
  $region7: #{netd_forward.9} parent=0 // loop_footer_branch
    %8 = sbr.rel target = $region3
  $region8: #{netd_forward.9} parent=0 // loop_exit
    _

// kernel: netd_forward.10
$region0: #{netd_forward.10}
  #allocation0 [shape = 'u32[]', space=smem, size = 0x4, offset = 0x4, fixed_abs, tag = 'smem constant byte address 0x4 - core index']
  #allocation1 [shape = 'u32[144,128]{1,0:T(1,128)}', space=vmem, size = 0x12000, scoped, tag = 'internal scratch']
  %s0 = inlined_call_operand.vmem [shape: bf16[128,400], index: 0, kind: input, shape index: {}]
  %s1 = inlined_call_operand.vmem [shape: bf16[400,32], index: 1, kind: input, shape index: {}]
  %s2 = inlined_call_operand.vmem [shape: f32[1,32], index: 2, kind: input, shape index: {}]
  %s3 = inlined_call_operand.vmem [shape: bf16[128,32], index: 3, kind: output, shape index: {0}]
  %s4 = inlined_call_operand.vmem [shape: f32[1,2,32], index: 4, kind: output, shape index: {1}]
  %5 = xla_tuple %s3, %s4
  %s6 = sld [smem:[#allocation0]]
  $region30: #{netd_forward.10} parent=0
    _
  %s8 = ssub.s32 1, %s6
  %s9 = scalar_select 0, %s8, %s6
  // Predicated region
  $region2: #{netd_forward.10} parent=0 // pred_check
    _
  $region3: #{netd_forward.10} parent=0 // pred_check_branch
    %11 = sbr.rel (0) target = $region5
  $region4: #{netd_forward.10} parent=0 // pred_region
    _
  $region5: #{netd_forward.10} parent=0 // pred_fallthru
    _
  // Predicated region
  $region6: #{netd_forward.10} parent=0 // pred_check
    _
  $region7: #{netd_forward.10} parent=0 // pred_check_branch
    %13 = sbr.rel (0) target = $region9
  $region8: #{netd_forward.10} parent=0 // pred_region
    _
  $region9: #{netd_forward.10} parent=0 // pred_fallthru
    _
  // Predicated region
  $region10: #{netd_forward.10} parent=0 // pred_check
    _
  $region11: #{netd_forward.10} parent=0 // pred_check_branch
    %15 = sbr.rel (0) target = $region13
  $region12: #{netd_forward.10} parent=0 // pred_region
    _
  $region13: #{netd_forward.10} parent=0 // pred_fallthru
    _
  %v17 = vld [vmem:[%s0] sm:$0xff]
  %v18 = vld [vmem:[%s0 + $0x8] sm:$0xff]
  %v19 = vld [vmem:[%s0 + $0x10] sm:$0xff]
  %v20 = vld [vmem:[%s0 + $0x18] sm:$0xff]
  %v21 = vld [vmem:[%s0 + $0x20] sm:$0xff]
  %v22 = vld [vmem:[%s0 + $0x28] sm:$0xff]
  %v23 = vld [vmem:[%s0 + $0x30] sm:$0xff]
  %v24 = vld [vmem:[%s0 + $0x38] sm:$0xff]
  %v25 = vld [vmem:[%s0 + $0x40] sm:$0xff]
  %v26 = vld [vmem:[%s0 + $0x48] sm:$0xff]
  %v27 = vld [vmem:[%s0 + $0x50] sm:$0xff]
  %v28 = vld [vmem:[%s0 + $0x58] sm:$0xff]
  %v29 = vld [vmem:[%s0 + $0x60] sm:$0xff]
  %v30 = vld [vmem:[%s0 + $0x68] sm:$0xff]
  %v31 = vld [vmem:[%s0 + $0x70] sm:$0xff]
  %v32 = vld [vmem:[%s0 + $0x78] sm:$0xff]
  %v33 = vld [vmem:[%s0 + $0x80] sm:$0xff]
  %v34 = vld [vmem:[%s0 + $0x88] sm:$0xff]
  %v35 = vld [vmem:[%s0 + $0x90] sm:$0xff]
  %v36 = vld [vmem:[%s0 + $0x98] sm:$0xff]
  %v37 = vld [vmem:[%s0 + $0xa0] sm:$0xff]
  %v38 = vld [vmem:[%s0 + $0xa8] sm:$0xff]
  %v39 = vld [vmem:[%s0 + $0xb0] sm:$0xff]
  %v40 = vld [vmem:[%s0 + $0xb8] sm:$0xff]
  %v41 = vld [vmem:[%s0 + $0xc0] sm:$0xff]
  %v42 = vld [vmem:[%s0 + $0xc8] sm:$0xff]
  %v43 = vld [vmem:[%s0 + $0xd0] sm:$0xff]
  %v44 = vld [vmem:[%s0 + $0xd8] sm:$0xff]
  %v45 = vld [vmem:[%s0 + $0xe0] sm:$0xff]
  %v46 = vld [vmem:[%s0 + $0xe8] sm:$0xff]
  %v47 = vld [vmem:[%s0 + $0xf0] sm:$0xff]
  %v48 = vld [vmem:[%s0 + $0xf8] sm:$0xff]
  %v49 = vld [vmem:[%s1] sm:$0xf]
  %v50 = vld [vmem:[%s1 + $0x4] sm:$0xf]
  %v51 = vld [vmem:[%s1 + $0x8] sm:$0xf]
  %v52 = vld [vmem:[%s1 + $0xc] sm:$0xf]
  %v53 = vld [vmem:[%s1 + $0x10] sm:$0xf]
  %v54 = vld [vmem:[%s1 + $0x14] sm:$0xf]
  %v55 = vld [vmem:[%s1 + $0x18] sm:$0xf]
  %v56 = vld [vmem:[%s1 + $0x1c] sm:$0xf]
  %v57 = vld [vmem:[%s1 + $0x20] sm:$0xf]
  %v58 = vld [vmem:[%s1 + $0x24] sm:$0xf]
  %v59 = vld [vmem:[%s1 + $0x28] sm:$0xf]
  %v60 = vld [vmem:[%s1 + $0x2c] sm:$0xf]
  %v61 = vld [vmem:[%s1 + $0x30] sm:$0xf]
  %v62 = vld [vmem:[%s1 + $0x34] sm:$0xf]
  %v63 = vld [vmem:[%s1 + $0x38] sm:$0xf]
  %v64 = vld [vmem:[%s1 + $0x3c] sm:$0xf]
  %v65 = vld [vmem:[%s1 + $0x40] sm:$0xf]
  %v66 = vld [vmem:[%s1 + $0x44] sm:$0xf]
  %v67 = vld [vmem:[%s1 + $0x48] sm:$0xf]
  %v68 = vld [vmem:[%s1 + $0x4c] sm:$0xf]
  %v69 = vld [vmem:[%s1 + $0x50] sm:$0xf]
  %v70 = vld [vmem:[%s1 + $0x54] sm:$0xf]
  %v71 = vld [vmem:[%s1 + $0x58] sm:$0xf]
  %v72 = vld [vmem:[%s1 + $0x5c] sm:$0xf]
  %v73 = vld [vmem:[%s1 + $0x60] sm:$0xf]
  %v74 = vld [vmem:[%s1 + $0x64] sm:$0xf]
  %v75 = vld [vmem:[%s1 + $0x68] sm:$0xf]
  %v76 = vld [vmem:[%s1 + $0x6c] sm:$0xf]
  %v77 = vld [vmem:[%s1 + $0x70] sm:$0xf]
  %v78 = vld [vmem:[%s1 + $0x74] sm:$0xf]
  %v79 = vld [vmem:[%s1 + $0x78] sm:$0xf]
  %v80 = vld [vmem:[%s1 + $0x7c] sm:$0xf]
  %v81 = vld [vmem:[%s1 + $0x80] sm:$0xf]
  %v82 = vld [vmem:[%s1 + $0x84] sm:$0xf]
  %v83 = vld [vmem:[%s1 + $0x88] sm:$0xf]
  %v84 = vld [vmem:[%s1 + $0x8c] sm:$0xf]
  %v85 = vld [vmem:[%s1 + $0x90] sm:$0xf]
  %v86 = vld [vmem:[%s1 + $0x94] sm:$0xf]
  %v87 = vld [vmem:[%s1 + $0x98] sm:$0xf]
  %v88 = vld [vmem:[%s1 + $0x9c] sm:$0xf]
  %v89 = vld [vmem:[%s1 + $0xa0] sm:$0xf]
  %v90 = vld [vmem:[%s1 + $0xa4] sm:$0xf]
  %v91 = vld [vmem:[%s1 + $0xa8] sm:$0xf]
  %v92 = vld [vmem:[%s1 + $0xac] sm:$0xf]
  %v93 = vld [vmem:[%s1 + $0xb0] sm:$0xf]
  %v94 = vld [vmem:[%s1 + $0xb4] sm:$0xf]
  %v95 = vld [vmem:[%s1 + $0xb8] sm:$0xf]
  %v96 = vld [vmem:[%s1 + $0xbc] sm:$0xf]
  %v97 = vld [vmem:[%s1 + $0xc0] sm:$0xf]
  %v98 = vld [vmem:[%s1 + $0xc4] sm:$0xf]
  %v99 = vld [vmem:[%s2] sm:$0x1]
  %v101 = vlaneseq
  %v102 = vshrl.u32 %v101, 7
  %v103 = vsub.s32 0, %v102
  %v104 = vrot.slane %v99, %v103
  %v138 = vunpack.c.l.b16 %v17
  %v139 = vunpack.c.h.b16 %v17
  %v140 = vunpack.c.l.b16 %v18
  %v141 = vunpack.c.h.b16 %v18
  %v142 = vunpack.c.l.b16 %v19
  %v143 = vunpack.c.h.b16 %v19
  %v144 = vunpack.c.l.b16 %v20
  %v145 = vunpack.c.h.b16 %v20
  %v146 = vunpack.c.l.b16 %v21
  %v147 = vunpack.c.h.b16 %v21
  %v148 = vunpack.c.l.b16 %v22
  %v149 = vunpack.c.h.b16 %v22
  %v150 = vunpack.c.l.b16 %v23
  %v151 = vunpack.c.h.b16 %v23
  %v152 = vunpack.c.l.b16 %v24
  %v153 = vunpack.c.h.b16 %v24
  %v154 = vunpack.c.l.b16 %v25
  %v155 = vunpack.c.h.b16 %v25
  %v156 = vunpack.c.l.b16 %v26
  %v157 = vunpack.c.h.b16 %v26
  %v158 = vunpack.c.l.b16 %v27
  %v159 = vunpack.c.h.b16 %v27
  %v160 = vunpack.c.l.b16 %v28
  %v161 = vunpack.c.h.b16 %v28
  %v162 = vunpack.c.l.b16 %v29
  %v163 = vunpack.c.h.b16 %v29
  %v164 = vunpack.c.l.b16 %v30
  %v165 = vunpack.c.h.b16 %v30
  %v166 = vunpack.c.l.b16 %v31
  %v167 = vunpack.c.h.b16 %v31
  %v168 = vunpack.c.l.b16 %v32
  %v169 = vunpack.c.h.b16 %v32
  %v170 = vunpack.c.l.b16 %v33
  %v171 = vunpack.c.h.b16 %v33
  %v172 = vunpack.c.l.b16 %v34
  %v173 = vunpack.c.h.b16 %v34
  %v174 = vunpack.c.l.b16 %v35
  %v175 = vunpack.c.h.b16 %v35
  %v176 = vunpack.c.l.b16 %v36
  %v177 = vunpack.c.h.b16 %v36
  %v178 = vunpack.c.l.b16 %v37
  %v179 = vunpack.c.h.b16 %v37
  %v180 = vunpack.c.l.b16 %v38
  %v181 = vunpack.c.h.b16 %v38
  %v182 = vunpack.c.l.b16 %v39
  %v183 = vunpack.c.h.b16 %v39
  %v184 = vunpack.c.l.b16 %v40
  %v185 = vunpack.c.h.b16 %v40
  %v186 = vunpack.c.l.b16 %v41
  %v187 = vunpack.c.h.b16 %v41
  %v188 = vunpack.c.l.b16 %v42
  %v189 = vunpack.c.h.b16 %v42
  %v190 = vunpack.c.l.b16 %v43
  %v191 = vunpack.c.h.b16 %v43
  %v192 = vunpack.c.l.b16 %v44
  %v193 = vunpack.c.h.b16 %v44
  %v194 = vunpack.c.l.b16 %v45
  %v195 = vunpack.c.h.b16 %v45
  %v196 = vunpack.c.l.b16 %v46
  %v197 = vunpack.c.h.b16 %v46
  %v198 = vunpack.c.l.b16 %v47
  %v199 = vunpack.c.h.b16 %v47
  %v200 = vunpack.c.l.b16 %v48
  %v201 = vunpack.c.h.b16 %v48
  %v202 = vpack.c.b16 %v142, %v138
  %v203 = vpack.c.b16 %v143, %v139
  %v204 = vpack.c.b16 %v144, %v140
  %v205 = vpack.c.b16 %v145, %v141
  %v206 = vpack.c.b16 %v150, %v146
  %v207 = vpack.c.b16 %v151, %v147
  %v208 = vpack.c.b16 %v152, %v148
  %v209 = vpack.c.b16 %v153, %v149
  %v210 = vpack.c.b16 %v158, %v154
  %v211 = vpack.c.b16 %v159, %v155
  %v212 = vpack.c.b16 %v160, %v156
  %v213 = vpack.c.b16 %v161, %v157
  %v214 = vpack.c.b16 %v166, %v162
  %v215 = vpack.c.b16 %v167, %v163
  %v216 = vpack.c.b16 %v168, %v164
  %v217 = vpack.c.b16 %v169, %v165
  %v218 = vpack.c.b16 %v174, %v170
  %v219 = vpack.c.b16 %v175, %v171
  %v220 = vpack.c.b16 %v176, %v172
  %v221 = vpack.c.b16 %v177, %v173
  %v222 = vpack.c.b16 %v182, %v178
  %v223 = vpack.c.b16 %v183, %v179
  %v224 = vpack.c.b16 %v184, %v180
  %v225 = vpack.c.b16 %v185, %v181
  %v226 = vpack.c.b16 %v190, %v186
  %v227 = vpack.c.b16 %v191, %v187
  %v228 = vpack.c.b16 %v192, %v188
  %v229 = vpack.c.b16 %v193, %v189
  %v230 = vpack.c.b16 %v198, %v194
  %v231 = vpack.c.b16 %v199, %v195
  %v232 = vpack.c.b16 %v200, %v196
  %v233 = vpack.c.b16 %v201, %v197
  %v308 = vunpack.c.l.b16 %v49
  %v309 = vunpack.c.l.b16 %v50
  %v310 = vunpack.c.l.b16 %v51
  %v311 = vunpack.c.l.b16 %v52
  %v312 = vunpack.c.l.b16 %v53
  %v313 = vunpack.c.l.b16 %v54
  %v314 = vunpack.c.l.b16 %v55
  %v315 = vunpack.c.l.b16 %v56
  %v316 = vunpack.c.l.b16 %v57
  %v317 = vunpack.c.l.b16 %v58
  %v318 = vunpack.c.l.b16 %v59
  %v319 = vunpack.c.l.b16 %v60
  %v320 = vunpack.c.l.b16 %v61
  %v321 = vunpack.c.l.b16 %v62
  %v322 = vunpack.c.l.b16 %v63
  %v323 = vunpack.c.l.b16 %v64
  %v324 = vunpack.c.l.b16 %v65
  %v325 = vunpack.c.l.b16 %v66
  %v326 = vunpack.c.l.b16 %v67
  %v327 = vunpack.c.l.b16 %v68
  %v328 = vunpack.c.l.b16 %v69
  %v329 = vunpack.c.l.b16 %v70
  %v330 = vunpack.c.l.b16 %v71
  %v331 = vunpack.c.l.b16 %v72
  %v332 = vunpack.c.l.b16 %v73
  %v333 = vunpack.c.l.b16 %v74
  %v334 = vunpack.c.l.b16 %v75
  %v335 = vunpack.c.l.b16 %v76
  %v336 = vunpack.c.l.b16 %v77
  %v337 = vunpack.c.l.b16 %v78
  %v338 = vunpack.c.l.b16 %v79
  %v339 = vunpack.c.l.b16 %v80
  %v340 = vunpack.c.l.b16 %v81
  %v341 = vunpack.c.l.b16 %v82
  %v342 = vunpack.c.l.b16 %v83
  %v343 = vunpack.c.l.b16 %v84
  %v344 = vunpack.c.l.b16 %v85
  %v345 = vunpack.c.l.b16 %v86
  %v346 = vunpack.c.l.b16 %v87
  %v347 = vunpack.c.l.b16 %v88
  %v348 = vunpack.c.l.b16 %v89
  %v349 = vunpack.c.l.b16 %v90
  %v350 = vunpack.c.l.b16 %v91
  %v351 = vunpack.c.l.b16 %v92
  %v352 = vunpack.c.l.b16 %v93
  %v353 = vunpack.c.l.b16 %v94
  %v354 = vunpack.c.l.b16 %v95
  %v355 = vunpack.c.l.b16 %v96
  %v356 = vunpack.c.l.b16 %v97
  %v357 = vunpack.c.l.b16 %v98
  %v358 = vpack.c.b16 %v309, %v308
  %v359 = vpack.c.b16 %v311, %v310
  %v360 = vpack.c.b16 %v313, %v312
  %v361 = vpack.c.b16 %v315, %v314
  %v362 = vpack.c.b16 %v317, %v316
  %v363 = vpack.c.b16 %v319, %v318
  %v364 = vpack.c.b16 %v321, %v320
  %v365 = vpack.c.b16 %v323, %v322
  %v366 = vpack.c.b16 %v325, %v324
  %v367 = vpack.c.b16 %v327, %v326
  %v368 = vpack.c.b16 %v329, %v328
  %v369 = vpack.c.b16 %v331, %v330
  %v370 = vpack.c.b16 %v333, %v332
  %v371 = vpack.c.b16 %v335, %v334
  %v372 = vpack.c.b16 %v337, %v336
  %v373 = vpack.c.b16 %v339, %v338
  %v374 = vpack.c.b16 %v341, %v340
  %v375 = vpack.c.b16 %v343, %v342
  %v376 = vpack.c.b16 %v345, %v344
  %v377 = vpack.c.b16 %v347, %v346
  %v378 = vpack.c.b16 %v349, %v348
  %v379 = vpack.c.b16 %v351, %v350
  %v380 = vpack.c.b16 %v353, %v352
  %v381 = vpack.c.b16 %v355, %v354
  %v382 = vpack.c.b16 %v357, %v356
  %vm408 = vcmask 130048
  %v410 = vsel %vm408, %v205, 0
  %v413 = vsel %vm408, %v209, 0
  %v416 = vsel %vm408, %v213, 0
  %v419 = vsel %vm408, %v217, 0
  %v422 = vsel %vm408, %v221, 0
  %v425 = vsel %vm408, %v225, 0
  %v428 = vsel %vm408, %v229, 0
  %v431 = vsel %vm408, %v233, 0
  %433 = vmatprep.subr.bf16.mxu0 0
  %434 = vmatpush1.bf16.msra.mxu0 %v358
  %435 = vmatprep.subr.bf16.mxu0 0
  %436 = vmatpush1.bf16.msra.mxu0 %v359
  %437 = vmatprep.subr.bf16.mxu0 0
  %438 = vmatpush1.bf16.msra.mxu0 %v360
  %439 = vmatprep.subr.bf16.mxu0 0
  %440 = vmatpush1.bf16.msra.mxu0 %v361
  %441 = vmatprep.subr.bf16.mxu0 0
  %442 = vmatpush1.bf16.msra.mxu0 %v362
  %443 = vmatprep.subr.bf16.mxu0 0
  %444 = vmatpush1.bf16.msra.mxu0 %v363
  %445 = vmatprep.subr.bf16.mxu0 0
  %446 = vmatpush1.bf16.msra.mxu0 %v364
  %447 = vmatprep.subr.bf16.mxu0 0
  %448 = vmatpush1.bf16.msra.mxu0 %v365
  %449 = vmatprep.subr.bf16.mxu0 0
  %450 = vmatpush1.bf16.msra.mxu0 %v366
  %451 = vmatprep.subr.bf16.mxu0 0
  %452 = vmatpush1.bf16.msra.mxu0 %v367
  %453 = vmatprep.subr.bf16.mxu0 0
  %454 = vmatpush1.bf16.msra.mxu0 %v368
  %455 = vmatprep.subr.bf16.mxu0 0
  %456 = vmatpush1.bf16.msra.mxu0 %v369
  %457 = vmatprep.subr.bf16.mxu0 0
  %458 = vmatpush1.bf16.msra.mxu0 %v370
  %459 = vmatprep.subr.bf16.mxu0 0
  %460 = vmatpush1.bf16.msra.mxu0 %v371
  %461 = vmatprep.subr.bf16.mxu0 0
  %462 = vmatpush1.bf16.msra.mxu0 %v372
  %463 = vmatprep.subr.bf16.mxu0 0
  %464 = vmatpush1.bf16.msra.mxu0 %v373
  %465 = vmatprep.mubr.bf16.mxu0 %v203
  %466 = vmatmul.mubr.bf16.gmra.mrb[0].mxu0 %v202
  %v467 = vpop.f32.mrb[0].mxu0
  %v468 = vadd.f32 %v104, %v467
  %v469 = vpop.f32.mrb[0].mxu0
  %v470 = vpop.f32.mrb[0].mxu0
  %v471 = vadd.f32 %v104, %v470
  %v472 = vpop.f32.mrb[0].mxu0
  %473 = vmatprep.mubr.bf16.mxu0 %v207
  %474 = vmatmul.mubr.bf16.gmra.mrb[0].mxu0 %v206
  %v475 = vpop.f32.mrb[0].mxu0
  %v476 = vadd.f32 %v104, %v475
  %v477 = vpop.f32.mrb[0].mxu0
  %v478 = vpop.f32.mrb[0].mxu0
  %v479 = vadd.f32 %v104, %v478
  %v480 = vpop.f32.mrb[0].mxu0
  %481 = vmatprep.mubr.bf16.mxu0 %v211
  %482 = vmatmul.mubr.bf16.gmra.mrb[0].mxu0 %v210
  %v483 = vpop.f32.mrb[0].mxu0
  %v484 = vadd.f32 %v104, %v483
  %v485 = vpop.f32.mrb[0].mxu0
  %v486 = vpop.f32.mrb[0].mxu0
  %v487 = vadd.f32 %v104, %v486
  %v488 = vpop.f32.mrb[0].mxu0
  %489 = vmatprep.mubr.bf16.mxu0 %v215
  %490 = vmatmul.mubr.bf16.gmra.mrb[0].mxu0 %v214
  %v491 = vpop.f32.mrb[0].mxu0
  %v492 = vadd.f32 %v104, %v491
  %v493 = vpop.f32.mrb[0].mxu0
  %v494 = vpop.f32.mrb[0].mxu0
  %v495 = vadd.f32 %v104, %v494
  %v496 = vpop.f32.mrb[0].mxu0
  %497 = vmatprep.mubr.bf16.mxu0 %v219
  %498 = vmatmul.mubr.bf16.gmra.mrb[0].mxu0 %v218
  %v499 = vpop.f32.mrb[0].mxu0
  %v500 = vadd.f32 %v104, %v499
  %v501 = vpop.f32.mrb[0].mxu0
  %v502 = vpop.f32.mrb[0].mxu0
  %v503 = vadd.f32 %v104, %v502
  %v504 = vpop.f32.mrb[0].mxu0
  %505 = vmatprep.mubr.bf16.mxu0 %v223
  %506 = vmatmul.mubr.bf16.gmra.mrb[0].mxu0 %v222
  %v507 = vpop.f32.mrb[0].mxu0
  %v508 = vadd.f32 %v104, %v507
  %v509 = vpop.f32.mrb[0].mxu0
  %v510 = vpop.f32.mrb[0].mxu0
  %v511 = vadd.f32 %v104, %v510
  %v512 = vpop.f32.mrb[0].mxu0
  %513 = vmatprep.mubr.bf16.mxu0 %v227
  %514 = vmatmul.mubr.bf16.gmra.mrb[0].mxu0 %v226
  %v515 = vpop.f32.mrb[0].mxu0
  %v516 = vadd.f32 %v104, %v515
  %v517 = vpop.f32.mrb[0].mxu0
  %v518 = vpop.f32.mrb[0].mxu0
  %v519 = vadd.f32 %v104, %v518
  %v520 = vpop.f32.mrb[0].mxu0
  %521 = vmatprep.mubr.bf16.mxu0 %v231
  %522 = vmatmul.mubr.bf16.gmra.mrb[0].mxu0 %v230
  %v523 = vpop.f32.mrb[0].mxu0
  %v524 = vadd.f32 %v104, %v523
  %v525 = vpop.f32.mrb[0].mxu0
  %v526 = vpop.f32.mrb[0].mxu0
  %v527 = vadd.f32 %v104, %v526
  %v528 = vpop.f32.mrb[0].mxu0
  %529 = vdwg.mxu0
  %530 = vmatprep.subr.bf16.mxu0 0
  %531 = vmatpush1.bf16.msra.mxu0 %v374
  %532 = vmatprep.subr.bf16.mxu0 0
  %533 = vmatpush1.bf16.msra.mxu0 %v375
  %534 = vmatprep.subr.bf16.mxu0 0
  %535 = vmatpush1.bf16.msra.mxu0 %v376
  %536 = vmatprep.subr.bf16.mxu0 0
  %537 = vmatpush1.bf16.msra.mxu0 %v377
  %538 = vmatprep.subr.bf16.mxu0 0
  %539 = vmatpush1.bf16.msra.mxu0 %v378
  %540 = vmatprep.subr.bf16.mxu0 0
  %541 = vmatpush1.bf16.msra.mxu0 %v379
  %542 = vmatprep.subr.bf16.mxu0 0
  %543 = vmatpush1.bf16.msra.mxu0 %v380
  %544 = vmatprep.subr.bf16.mxu0 0
  %545 = vmatpush1.bf16.msra.mxu0 %v381
  %546 = vmatprep.subr.bf16.mxu0 0
  %547 = vmatpush1.bf16.msra.mxu0 %v382
  %548 = vmatprep.subr.bf16.mxu0 0
  %549 = vmatpush1.bf16.msra.mxu0 0
  %550 = vmatprep.subr.bf16.mxu0 0
  %551 = vmatpush1.bf16.msra.mxu0 0
  %552 = vmatprep.subr.bf16.mxu0 0
  %553 = vmatpush1.bf16.msra.mxu0 0
  %554 = vmatprep.subr.bf16.mxu0 0
  %555 = vmatpush1.bf16.msra.mxu0 0
  %556 = vmatprep.subr.bf16.mxu0 0
  %557 = vmatpush1.bf16.msra.mxu0 0
  %558 = vmatprep.subr.bf16.mxu0 0
  %559 = vmatpush1.bf16.msra.mxu0 0
  %560 = vmatprep.subr.bf16.mxu0 0
  %561 = vmatpush1.bf16.msra.mxu0 0
  %562 = vmatprep.mubr.bf16.mxu0 %v410
  %563 = vmatmul.mubr.bf16.gmra.mrb[0].mxu0 %v204
  %v564 = vpop.f32.mrb[0].mxu0
  %v565 = vadd.f32 %v468, %v564
  %v566 = vpop.f32.mrb[0].mxu0
  %v567 = vpop.f32.mrb[0].mxu0
  %v568 = vadd.f32 %v471, %v567
  %v569 = vpop.f32.mrb[0].mxu0
  %570 = vmatprep.mubr.bf16.mxu0 %v413
  %571 = vmatmul.mubr.bf16.gmra.mrb[0].mxu0 %v208
  %v572 = vpop.f32.mrb[0].mxu0
  %v573 = vadd.f32 %v476, %v572
  %v574 = vpop.f32.mrb[0].mxu0
  %v575 = vpop.f32.mrb[0].mxu0
  %v576 = vadd.f32 %v479, %v575
  %v577 = vpop.f32.mrb[0].mxu0
  %578 = vmatprep.mubr.bf16.mxu0 %v416
  %579 = vmatmul.mubr.bf16.gmra.mrb[0].mxu0 %v212
  %v580 = vpop.f32.mrb[0].mxu0
  %v581 = vadd.f32 %v484, %v580
  %v582 = vpop.f32.mrb[0].mxu0
  %v583 = vpop.f32.mrb[0].mxu0
  %v584 = vadd.f32 %v487, %v583
  %v585 = vpop.f32.mrb[0].mxu0
  %586 = vmatprep.mubr.bf16.mxu0 %v419
  %587 = vmatmul.mubr.bf16.gmra.mrb[0].mxu0 %v216
  %v588 = vpop.f32.mrb[0].mxu0
  %v589 = vadd.f32 %v492, %v588
  %v590 = vpop.f32.mrb[0].mxu0
  %v591 = vpop.f32.mrb[0].mxu0
  %v592 = vadd.f32 %v495, %v591
  %v593 = vpop.f32.mrb[0].mxu0
  %594 = vmatprep.mubr.bf16.mxu0 %v422
  %595 = vmatmul.mubr.bf16.gmra.mrb[0].mxu0 %v220
  %v596 = vpop.f32.mrb[0].mxu0
  %v597 = vadd.f32 %v500, %v596
  %v598 = vpop.f32.mrb[0].mxu0
  %v599 = vpop.f32.mrb[0].mxu0
  %v600 = vadd.f32 %v503, %v599
  %v601 = vpop.f32.mrb[0].mxu0
  %602 = vmatprep.mubr.bf16.mxu0 %v425
  %603 = vmatmul.mubr.bf16.gmra.mrb[0].mxu0 %v224
  %v604 = vpop.f32.mrb[0].mxu0
  %v605 = vadd.f32 %v508, %v604
  %v606 = vpop.f32.mrb[0].mxu0
  %v607 = vpop.f32.mrb[0].mxu0
  %v608 = vadd.f32 %v511, %v607
  %v609 = vpop.f32.mrb[0].mxu0
  %610 = vmatprep.mubr.bf16.mxu0 %v428
  %611 = vmatmul.mubr.bf16.gmra.mrb[0].mxu0 %v228
  %v612 = vpop.f32.mrb[0].mxu0
  %v613 = vadd.f32 %v516, %v612
  %v614 = vpop.f32.mrb[0].mxu0
  %v615 = vpop.f32.mrb[0].mxu0
  %v616 = vadd.f32 %v519, %v615
  %v617 = vpop.f32.mrb[0].mxu0
  %618 = vmatprep.mubr.bf16.mxu0 %v431
  %619 = vmatmul.mubr.bf16.gmra.mrb[0].mxu0 %v232
  %v620 = vpop.f32.mrb[0].mxu0
  %v621 = vadd.f32 %v524, %v620
  %v622 = vpop.f32.mrb[0].mxu0
  %v623 = vpop.f32.mrb[0].mxu0
  %v624 = vadd.f32 %v527, %v623
  %v625 = vpop.f32.mrb[0].mxu0
  %626 = vdwg.mxu0
  %v627 = vlaneseq
  %v628 = vshrl.u32 %v627, 7
  %v629 = vadd.s32 %v628, 8
  %v630 = vadd.s32 %v628, 16
  %v631 = vadd.s32 %v628, 24
  %v632 = vadd.s32 %v628, 32
  %v633 = vadd.s32 %v628, 40
  %v634 = vadd.s32 %v628, 48
  %v635 = vadd.s32 %v628, 56
  %v636 = vadd.s32 %v628, 64
  %v637 = vadd.s32 %v628, 72
  %v638 = vadd.s32 %v628, 80
  %v639 = vadd.s32 %v628, 88
  %v640 = vadd.s32 %v628, 96
  %v641 = vadd.s32 %v628, 104
  %v642 = vadd.s32 %v628, 112
  %v643 = vadd.s32 %v628, 120
  %s644 = smul.u32 0, 128
  %v645 = vstv %s644
  %v646 = vadd.s32 %v628, %v645
  %v647 = vadd.s32 %v629, %v645
  %v648 = vadd.s32 %v630, %v645
  %v649 = vadd.s32 %v631, %v645
  %v650 = vadd.s32 %v632, %v645
  %v651 = vadd.s32 %v633, %v645
  %v652 = vadd.s32 %v634, %v645
  %v653 = vadd.s32 %v635, %v645
  %v654 = vadd.s32 %v636, %v645
  %v655 = vadd.s32 %v637, %v645
  %v656 = vadd.s32 %v638, %v645
  %v657 = vadd.s32 %v639, %v645
  %v658 = vadd.s32 %v640, %v645
  %v659 = vadd.s32 %v641, %v645
  %v660 = vadd.s32 %v642, %v645
  %v661 = vadd.s32 %v643, %v645
  %vm662 = vcmp.lt.s32.totalorder %v646, 128
  %vm663 = vcmp.lt.s32.totalorder %v647, 128
  %vm664 = vcmp.lt.s32.totalorder %v648, 128
  %vm665 = vcmp.lt.s32.totalorder %v649, 128
  %vm666 = vcmp.lt.s32.totalorder %v650, 128
  %vm667 = vcmp.lt.s32.totalorder %v651, 128
  %vm668 = vcmp.lt.s32.totalorder %v652, 128
  %vm669 = vcmp.lt.s32.totalorder %v653, 128
  %vm670 = vcmp.lt.s32.totalorder %v654, 128
  %vm671 = vcmp.lt.s32.totalorder %v655, 128
  %vm672 = vcmp.lt.s32.totalorder %v656, 128
  %vm673 = vcmp.lt.s32.totalorder %v657, 128
  %vm674 = vcmp.lt.s32.totalorder %v658, 128
  %vm675 = vcmp.lt.s32.totalorder %v659, 128
  %vm676 = vcmp.lt.s32.totalorder %v660, 128
  %vm677 = vcmp.lt.s32.totalorder %v661, 128
  %v678 = vsel %vm662, 1, 0
  %v679 = vsel %vm663, 1, 0
  %v680 = vsel %vm664, 1, 0
  %v681 = vsel %vm665, 1, 0
  %v682 = vsel %vm666, 1, 0
  %v683 = vsel %vm667, 1, 0
  %v684 = vsel %vm668, 1, 0
  %v685 = vsel %vm669, 1, 0
  %v686 = vsel %vm670, 1, 0
  %v687 = vsel %vm671, 1, 0
  %v688 = vsel %vm672, 1, 0
  %v689 = vsel %vm673, 1, 0
  %v690 = vsel %vm674, 1, 0
  %v691 = vsel %vm675, 1, 0
  %v692 = vsel %vm676, 1, 0
  %v693 = vsel %vm677, 1, 0
  %vm694 = vcmp.eq.s32.totalorder %v678, 1
  %vm695 = vcmp.eq.s32.totalorder %v679, 1
  %vm696 = vcmp.eq.s32.totalorder %v680, 1
  %vm697 = vcmp.eq.s32.totalorder %v681, 1
  %vm698 = vcmp.eq.s32.totalorder %v682, 1
  %vm699 = vcmp.eq.s32.totalorder %v683, 1
  %vm700 = vcmp.eq.s32.totalorder %v684, 1
  %vm701 = vcmp.eq.s32.totalorder %v685, 1
  %vm702 = vcmp.eq.s32.totalorder %v686, 1
  %vm703 = vcmp.eq.s32.totalorder %v687, 1
  %vm704 = vcmp.eq.s32.totalorder %v688, 1
  %vm705 = vcmp.eq.s32.totalorder %v689, 1
  %vm706 = vcmp.eq.s32.totalorder %v690, 1
  %vm707 = vcmp.eq.s32.totalorder %v691, 1
  %vm708 = vcmp.eq.s32.totalorder %v692, 1
  %vm709 = vcmp.eq.s32.totalorder %v693, 1
  %v710 = vsel %vm694, %v565, 0.0
  %v711 = vsel %vm695, %v568, 0.0
  %v712 = vsel %vm696, %v573, 0.0
  %v713 = vsel %vm697, %v576, 0.0
  %v714 = vsel %vm698, %v581, 0.0
  %v715 = vsel %vm699, %v584, 0.0
  %v716 = vsel %vm700, %v589, 0.0
  %v717 = vsel %vm701, %v592, 0.0
  %v718 = vsel %vm702, %v597, 0.0
  %v719 = vsel %vm703, %v600, 0.0
  %v720 = vsel %vm704, %v605, 0.0
  %v721 = vsel %vm705, %v608, 0.0
  %v722 = vsel %vm706, %v613, 0.0
  %v723 = vsel %vm707, %v616, 0.0
  %v724 = vsel %vm708, %v621, 0.0
  %v725 = vsel %vm709, %v624, 0.0
  %vm726 = vcmask 261120
  %v727 = vsel %vm726, %v710, 0.0
  %v728 = vsel %vm726, %v711, 0.0
  %v729 = vadd.f32 %v727, %v728
  %v730 = vsel %vm726, %v712, 0.0
  %v731 = vadd.f32 %v729, %v730
  %v732 = vsel %vm726, %v713, 0.0
  %v733 = vadd.f32 %v731, %v732
  %v734 = vsel %vm726, %v714, 0.0
  %v735 = vadd.f32 %v733, %v734
  %v736 = vsel %vm726, %v715, 0.0
  %v737 = vadd.f32 %v735, %v736
  %v738 = vsel %vm726, %v716, 0.0
  %v739 = vadd.f32 %v737, %v738
  %v740 = vsel %vm726, %v717, 0.0
  %v741 = vadd.f32 %v739, %v740
  %v742 = vsel %vm726, %v718, 0.0
  %v743 = vadd.f32 %v741, %v742
  %v744 = vsel %vm726, %v719, 0.0
  %v745 = vadd.f32 %v743, %v744
  %v746 = vsel %vm726, %v720, 0.0
  %v747 = vadd.f32 %v745, %v746
  %v748 = vsel %vm726, %v721, 0.0
  %v749 = vadd.f32 %v747, %v748
  %v750 = vsel %vm726, %v722, 0.0
  %v751 = vadd.f32 %v749, %v750
  %v752 = vsel %vm726, %v723, 0.0
  %v753 = vadd.f32 %v751, %v752
  %v754 = vsel %vm726, %v724, 0.0
  %v755 = vadd.f32 %v753, %v754
  %v756 = vsel %vm726, %v725, 0.0
  %v757 = vadd.f32 %v755, %v756
  %v758 = vrot.slane %v757, 4
  %v759 = vadd.f32 %v757, %v758
  %v760 = vrot.slane %v759, 2
  %v761 = vadd.f32 %v759, %v760
  %v762 = vrot.slane %v761, 1
  %v763 = vadd.f32 %v761, %v762
  %vm764 = vcmask 253952
  %765 = vst.msk [vmem:[%s4] sm:$0x1] %vm764, %v763
  %v766 = vmul.f32 %v710, %v710
  %v767 = vmul.f32 %v711, %v711
  %v768 = vmul.f32 %v712, %v712
  %v769 = vmul.f32 %v713, %v713
  %v770 = vmul.f32 %v714, %v714
  %v771 = vmul.f32 %v715, %v715
  %v772 = vmul.f32 %v716, %v716
  %v773 = vmul.f32 %v717, %v717
  %v774 = vmul.f32 %v718, %v718
  %v775 = vmul.f32 %v719, %v719
  %v776 = vmul.f32 %v720, %v720
  %v777 = vmul.f32 %v721, %v721
  %v778 = vmul.f32 %v722, %v722
  %v779 = vmul.f32 %v723, %v723
  %v780 = vmul.f32 %v724, %v724
  %v781 = vmul.f32 %v725, %v725
  %v782 = vsel %vm726, %v766, 0.0
  %v783 = vsel %vm726, %v767, 0.0
  %v784 = vadd.f32 %v782, %v783
  %v785 = vsel %vm726, %v768, 0.0
  %v786 = vadd.f32 %v784, %v785
  %v787 = vsel %vm726, %v769, 0.0
  %v788 = vadd.f32 %v786, %v787
  %v789 = vsel %vm726, %v770, 0.0
  %v790 = vadd.f32 %v788, %v789
  %v791 = vsel %vm726, %v771, 0.0
  %v792 = vadd.f32 %v790, %v791
  %v793 = vsel %vm726, %v772, 0.0
  %v794 = vadd.f32 %v792, %v793
  %v795 = vsel %vm726, %v773, 0.0
  %v796 = vadd.f32 %v794, %v795
  %v797 = vsel %vm726, %v774, 0.0
  %v798 = vadd.f32 %v796, %v797
  %v799 = vsel %vm726, %v775, 0.0
  %v800 = vadd.f32 %v798, %v799
  %v801 = vsel %vm726, %v776, 0.0
  %v802 = vadd.f32 %v800, %v801
  %v803 = vsel %vm726, %v777, 0.0
  %v804 = vadd.f32 %v802, %v803
  %v805 = vsel %vm726, %v778, 0.0
  %v806 = vadd.f32 %v804, %v805
  %v807 = vsel %vm726, %v779, 0.0
  %v808 = vadd.f32 %v806, %v807
  %v809 = vsel %vm726, %v780, 0.0
  %v810 = vadd.f32 %v808, %v809
  %v811 = vsel %vm726, %v781, 0.0
  %v812 = vadd.f32 %v810, %v811
  %v813 = vrot.slane %v812, 4
  %v814 = vadd.f32 %v812, %v813
  %v815 = vrot.slane %v814, 2
  %v816 = vadd.f32 %v814, %v815
  %v817 = vrot.slane %v816, 1
  %v818 = vadd.f32 %v816, %v817
  %819 = vst.msk [vmem:[%s4 + $0x1] sm:$0x1] %vm764, %v818
  %v820 = vpack.c.bf16 %v568, %v565
  %v821 = vpack.c.bf16 %v576, %v573
  %v822 = vpack.c.bf16 %v584, %v581
  %v823 = vpack.c.bf16 %v592, %v589
  %v824 = vpack.c.bf16 %v600, %v597
  %v825 = vpack.c.bf16 %v608, %v605
  %v826 = vpack.c.bf16 %v616, %v613
  %v827 = vpack.c.bf16 %v624, %v621
  %v836 = vunpack.c.l.b16 %v820
  %v837 = vunpack.c.h.b16 %v820
  %v838 = vunpack.c.l.b16 %v821
  %v839 = vunpack.c.h.b16 %v821
  %v840 = vunpack.c.l.b16 %v822
  %v841 = vunpack.c.h.b16 %v822
  %v842 = vunpack.c.l.b16 %v823
  %v843 = vunpack.c.h.b16 %v823
  %v844 = vunpack.c.l.b16 %v824
  %v845 = vunpack.c.h.b16 %v824
  %v846 = vunpack.c.l.b16 %v825
  %v847 = vunpack.c.h.b16 %v825
  %v848 = vunpack.c.l.b16 %v826
  %v849 = vunpack.c.h.b16 %v826
  %v850 = vunpack.c.l.b16 %v827
  %v851 = vunpack.c.h.b16 %v827
  %v852 = vpack.c.b16 %v836, %v836
  %v853 = vpack.c.b16 %v837, %v837
  %v854 = vpack.c.b16 %v838, %v838
  %v855 = vpack.c.b16 %v839, %v839
  %v856 = vpack.c.b16 %v840, %v840
  %v857 = vpack.c.b16 %v841, %v841
  %v858 = vpack.c.b16 %v842, %v842
  %v859 = vpack.c.b16 %v843, %v843
  %v860 = vpack.c.b16 %v844, %v844
  %v861 = vpack.c.b16 %v845, %v845
  %v862 = vpack.c.b16 %v846, %v846
  %v863 = vpack.c.b16 %v847, %v847
  %v864 = vpack.c.b16 %v848, %v848
  %v865 = vpack.c.b16 %v849, %v849
  %v866 = vpack.c.b16 %v850, %v850
  %v867 = vpack.c.b16 %v851, %v851
  %vm884 = vcmask 257024
  %885 = vst.msk [vmem:[%s3] sm:$0xf] %vm884, %v852
  %886 = vst.msk [vmem:[%s3 + $0x4] sm:$0xf] %vm884, %v853
  %887 = vst.msk [vmem:[%s3 + $0x8] sm:$0xf] %vm884, %v854
  %888 = vst.msk [vmem:[%s3 + $0xc] sm:$0xf] %vm884, %v855
  %889 = vst.msk [vmem:[%s3 + $0x10] sm:$0xf] %vm884, %v856
  %890 = vst.msk [vmem:[%s3 + $0x14] sm:$0xf] %vm884, %v857
  %891 = vst.msk [vmem:[%s3 + $0x18] sm:$0xf] %vm884, %v858
  %892 = vst.msk [vmem:[%s3 + $0x1c] sm:$0xf] %vm884, %v859
  %893 = vst.msk [vmem:[%s3 + $0x20] sm:$0xf] %vm884, %v860
  %894 = vst.msk [vmem:[%s3 + $0x24] sm:$0xf] %vm884, %v861
  %895 = vst.msk [vmem:[%s3 + $0x28] sm:$0xf] %vm884, %v862
  %896 = vst.msk [vmem:[%s3 + $0x2c] sm:$0xf] %vm884, %v863
  %897 = vst.msk [vmem:[%s3 + $0x30] sm:$0xf] %vm884, %v864
  %898 = vst.msk [vmem:[%s3 + $0x34] sm:$0xf] %vm884, %v865
  %899 = vst.msk [vmem:[%s3 + $0x38] sm:$0xf] %vm884, %v866
  %900 = vst.msk [vmem:[%s3 + $0x3c] sm:$0xf] %vm884, %v867
  // Predicated region
  $region14: #{netd_forward.10} parent=0 // pred_check
    _
  $region15: #{netd_forward.10} parent=0 // pred_check_branch
    %902 = sbr.rel (0) target = $region17
  $region16: #{netd_forward.10} parent=0 // pred_region
    _
  $region17: #{netd_forward.10} parent=0 // pred_fallthru
    _
  // Predicated region
  $region18: #{netd_forward.10} parent=0 // pred_check
    _
  $region19: #{netd_forward.10} parent=0 // pred_check_branch
    %904 = sbr.rel (0) target = $region21
  $region20: #{netd_forward.10} parent=0 // pred_region
    _
  $region21: #{netd_forward.10} parent=0 // pred_fallthru
    _
  // Predicated region
  $region22: #{netd_forward.10} parent=0 // pred_check
    _
  $region23: #{netd_forward.10} parent=0 // pred_check_branch
    %906 = sbr.rel (0) target = $region25
  $region24: #{netd_forward.10} parent=0 // pred_region
    _
  $region25: #{netd_forward.10} parent=0 // pred_fallthru
    _
  // Predicated region
  $region26: #{netd_forward.10} parent=0 // pred_check
    _
  $region27: #{netd_forward.10} parent=0 // pred_check_branch
    %908 = sbr.rel (0) target = $region29
  $region28: #{netd_forward.10} parent=0 // pred_region
    _
  $region29: #{netd_forward.10} parent=0 // pred_fallthru
    _

// kernel: netd_forward.11
$region0: #{netd_forward.11}
  #allocation0 [shape = 'u32[]', space=smem, size = 0x4, offset = 0x4, fixed_abs, tag = 'smem constant byte address 0x4 - core index']
  #allocation1 [shape = 'u32[144,128]{1,0:T(1,128)}', space=vmem, size = 0x12000, scoped, tag = 'internal scratch']
  %s0 = inlined_call_operand.vmem [shape: bf16[128,32], index: 0, kind: input, shape index: {}]
  %s1 = inlined_call_operand.vmem [shape: f32[1,32], index: 1, kind: input, shape index: {}]
  %s2 = inlined_call_operand.vmem [shape: f32[1,32], index: 2, kind: input, shape index: {}]
  %s3 = inlined_call_operand.vmem [shape: bf16[128,32], index: 3, kind: output, shape index: {}]
  %s4 = sld [smem:[#allocation0]]
  $region22: #{netd_forward.11} parent=0
    _
  %s6 = ssub.s32 1, %s4
  %s7 = scalar_select 0, %s6, %s4
  // Predicated region
  $region2: #{netd_forward.11} parent=0 // pred_check
    _
  $region3: #{netd_forward.11} parent=0 // pred_check_branch
    %9 = sbr.rel (0) target = $region5
  $region4: #{netd_forward.11} parent=0 // pred_region
    _
  $region5: #{netd_forward.11} parent=0 // pred_fallthru
    _
  // Predicated region
  $region6: #{netd_forward.11} parent=0 // pred_check
    _
  $region7: #{netd_forward.11} parent=0 // pred_check_branch
    %11 = sbr.rel (0) target = $region9
  $region8: #{netd_forward.11} parent=0 // pred_region
    _
  $region9: #{netd_forward.11} parent=0 // pred_fallthru
    _
  // Predicated region
  $region10: #{netd_forward.11} parent=0 // pred_check
    _
  $region11: #{netd_forward.11} parent=0 // pred_check_branch
    %13 = sbr.rel (0) target = $region13
  $region12: #{netd_forward.11} parent=0 // pred_region
    _
  $region13: #{netd_forward.11} parent=0 // pred_fallthru
    _
  %v14 = vld [vmem:[%s0] sm:$0xf]
  %v15 = vld [vmem:[%s0 + $0x4] sm:$0xf]
  %v16 = vld [vmem:[%s0 + $0x8] sm:$0xf]
  %v17 = vld [vmem:[%s0 + $0xc] sm:$0xf]
  %v18 = vld [vmem:[%s0 + $0x10] sm:$0xf]
  %v19 = vld [vmem:[%s0 + $0x14] sm:$0xf]
  %v20 = vld [vmem:[%s0 + $0x18] sm:$0xf]
  %v21 = vld [vmem:[%s0 + $0x1c] sm:$0xf]
  %v22 = vld [vmem:[%s0 + $0x20] sm:$0xf]
  %v23 = vld [vmem:[%s0 + $0x24] sm:$0xf]
  %v24 = vld [vmem:[%s0 + $0x28] sm:$0xf]
  %v25 = vld [vmem:[%s0 + $0x2c] sm:$0xf]
  %v26 = vld [vmem:[%s0 + $0x30] sm:$0xf]
  %v27 = vld [vmem:[%s0 + $0x34] sm:$0xf]
  %v28 = vld [vmem:[%s0 + $0x38] sm:$0xf]
  %v29 = vld [vmem:[%s0 + $0x3c] sm:$0xf]
  %v30 = vunpack.c.l.bf16 %v14
  %v31 = vunpack.c.l.bf16 %v15
  %v32 = vunpack.c.l.bf16 %v16
  %v33 = vunpack.c.l.bf16 %v17
  %v34 = vunpack.c.l.bf16 %v18
  %v35 = vunpack.c.l.bf16 %v19
  %v36 = vunpack.c.l.bf16 %v20
  %v37 = vunpack.c.l.bf16 %v21
  %v38 = vunpack.c.l.bf16 %v22
  %v39 = vunpack.c.l.bf16 %v23
  %v40 = vunpack.c.l.bf16 %v24
  %v41 = vunpack.c.l.bf16 %v25
  %v42 = vunpack.c.l.bf16 %v26
  %v43 = vunpack.c.l.bf16 %v27
  %v44 = vunpack.c.l.bf16 %v28
  %v45 = vunpack.c.l.bf16 %v29
  %v46 = vld [vmem:[%s1] sm:$0x1]
  %v48 = vlaneseq
  %v49 = vshrl.u32 %v48, 7
  %v50 = vsub.s32 0, %v49
  %v51 = vrot.slane %v46, %v50
  %v53 = vmul.f32 %v30, %v51
  %v54 = vmul.f32 %v31, %v51
  %v55 = vmul.f32 %v32, %v51
  %v56 = vmul.f32 %v33, %v51
  %v57 = vmul.f32 %v34, %v51
  %v58 = vmul.f32 %v35, %v51
  %v59 = vmul.f32 %v36, %v51
  %v60 = vmul.f32 %v37, %v51
  %v61 = vmul.f32 %v38, %v51
  %v62 = vmul.f32 %v39, %v51
  %v63 = vmul.f32 %v40, %v51
  %v64 = vmul.f32 %v41, %v51
  %v65 = vmul.f32 %v42, %v51
  %v66 = vmul.f32 %v43, %v51
  %v67 = vmul.f32 %v44, %v51
  %v68 = vmul.f32 %v45, %v51
  %v69 = vld [vmem:[%s2] sm:$0x1]
  %v71 = vlaneseq
  %v72 = vshrl.u32 %v71, 7
  %v73 = vsub.s32 0, %v72
  %v74 = vrot.slane %v69, %v73
  %v76 = vadd.f32 %v53, %v74
  %v77 = vadd.f32 %v54, %v74
  %v78 = vadd.f32 %v55, %v74
  %v79 = vadd.f32 %v56, %v74
  %v80 = vadd.f32 %v57, %v74
  %v81 = vadd.f32 %v58, %v74
  %v82 = vadd.f32 %v59, %v74
  %v83 = vadd.f32 %v60, %v74
  %v84 = vadd.f32 %v61, %v74
  %v85 = vadd.f32 %v62, %v74
  %v86 = vadd.f32 %v63, %v74
  %v87 = vadd.f32 %v64, %v74
  %v88 = vadd.f32 %v65, %v74
  %v89 = vadd.f32 %v66, %v74
  %v90 = vadd.f32 %v67, %v74
  %v91 = vadd.f32 %v68, %v74
  %vm92 = vcmp.ge.f32.partialorder %v76, 0.0
  %vm93 = vcmp.ge.f32.partialorder %v77, 0.0
  %vm94 = vcmp.ge.f32.partialorder %v78, 0.0
  %vm95 = vcmp.ge.f32.partialorder %v79, 0.0
  %vm96 = vcmp.ge.f32.partialorder %v80, 0.0
  %vm97 = vcmp.ge.f32.partialorder %v81, 0.0
  %vm98 = vcmp.ge.f32.partialorder %v82, 0.0
  %vm99 = vcmp.ge.f32.partialorder %v83, 0.0
  %vm100 = vcmp.ge.f32.partialorder %v84, 0.0
  %vm101 = vcmp.ge.f32.partialorder %v85, 0.0
  %vm102 = vcmp.ge.f32.partialorder %v86, 0.0
  %vm103 = vcmp.ge.f32.partialorder %v87, 0.0
  %vm104 = vcmp.ge.f32.partialorder %v88, 0.0
  %vm105 = vcmp.ge.f32.partialorder %v89, 0.0
  %vm106 = vcmp.ge.f32.partialorder %v90, 0.0
  %vm107 = vcmp.ge.f32.partialorder %v91, 0.0
  %v108 = vmul.f32 %v76, 0.2
  %v109 = vmul.f32 %v77, 0.2
  %v110 = vmul.f32 %v78, 0.2
  %v111 = vmul.f32 %v79, 0.2
  %v112 = vmul.f32 %v80, 0.2
  %v113 = vmul.f32 %v81, 0.2
  %v114 = vmul.f32 %v82, 0.2
  %v115 = vmul.f32 %v83, 0.2
  %v116 = vmul.f32 %v84, 0.2
  %v117 = vmul.f32 %v85, 0.2
  %v118 = vmul.f32 %v86, 0.2
  %v119 = vmul.f32 %v87, 0.2
  %v120 = vmul.f32 %v88, 0.2
  %v121 = vmul.f32 %v89, 0.2
  %v122 = vmul.f32 %v90, 0.2
  %v123 = vmul.f32 %v91, 0.2
  %v124 = vsel %vm92, %v76, %v108
  %v125 = vsel %vm93, %v77, %v109
  %v126 = vsel %vm94, %v78, %v110
  %v127 = vsel %vm95, %v79, %v111
  %v128 = vsel %vm96, %v80, %v112
  %v129 = vsel %vm97, %v81, %v113
  %v130 = vsel %vm98, %v82, %v114
  %v131 = vsel %vm99, %v83, %v115
  %v132 = vsel %vm100, %v84, %v116
  %v133 = vsel %vm101, %v85, %v117
  %v134 = vsel %vm102, %v86, %v118
  %v135 = vsel %vm103, %v87, %v119
  %v136 = vsel %vm104, %v88, %v120
  %v137 = vsel %vm105, %v89, %v121
  %v138 = vsel %vm106, %v90, %v122
  %v139 = vsel %vm107, %v91, %v123
  %v140 = vpack.c.bf16 %v125, %v124
  %v141 = vpack.c.bf16 %v127, %v126
  %v142 = vpack.c.bf16 %v129, %v128
  %v143 = vpack.c.bf16 %v131, %v130
  %v144 = vpack.c.bf16 %v133, %v132
  %v145 = vpack.c.bf16 %v135, %v134
  %v146 = vpack.c.bf16 %v137, %v136
  %v147 = vpack.c.bf16 %v139, %v138
  %v156 = vunpack.c.l.b16 %v140
  %v157 = vunpack.c.h.b16 %v140
  %v158 = vunpack.c.l.b16 %v141
  %v159 = vunpack.c.h.b16 %v141
  %v160 = vunpack.c.l.b16 %v142
  %v161 = vunpack.c.h.b16 %v142
  %v162 = vunpack.c.l.b16 %v143
  %v163 = vunpack.c.h.b16 %v143
  %v164 = vunpack.c.l.b16 %v144
  %v165 = vunpack.c.h.b16 %v144
  %v166 = vunpack.c.l.b16 %v145
  %v167 = vunpack.c.h.b16 %v145
  %v168 = vunpack.c.l.b16 %v146
  %v169 = vunpack.c.h.b16 %v146
  %v170 = vunpack.c.l.b16 %v147
  %v171 = vunpack.c.h.b16 %v147
  %v172 = vpack.c.b16 %v156, %v156
  %v173 = vpack.c.b16 %v157, %v157
  %v174 = vpack.c.b16 %v158, %v158
  %v175 = vpack.c.b16 %v159, %v159
  %v176 = vpack.c.b16 %v160, %v160
  %v177 = vpack.c.b16 %v161, %v161
  %v178 = vpack.c.b16 %v162, %v162
  %v179 = vpack.c.b16 %v163, %v163
  %v180 = vpack.c.b16 %v164, %v164
  %v181 = vpack.c.b16 %v165, %v165
  %v182 = vpack.c.b16 %v166, %v166
  %v183 = vpack.c.b16 %v167, %v167
  %v184 = vpack.c.b16 %v168, %v168
  %v185 = vpack.c.b16 %v169, %v169
  %v186 = vpack.c.b16 %v170, %v170
  %v187 = vpack.c.b16 %v171, %v171
  %vm204 = vcmask 257024
  %205 = vst.msk [vmem:[%s3] sm:$0xf] %vm204, %v172
  %206 = vst.msk [vmem:[%s3 + $0x4] sm:$0xf] %vm204, %v173
  %207 = vst.msk [vmem:[%s3 + $0x8] sm:$0xf] %vm204, %v174
  %208 = vst.msk [vmem:[%s3 + $0xc] sm:$0xf] %vm204, %v175
  %209 = vst.msk [vmem:[%s3 + $0x10] sm:$0xf] %vm204, %v176
  %210 = vst.msk [vmem:[%s3 + $0x14] sm:$0xf] %vm204, %v177
  %211 = vst.msk [vmem:[%s3 + $0x18] sm:$0xf] %vm204, %v178
  %212 = vst.msk [vmem:[%s3 + $0x1c] sm:$0xf] %vm204, %v179
  %213 = vst.msk [vmem:[%s3 + $0x20] sm:$0xf] %vm204, %v180
  %214 = vst.msk [vmem:[%s3 + $0x24] sm:$0xf] %vm204, %v181
  %215 = vst.msk [vmem:[%s3 + $0x28] sm:$0xf] %vm204, %v182
  %216 = vst.msk [vmem:[%s3 + $0x2c] sm:$0xf] %vm204, %v183
  %217 = vst.msk [vmem:[%s3 + $0x30] sm:$0xf] %vm204, %v184
  %218 = vst.msk [vmem:[%s3 + $0x34] sm:$0xf] %vm204, %v185
  %219 = vst.msk [vmem:[%s3 + $0x38] sm:$0xf] %vm204, %v186
  %220 = vst.msk [vmem:[%s3 + $0x3c] sm:$0xf] %vm204, %v187
  // Predicated region
  $region14: #{netd_forward.11} parent=0 // pred_check
    _
  $region15: #{netd_forward.11} parent=0 // pred_check_branch
    %222 = sbr.rel (0) target = $region17
  $region16: #{netd_forward.11} parent=0 // pred_region
    _
  $region17: #{netd_forward.11} parent=0 // pred_fallthru
    _
  // Predicated region
  $region18: #{netd_forward.11} parent=0 // pred_check
    _
  $region19: #{netd_forward.11} parent=0 // pred_check_branch
    %224 = sbr.rel (0) target = $region21
  $region20: #{netd_forward.11} parent=0 // pred_region
    _
  $region21: #{netd_forward.11} parent=0 // pred_fallthru
    _

// kernel: netd_forward.12
$region0: #{netd_forward.12}
  #allocation0 [shape = 'u32[]', space=smem, size = 0x4, offset = 0x4, fixed_abs, tag = 'smem constant byte address 0x4 - core index']
  #allocation1 [shape = 'u32[144,128]{1,0:T(1,128)}', space=vmem, size = 0x12000, scoped, tag = 'internal scratch']
  %s0 = inlined_call_operand.vmem [shape: bf16[32,800], index: 0, kind: input, shape index: {}]
  %s1 = inlined_call_operand.vmem [shape: bf16[800,64], index: 1, kind: input, shape index: {}]
  %s2 = inlined_call_operand.vmem [shape: f32[1,64], index: 2, kind: input, shape index: {}]
  %s3 = inlined_call_operand.vmem [shape: bf16[32,64], index: 3, kind: output, shape index: {0}]
  %s4 = inlined_call_operand.vmem [shape: f32[1,2,64], index: 4, kind: output, shape index: {1}]
  %5 = xla_tuple %s3, %s4
  %s6 = sld [smem:[#allocation0]]
  $region30: #{netd_forward.12} parent=0
    _
  %s8 = ssub.s32 1, %s6
  %s9 = scalar_select 0, %s8, %s6
  // Predicated region
  $region2: #{netd_forward.12} parent=0 // pred_check
    _
  $region3: #{netd_forward.12} parent=0 // pred_check_branch
    %11 = sbr.rel (0) target = $region5
  $region4: #{netd_forward.12} parent=0 // pred_region
    _
  $region5: #{netd_forward.12} parent=0 // pred_fallthru
    _
  // Predicated region
  $region6: #{netd_forward.12} parent=0 // pred_check
    _
  $region7: #{netd_forward.12} parent=0 // pred_check_branch
    %13 = sbr.rel (0) target = $region9
  $region8: #{netd_forward.12} parent=0 // pred_region
    _
  $region9: #{netd_forward.12} parent=0 // pred_fallthru
    _
  // Predicated region
  $region10: #{netd_forward.12} parent=0 // pred_check
    _
  $region11: #{netd_forward.12} parent=0 // pred_check_branch
    %15 = sbr.rel (0) target = $region13
  $region12: #{netd_forward.12} parent=0 // pred_region
    _
  $region13: #{netd_forward.12} parent=0 // pred_fallthru
    _
  %v17 = vld [vmem:[%s0] sm:$0xff]
  %v18 = vld [vmem:[%s0 + $0x8] sm:$0xff]
  %v19 = vld [vmem:[%s0 + $0x10] sm:$0xff]
  %v20 = vld [vmem:[%s0 + $0x18] sm:$0xf]
  %v21 = vld [vmem:[%s0 + $0x1c] sm:$0xff]
  %v22 = vld [vmem:[%s0 + $0x24] sm:$0xff]
  %v23 = vld [vmem:[%s0 + $0x2c] sm:$0xff]
  %v24 = vld [vmem:[%s0 + $0x34] sm:$0xf]
  %v25 = vld [vmem:[%s0 + $0x38] sm:$0xff]
  %v26 = vld [vmem:[%s0 + $0x40] sm:$0xff]
  %v27 = vld [vmem:[%s0 + $0x48] sm:$0xff]
  %v28 = vld [vmem:[%s0 + $0x50] sm:$0xf]
  %v29 = vld [vmem:[%s0 + $0x54] sm:$0xff]
  %v30 = vld [vmem:[%s0 + $0x5c] sm:$0xff]
  %v31 = vld [vmem:[%s0 + $0x64] sm:$0xff]
  %v32 = vld [vmem:[%s0 + $0x6c] sm:$0xf]
  %v33 = vld [vmem:[%s1] sm:$0xf]
  %v34 = vld [vmem:[%s1 + $0x4] sm:$0xf]
  %v35 = vld [vmem:[%s1 + $0x8] sm:$0xf]
  %v36 = vld [vmem:[%s1 + $0xc] sm:$0xf]
  %v37 = vld [vmem:[%s1 + $0x10] sm:$0xf]
  %v38 = vld [vmem:[%s1 + $0x14] sm:$0xf]
  %v39 = vld [vmem:[%s1 + $0x18] sm:$0xf]
  %v40 = vld [vmem:[%s1 + $0x1c] sm:$0xf]
  %v41 = vld [vmem:[%s1 + $0x20] sm:$0xf]
  %v42 = vld [vmem:[%s1 + $0x24] sm:$0xf]
  %v43 = vld [vmem:[%s1 + $0x28] sm:$0xf]
  %v44 = vld [vmem:[%s1 + $0x2c] sm:$0xf]
  %v45 = vld [vmem:[%s1 + $0x30] sm:$0xf]
  %v46 = vld [vmem:[%s1 + $0x34] sm:$0xf]
  %v47 = vld [vmem:[%s1 + $0x38] sm:$0xf]
  %v48 = vld [vmem:[%s1 + $0x3c] sm:$0xf]
  %v49 = vld [vmem:[%s1 + $0x40] sm:$0xf]
  %v50 = vld [vmem:[%s1 + $0x44] sm:$0xf]
  %v51 = vld [vmem:[%s1 + $0x48] sm:$0xf]
  %v52 = vld [vmem:[%s1 + $0x4c] sm:$0xf]
  %v53 = vld [vmem:[%s1 + $0x50] sm:$0xf]
  %v54 = vld [vmem:[%s1 + $0x54] sm:$0xf]
  %v55 = vld [vmem:[%s1 + $0x58] sm:$0xf]
  %v56 = vld [vmem:[%s1 + $0x5c] sm:$0xf]
  %v57 = vld [vmem:[%s1 + $0x60] sm:$0xf]
  %v58 = vld [vmem:[%s1 + $0x64] sm:$0xf]
  %v59 = vld [vmem:[%s1 + $0x68] sm:$0xf]
  %v60 = vld [vmem:[%s1 + $0x6c] sm:$0xf]
  %v61 = vld [vmem:[%s1 + $0x70] sm:$0xf]
  %v62 = vld [vmem:[%s1 + $0x74] sm:$0xf]
  %v63 = vld [vmem:[%s1 + $0x78] sm:$0xf]
  %v64 = vld [vmem:[%s1 + $0x7c] sm:$0xf]
  %v65 = vld [vmem:[%s1 + $0x80] sm:$0xf]
  %v66 = vld [vmem:[%s1 + $0x84] sm:$0xf]
  %v67 = vld [vmem:[%s1 + $0x88] sm:$0xf]
  %v68 = vld [vmem:[%s1 + $0x8c] sm:$0xf]
  %v69 = vld [vmem:[%s1 + $0x90] sm:$0xf]
  %v70 = vld [vmem:[%s1 + $0x94] sm:$0xf]
  %v71 = vld [vmem:[%s1 + $0x98] sm:$0xf]
  %v72 = vld [vmem:[%s1 + $0x9c] sm:$0xf]
  %v73 = vld [vmem:[%s1 + $0xa0] sm:$0xf]
  %v74 = vld [vmem:[%s1 + $0xa4] sm:$0xf]
  %v75 = vld [vmem:[%s1 + $0xa8] sm:$0xf]
  %v76 = vld [vmem:[%s1 + $0xac] sm:$0xf]
  %v77 = vld [vmem:[%s1 + $0xb0] sm:$0xf]
  %v78 = vld [vmem:[%s1 + $0xb4] sm:$0xf]
  %v79 = vld [vmem:[%s1 + $0xb8] sm:$0xf]
  %v80 = vld [vmem:[%s1 + $0xbc] sm:$0xf]
  %v81 = vld [vmem:[%s1 + $0xc0] sm:$0xf]
  %v82 = vld [vmem:[%s1 + $0xc4] sm:$0xf]
  %v83 = vld [vmem:[%s1 + $0xc8] sm:$0xf]
  %v84 = vld [vmem:[%s1 + $0xcc] sm:$0xf]
  %v85 = vld [vmem:[%s1 + $0xd0] sm:$0xf]
  %v86 = vld [vmem:[%s1 + $0xd4] sm:$0xf]
  %v87 = vld [vmem:[%s1 + $0xd8] sm:$0xf]
  %v88 = vld [vmem:[%s1 + $0xdc] sm:$0xf]
  %v89 = vld [vmem:[%s1 + $0xe0] sm:$0xf]
  %v90 = vld [vmem:[%s1 + $0xe4] sm:$0xf]
  %v91 = vld [vmem:[%s1 + $0xe8] sm:$0xf]
  %v92 = vld [vmem:[%s1 + $0xec] sm:$0xf]
  %v93 = vld [vmem:[%s1 + $0xf0] sm:$0xf]
  %v94 = vld [vmem:[%s1 + $0xf4] sm:$0xf]
  %v95 = vld [vmem:[%s1 + $0xf8] sm:$0xf]
  %v96 = vld [vmem:[%s1 + $0xfc] sm:$0xf]
  %v97 = vld [vmem:[%s1 + $0x100] sm:$0xf]
  %v98 = vld [vmem:[%s1 + $0x104] sm:$0xf]
  %v99 = vld [vmem:[%s1 + $0x108] sm:$0xf]
  %v100 = vld [vmem:[%s1 + $0x10c] sm:$0xf]
  %v101 = vld [vmem:[%s1 + $0x110] sm:$0xf]
  %v102 = vld [vmem:[%s1 + $0x114] sm:$0xf]
  %v103 = vld [vmem:[%s1 + $0x118] sm:$0xf]
  %v104 = vld [vmem:[%s1 + $0x11c] sm:$0xf]
  %v105 = vld [vmem:[%s1 + $0x120] sm:$0xf]
  %v106 = vld [vmem:[%s1 + $0x124] sm:$0xf]
  %v107 = vld [vmem:[%s1 + $0x128] sm:$0xf]
  %v108 = vld [vmem:[%s1 + $0x12c] sm:$0xf]
  %v109 = vld [vmem:[%s1 + $0x130] sm:$0xf]
  %v110 = vld [vmem:[%s1 + $0x134] sm:$0xf]
  %v111 = vld [vmem:[%s1 + $0x138] sm:$0xf]
  %v112 = vld [vmem:[%s1 + $0x13c] sm:$0xf]
  %v113 = vld [vmem:[%s1 + $0x140] sm:$0xf]
  %v114 = vld [vmem:[%s1 + $0x144] sm:$0xf]
  %v115 = vld [vmem:[%s1 + $0x148] sm:$0xf]
  %v116 = vld [vmem:[%s1 + $0x14c] sm:$0xf]
  %v117 = vld [vmem:[%s1 + $0x150] sm:$0xf]
  %v118 = vld [vmem:[%s1 + $0x154] sm:$0xf]
  %v119 = vld [vmem:[%s1 + $0x158] sm:$0xf]
  %v120 = vld [vmem:[%s1 + $0x15c] sm:$0xf]
  %v121 = vld [vmem:[%s1 + $0x160] sm:$0xf]
  %v122 = vld [vmem:[%s1 + $0x164] sm:$0xf]
  %v123 = vld [vmem:[%s1 + $0x168] sm:$0xf]
  %v124 = vld [vmem:[%s1 + $0x16c] sm:$0xf]
  %v125 = vld [vmem:[%s1 + $0x170] sm:$0xf]
  %v126 = vld [vmem:[%s1 + $0x174] sm:$0xf]
  %v127 = vld [vmem:[%s1 + $0x178] sm:$0xf]
  %v128 = vld [vmem:[%s1 + $0x17c] sm:$0xf]
  %v129 = vld [vmem:[%s1 + $0x180] sm:$0xf]
  %v130 = vld [vmem:[%s1 + $0x184] sm:$0xf]
  %v131 = vld [vmem:[%s1 + $0x188] sm:$0xf]
  %v132 = vld [vmem:[%s1 + $0x18c] sm:$0xf]
  %v133 = vld [vmem:[%s2] sm:$0x1]
  %v135 = vlaneseq
  %v136 = vshrl.u32 %v135, 7
  %v137 = vsub.s32 0, %v136
  %v138 = vrot.slane %v133, %v137
  %v156 = vunpack.c.l.b16 %v17
  %v157 = vunpack.c.h.b16 %v17
  %v158 = vunpack.c.l.b16 %v18
  %v159 = vunpack.c.h.b16 %v18
  %v160 = vunpack.c.l.b16 %v19
  %v161 = vunpack.c.h.b16 %v19
  %v162 = vunpack.c.l.b16 %v20
  %v163 = vunpack.c.l.b16 %v21
  %v164 = vunpack.c.h.b16 %v21
  %v165 = vunpack.c.l.b16 %v22
  %v166 = vunpack.c.h.b16 %v22
  %v167 = vunpack.c.l.b16 %v23
  %v168 = vunpack.c.h.b16 %v23
  %v169 = vunpack.c.l.b16 %v24
  %v170 = vunpack.c.l.b16 %v25
  %v171 = vunpack.c.h.b16 %v25
  %v172 = vunpack.c.l.b16 %v26
  %v173 = vunpack.c.h.b16 %v26
  %v174 = vunpack.c.l.b16 %v27
  %v175 = vunpack.c.h.b16 %v27
  %v176 = vunpack.c.l.b16 %v28
  %v177 = vunpack.c.l.b16 %v29
  %v178 = vunpack.c.h.b16 %v29
  %v179 = vunpack.c.l.b16 %v30
  %v180 = vunpack.c.h.b16 %v30
  %v181 = vunpack.c.l.b16 %v31
  %v182 = vunpack.c.h.b16 %v31
  %v183 = vunpack.c.l.b16 %v32
  %v184 = vpack.c.b16 %v163, %v156
  %v185 = vpack.c.b16 %v164, %v157
  %v186 = vpack.c.b16 %v165, %v158
  %v187 = vpack.c.b16 %v166, %v159
  %v188 = vpack.c.b16 %v167, %v160
  %v189 = vpack.c.b16 %v168, %v161
  %v190 = vpack.c.b16 %v169, %v162
  %v191 = vpack.c.b16 %v177, %v170
  %v192 = vpack.c.b16 %v178, %v171
  %v193 = vpack.c.b16 %v179, %v172
  %v194 = vpack.c.b16 %v180, %v173
  %v195 = vpack.c.b16 %v181, %v174
  %v196 = vpack.c.b16 %v182, %v175
  %v197 = vpack.c.b16 %v183, %v176
  %v310 = vunpack.c.l.b16 %v33
  %v311 = vunpack.c.l.b16 %v34
  %v312 = vunpack.c.l.b16 %v35
  %v313 = vunpack.c.l.b16 %v36
  %v314 = vunpack.c.l.b16 %v37
  %v315 = vunpack.c.l.b16 %v38
  %v316 = vunpack.c.l.b16 %v39
  %v317 = vunpack.c.l.b16 %v40
  %v318 = vunpack.c.l.b16 %v41
  %v319 = vunpack.c.l.b16 %v42
  %v320 = vunpack.c.l.b16 %v43
  %v321 = vunpack.c.l.b16 %v44
  %v322 = vunpack.c.l.b16 %v45
  %v323 = vunpack.c.l.b16 %v46
  %v324 = vunpack.c.l.b16 %v47
  %v325 = vunpack.c.l.b16 %v48
  %v326 = vunpack.c.l.b16 %v49
  %v327 = vunpack.c.l.b16 %v50
  %v328 = vunpack.c.l.b16 %v51
  %v329 = vunpack.c.l.b16 %v52
  %v330 = vunpack.c.l.b16 %v53
  %v331 = vunpack.c.l.b16 %v54
  %v332 = vunpack.c.l.b16 %v55
  %v333 = vunpack.c.l.b16 %v56
  %v334 = vunpack.c.l.b16 %v57
  %v335 = vunpack.c.l.b16 %v58
  %v336 = vunpack.c.l.b16 %v59
  %v337 = vunpack.c.l.b16 %v60
  %v338 = vunpack.c.l.b16 %v61
  %v339 = vunpack.c.l.b16 %v62
  %v340 = vunpack.c.l.b16 %v63
  %v341 = vunpack.c.l.b16 %v64
  %v342 = vunpack.c.l.b16 %v65
  %v343 = vunpack.c.l.b16 %v66
  %v344 = vunpack.c.l.b16 %v67
  %v345 = vunpack.c.l.b16 %v68
  %v346 = vunpack.c.l.b16 %v69
  %v347 = vunpack.c.l.b16 %v70
  %v348 = vunpack.c.l.b16 %v71
  %v349 = vunpack.c.l.b16 %v72
  %v350 = vunpack.c.l.b16 %v73
  %v351 = vunpack.c.l.b16 %v74
  %v352 = vunpack.c.l.b16 %v75
  %v353 = vunpack.c.l.b16 %v76
  %v354 = vunpack.c.l.b16 %v77
  %v355 = vunpack.c.l.b16 %v78
  %v356 = vunpack.c.l.b16 %v79
  %v357 = vunpack.c.l.b16 %v80
  %v358 = vunpack.c.l.b16 %v81
  %v359 = vunpack.c.l.b16 %v82
  %v360 = vunpack.c.l.b16 %v83
  %v361 = vunpack.c.l.b16 %v84
  %v362 = vunpack.c.l.b16 %v85
  %v363 = vunpack.c.l.b16 %v86
  %v364 = vunpack.c.l.b16 %v87
  %v365 = vunpack.c.l.b16 %v88
  %v366 = vunpack.c.l.b16 %v89
  %v367 = vunpack.c.l.b16 %v90
  %v368 = vunpack.c.l.b16 %v91
  %v369 = vunpack.c.l.b16 %v92
  %v370 = vunpack.c.l.b16 %v93
  %v371 = vunpack.c.l.b16 %v94
  %v372 = vunpack.c.l.b16 %v95
  %v373 = vunpack.c.l.b16 %v96
  %v374 = vunpack.c.l.b16 %v97
  %v375 = vunpack.c.l.b16 %v98
  %v376 = vunpack.c.l.b16 %v99
  %v377 = vunpack.c.l.b16 %v100
  %v378 = vunpack.c.l.b16 %v101
  %v379 = vunpack.c.l.b16 %v102
  %v380 = vunpack.c.l.b16 %v103
  %v381 = vunpack.c.l.b16 %v104
  %v382 = vunpack.c.l.b16 %v105
  %v383 = vunpack.c.l.b16 %v106
  %v384 = vunpack.c.l.b16 %v107
  %v385 = vunpack.c.l.b16 %v108
  %v386 = vunpack.c.l.b16 %v109
  %v387 = vunpack.c.l.b16 %v110
  %v388 = vunpack.c.l.b16 %v111
  %v389 = vunpack.c.l.b16 %v112
  %v390 = vunpack.c.l.b16 %v113
  %v391 = vunpack.c.l.b16 %v114
  %v392 = vunpack.c.l.b16 %v115
  %v393 = vunpack.c.l.b16 %v116
  %v394 = vunpack.c.l.b16 %v117
  %v395 = vunpack.c.l.b16 %v118
  %v396 = vunpack.c.l.b16 %v119
  %v397 = vunpack.c.l.b16 %v120
  %v398 = vunpack.c.l.b16 %v121
  %v399 = vunpack.c.l.b16 %v122
  %v400 = vunpack.c.l.b16 %v123
  %v401 = vunpack.c.l.b16 %v124
  %v402 = vunpack.c.l.b16 %v125
  %v403 = vunpack.c.l.b16 %v126
  %v404 = vunpack.c.l.b16 %v127
  %v405 = vunpack.c.l.b16 %v128
  %v406 = vunpack.c.l.b16 %v129
  %v407 = vunpack.c.l.b16 %v130
  %v408 = vunpack.c.l.b16 %v131
  %v409 = vunpack.c.l.b16 %v132
  %v410 = vpack.c.b16 %v311, %v310
  %v411 = vpack.c.b16 %v313, %v312
  %v412 = vpack.c.b16 %v315, %v314
  %v413 = vpack.c.b16 %v317, %v316
  %v414 = vpack.c.b16 %v319, %v318
  %v415 = vpack.c.b16 %v321, %v320
  %v416 = vpack.c.b16 %v323, %v322
  %v417 = vpack.c.b16 %v325, %v324
  %v418 = vpack.c.b16 %v327, %v326
  %v419 = vpack.c.b16 %v329, %v328
  %v420 = vpack.c.b16 %v331, %v330
  %v421 = vpack.c.b16 %v333, %v332
  %v422 = vpack.c.b16 %v335, %v334
  %v423 = vpack.c.b16 %v337, %v336
  %v424 = vpack.c.b16 %v339, %v338
  %v425 = vpack.c.b16 %v341, %v340
  %v426 = vpack.c.b16 %v343, %v342
  %v427 = vpack.c.b16 %v345, %v344
  %v428 = vpack.c.b16 %v347, %v346
  %v429 = vpack.c.b16 %v349, %v348
  %v430 = vpack.c.b16 %v351, %v350
  %v431 = vpack.c.b16 %v353, %v352
  %v432 = vpack.c.b16 %v355, %v354
  %v433 = vpack.c.b16 %v357, %v356
  %v434 = vpack.c.b16 %v359, %v358
  %v435 = vpack.c.b16 %v361, %v360
  %v436 = vpack.c.b16 %v363, %v362
  %v437 = vpack.c.b16 %v365, %v364
  %v438 = vpack.c.b16 %v367, %v366
  %v439 = vpack.c.b16 %v369, %v368
  %v440 = vpack.c.b16 %v371, %v370
  %v441 = vpack.c.b16 %v373, %v372
  %v442 = vpack.c.b16 %v375, %v374
  %v443 = vpack.c.b16 %v377, %v376
  %v444 = vpack.c.b16 %v379, %v378
  %v445 = vpack.c.b16 %v381, %v380
  %v446 = vpack.c.b16 %v383, %v382
  %v447 = vpack.c.b16 %v385, %v384
  %v448 = vpack.c.b16 %v387, %v386
  %v449 = vpack.c.b16 %v389, %v388
  %v450 = vpack.c.b16 %v391, %v390
  %v451 = vpack.c.b16 %v393, %v392
  %v452 = vpack.c.b16 %v395, %v394
  %v453 = vpack.c.b16 %v397, %v396
  %v454 = vpack.c.b16 %v399, %v398
  %v455 = vpack.c.b16 %v401, %v400
  %v456 = vpack.c.b16 %v403, %v402
  %v457 = vpack.c.b16 %v405, %v404
  %v458 = vpack.c.b16 %v407, %v406
  %v459 = vpack.c.b16 %v409, %v408
  %vm510 = vcmask 261120
  %v512 = vsel %vm510, %v190, 0
  %v515 = vsel %vm510, %v197, 0
  %517 = vmatprep.subr.bf16.mxu0 0
  %518 = vmatpush1.bf16.msra.mxu0 %v410
  %519 = vmatprep.subr.bf16.mxu0 0
  %520 = vmatpush1.bf16.msra.mxu0 %v411
  %521 = vmatprep.subr.bf16.mxu0 0
  %522 = vmatpush1.bf16.msra.mxu0 %v412
  %523 = vmatprep.subr.bf16.mxu0 0
  %524 = vmatpush1.bf16.msra.mxu0 %v413
  %525 = vmatprep.subr.bf16.mxu0 0
  %526 = vmatpush1.bf16.msra.mxu0 %v414
  %527 = vmatprep.subr.bf16.mxu0 0
  %528 = vmatpush1.bf16.msra.mxu0 %v415
  %529 = vmatprep.subr.bf16.mxu0 0
  %530 = vmatpush1.bf16.msra.mxu0 %v416
  %531 = vmatprep.subr.bf16.mxu0 0
  %532 = vmatpush1.bf16.msra.mxu0 %v417
  %533 = vmatprep.subr.bf16.mxu0 0
  %534 = vmatpush1.bf16.msra.mxu0 %v418
  %535 = vmatprep.subr.bf16.mxu0 0
  %536 = vmatpush1.bf16.msra.mxu0 %v419
  %537 = vmatprep.subr.bf16.mxu0 0
  %538 = vmatpush1.bf16.msra.mxu0 %v420
  %539 = vmatprep.subr.bf16.mxu0 0
  %540 = vmatpush1.bf16.msra.mxu0 %v421
  %541 = vmatprep.subr.bf16.mxu0 0
  %542 = vmatpush1.bf16.msra.mxu0 %v422
  %543 = vmatprep.subr.bf16.mxu0 0
  %544 = vmatpush1.bf16.msra.mxu0 %v423
  %545 = vmatprep.subr.bf16.mxu0 0
  %546 = vmatpush1.bf16.msra.mxu0 %v424
  %547 = vmatprep.subr.bf16.mxu0 0
  %548 = vmatpush1.bf16.msra.mxu0 %v425
  %549 = vmatprep.mubr.bf16.mxu0 %v185
  %550 = vmatmul.mubr.bf16.gmra.mrb[0].mxu0 %v184
  %v551 = vpop.f32.mrb[0].mxu0
  %v552 = vadd.f32 %v138, %v551
  %v553 = vpop.f32.mrb[0].mxu0
  %v554 = vpop.f32.mrb[0].mxu0
  %v555 = vadd.f32 %v138, %v554
  %v556 = vpop.f32.mrb[0].mxu0
  %557 = vmatprep.mubr.bf16.mxu0 %v192
  %558 = vmatmul.mubr.bf16.gmra.mrb[0].mxu0 %v191
  %v559 = vpop.f32.mrb[0].mxu0
  %v560 = vadd.f32 %v138, %v559
  %v561 = vpop.f32.mrb[0].mxu0
  %v562 = vpop.f32.mrb[0].mxu0
  %v563 = vadd.f32 %v138, %v562
  %v564 = vpop.f32.mrb[0].mxu0
  %565 = vdwg.mxu0
  %566 = vmatprep.subr.bf16.mxu0 0
  %567 = vmatpush1.bf16.msra.mxu0 %v426
  %568 = vmatprep.subr.bf16.mxu0 0
  %569 = vmatpush1.bf16.msra.mxu0 %v427
  %570 = vmatprep.subr.bf16.mxu0 0
  %571 = vmatpush1.bf16.msra.mxu0 %v428
  %572 = vmatprep.subr.bf16.mxu0 0
  %573 = vmatpush1.bf16.msra.mxu0 %v429
  %574 = vmatprep.subr.bf16.mxu0 0
  %575 = vmatpush1.bf16.msra.mxu0 %v430
  %576 = vmatprep.subr.bf16.mxu0 0
  %577 = vmatpush1.bf16.msra.mxu0 %v431
  %578 = vmatprep.subr.bf16.mxu0 0
  %579 = vmatpush1.bf16.msra.mxu0 %v432
  %580 = vmatprep.subr.bf16.mxu0 0
  %581 = vmatpush1.bf16.msra.mxu0 %v433
  %582 = vmatprep.subr.bf16.mxu0 0
  %583 = vmatpush1.bf16.msra.mxu0 %v434
  %584 = vmatprep.subr.bf16.mxu0 0
  %585 = vmatpush1.bf16.msra.mxu0 %v435
  %586 = vmatprep.subr.bf16.mxu0 0
  %587 = vmatpush1.bf16.msra.mxu0 %v436
  %588 = vmatprep.subr.bf16.mxu0 0
  %589 = vmatpush1.bf16.msra.mxu0 %v437
  %590 = vmatprep.subr.bf16.mxu0 0
  %591 = vmatpush1.bf16.msra.mxu0 %v438
  %592 = vmatprep.subr.bf16.mxu0 0
  %593 = vmatpush1.bf16.msra.mxu0 %v439
  %594 = vmatprep.subr.bf16.mxu0 0
  %595 = vmatpush1.bf16.msra.mxu0 %v440
  %596 = vmatprep.subr.bf16.mxu0 0
  %597 = vmatpush1.bf16.msra.mxu0 %v441
  %598 = vmatprep.mubr.bf16.mxu0 %v187
  %599 = vmatmul.mubr.bf16.gmra.mrb[0].mxu0 %v186
  %v600 = vpop.f32.mrb[0].mxu0
  %v601 = vadd.f32 %v552, %v600
  %v602 = vpop.f32.mrb[0].mxu0
  %v603 = vpop.f32.mrb[0].mxu0
  %v604 = vadd.f32 %v555, %v603
  %v605 = vpop.f32.mrb[0].mxu0
  %606 = vmatprep.mubr.bf16.mxu0 %v194
  %607 = vmatmul.mubr.bf16.gmra.mrb[0].mxu0 %v193
  %v608 = vpop.f32.mrb[0].mxu0
  %v609 = vadd.f32 %v560, %v608
  %v610 = vpop.f32.mrb[0].mxu0
  %v611 = vpop.f32.mrb[0].mxu0
  %v612 = vadd.f32 %v563, %v611
  %v613 = vpop.f32.mrb[0].mxu0
  %614 = vdwg.mxu0
  %615 = vmatprep.subr.bf16.mxu0 0
  %616 = vmatpush1.bf16.msra.mxu0 %v442
  %617 = vmatprep.subr.bf16.mxu0 0
  %618 = vmatpush1.bf16.msra.mxu0 %v443
  %619 = vmatprep.subr.bf16.mxu0 0
  %620 = vmatpush1.bf16.msra.mxu0 %v444
  %621 = vmatprep.subr.bf16.mxu0 0
  %622 = vmatpush1.bf16.msra.mxu0 %v445
  %623 = vmatprep.subr.bf16.mxu0 0
  %624 = vmatpush1.bf16.msra.mxu0 %v446
  %625 = vmatprep.subr.bf16.mxu0 0
  %626 = vmatpush1.bf16.msra.mxu0 %v447
  %627 = vmatprep.subr.bf16.mxu0 0
  %628 = vmatpush1.bf16.msra.mxu0 %v448
  %629 = vmatprep.subr.bf16.mxu0 0
  %630 = vmatpush1.bf16.msra.mxu0 %v449
  %631 = vmatprep.subr.bf16.mxu0 0
  %632 = vmatpush1.bf16.msra.mxu0 %v450
  %633 = vmatprep.subr.bf16.mxu0 0
  %634 = vmatpush1.bf16.msra.mxu0 %v451
  %635 = vmatprep.subr.bf16.mxu0 0
  %636 = vmatpush1.bf16.msra.mxu0 %v452
  %637 = vmatprep.subr.bf16.mxu0 0
  %638 = vmatpush1.bf16.msra.mxu0 %v453
  %639 = vmatprep.subr.bf16.mxu0 0
  %640 = vmatpush1.bf16.msra.mxu0 %v454
  %641 = vmatprep.subr.bf16.mxu0 0
  %642 = vmatpush1.bf16.msra.mxu0 %v455
  %643 = vmatprep.subr.bf16.mxu0 0
  %644 = vmatpush1.bf16.msra.mxu0 %v456
  %645 = vmatprep.subr.bf16.mxu0 0
  %646 = vmatpush1.bf16.msra.mxu0 %v457
  %647 = vmatprep.mubr.bf16.mxu0 %v189
  %648 = vmatmul.mubr.bf16.gmra.mrb[0].mxu0 %v188
  %v649 = vpop.f32.mrb[0].mxu0
  %v650 = vadd.f32 %v601, %v649
  %v651 = vpop.f32.mrb[0].mxu0
  %v652 = vpop.f32.mrb[0].mxu0
  %v653 = vadd.f32 %v604, %v652
  %v654 = vpop.f32.mrb[0].mxu0
  %655 = vmatprep.mubr.bf16.mxu0 %v196
  %656 = vmatmul.mubr.bf16.gmra.mrb[0].mxu0 %v195
  %v657 = vpop.f32.mrb[0].mxu0
  %v658 = vadd.f32 %v609, %v657
  %v659 = vpop.f32.mrb[0].mxu0
  %v660 = vpop.f32.mrb[0].mxu0
  %v661 = vadd.f32 %v612, %v660
  %v662 = vpop.f32.mrb[0].mxu0
  %663 = vdwg.mxu0
  %664 = vmatprep.subr.bf16.mxu0 0
  %665 = vmatpush1.bf16.msra.mxu0 %v458
  %666 = vmatprep.subr.bf16.mxu0 0
  %667 = vmatpush1.bf16.msra.mxu0 %v459
  %668 = vmatprep.subr.bf16.mxu0 0
  %669 = vmatpush1.bf16.msra.mxu0 0
  %670 = vmatprep.subr.bf16.mxu0 0
  %671 = vmatpush1.bf16.msra.mxu0 0
  %672 = vmatprep.subr.bf16.mxu0 0
  %673 = vmatpush1.bf16.msra.mxu0 0
  %674 = vmatprep.subr.bf16.mxu0 0
  %675 = vmatpush1.bf16.msra.mxu0 0
  %676 = vmatprep.subr.bf16.mxu0 0
  %677 = vmatpush1.bf16.msra.mxu0 0
  %678 = vmatprep.subr.bf16.mxu0 0
  %679 = vmatpush1.bf16.msra.mxu0 0
  %680 = vmatprep.subr.bf16.mxu0 0
  %681 = vmatpush1.bf16.msra.mxu0 0
  %682 = vmatprep.subr.bf16.mxu0 0
  %683 = vmatpush1.bf16.msra.mxu0 0
  %684 = vmatprep.subr.bf16.mxu0 0
  %685 = vmatpush1.bf16.msra.mxu0 0
  %686 = vmatprep.subr.bf16.mxu0 0
  %687 = vmatpush1.bf16.msra.mxu0 0
  %688 = vmatprep.subr.bf16.mxu0 0
  %689 = vmatpush1.bf16.msra.mxu0 0
  %690 = vmatprep.subr.bf16.mxu0 0
  %691 = vmatpush1.bf16.msra.mxu0 0
  %692 = vmatprep.subr.bf16.mxu0 0
  %693 = vmatpush1.bf16.msra.mxu0 0
  %694 = vmatprep.subr.bf16.mxu0 0
  %695 = vmatpush1.bf16.msra.mxu0 0
  %696 = vmatprep.mubr.bf16.mxu0 0
  %697 = vmatmul.mubr.bf16.gmra.mrb[0].mxu0 %v512
  %v698 = vpop.f32.mrb[0].mxu0
  %v699 = vadd.f32 %v650, %v698
  %v700 = vpop.f32.mrb[0].mxu0
  %v701 = vpop.f32.mrb[0].mxu0
  %v702 = vadd.f32 %v653, %v701
  %v703 = vpop.f32.mrb[0].mxu0
  %704 = vmatprep.mubr.bf16.mxu0 0
  %705 = vmatmul.mubr.bf16.gmra.mrb[0].mxu0 %v515
  %v706 = vpop.f32.mrb[0].mxu0
  %v707 = vadd.f32 %v658, %v706
  %v708 = vpop.f32.mrb[0].mxu0
  %v709 = vpop.f32.mrb[0].mxu0
  %v710 = vadd.f32 %v661, %v709
  %v711 = vpop.f32.mrb[0].mxu0
  %712 = vdwg.mxu0
  %v713 = vlaneseq
  %v714 = vshrl.u32 %v713, 7
  %v715 = vadd.s32 %v714, 8
  %v716 = vadd.s32 %v714, 16
  %v717 = vadd.s32 %v714, 24
  %s718 = smul.u32 0, 32
  %v719 = vstv %s718
  %v720 = vadd.s32 %v714, %v719
  %v721 = vadd.s32 %v715, %v719
  %v722 = vadd.s32 %v716, %v719
  %v723 = vadd.s32 %v717, %v719
  %vm724 = vcmp.lt.s32.totalorder %v720, 32
  %vm725 = vcmp.lt.s32.totalorder %v721, 32
  %vm726 = vcmp.lt.s32.totalorder %v722, 32
  %vm727 = vcmp.lt.s32.totalorder %v723, 32
  %v728 = vsel %vm724, 1, 0
  %v729 = vsel %vm725, 1, 0
  %v730 = vsel %vm726, 1, 0
  %v731 = vsel %vm727, 1, 0
  %vm732 = vcmp.eq.s32.totalorder %v728, 1
  %vm733 = vcmp.eq.s32.totalorder %v729, 1
  %vm734 = vcmp.eq.s32.totalorder %v730, 1
  %vm735 = vcmp.eq.s32.totalorder %v731, 1
  %v736 = vsel %vm732, %v699, 0.0
  %v737 = vsel %vm733, %v702, 0.0
  %v738 = vsel %vm734, %v707, 0.0
  %v739 = vsel %vm735, %v710, 0.0
  %vm740 = vcmask 523264
  %v741 = vsel %vm740, %v736, 0.0
  %v742 = vsel %vm740, %v737, 0.0
  %v743 = vadd.f32 %v741, %v742
  %v744 = vsel %vm740, %v738, 0.0
  %v745 = vadd.f32 %v743, %v744
  %v746 = vsel %vm740, %v739, 0.0
  %v747 = vadd.f32 %v745, %v746
  %v748 = vrot.slane %v747, 4
  %v749 = vadd.f32 %v747, %v748
  %v750 = vrot.slane %v749, 2
  %v751 = vadd.f32 %v749, %v750
  %v752 = vrot.slane %v751, 1
  %v753 = vadd.f32 %v751, %v752
  %vm754 = vcmask 516096
  %755 = vst.msk [vmem:[%s4] sm:$0x1] %vm754, %v753
  %v756 = vmul.f32 %v736, %v736
  %v757 = vmul.f32 %v737, %v737
  %v758 = vmul.f32 %v738, %v738
  %v759 = vmul.f32 %v739, %v739
  %v760 = vsel %vm740, %v756, 0.0
  %v761 = vsel %vm740, %v757, 0.0
  %v762 = vadd.f32 %v760, %v761
  %v763 = vsel %vm740, %v758, 0.0
  %v764 = vadd.f32 %v762, %v763
  %v765 = vsel %vm740, %v759, 0.0
  %v766 = vadd.f32 %v764, %v765
  %v767 = vrot.slane %v766, 4
  %v768 = vadd.f32 %v766, %v767
  %v769 = vrot.slane %v768, 2
  %v770 = vadd.f32 %v768, %v769
  %v771 = vrot.slane %v770, 1
  %v772 = vadd.f32 %v770, %v771
  %773 = vst.msk [vmem:[%s4 + $0x1] sm:$0x1] %vm754, %v772
  %v774 = vpack.c.bf16 %v702, %v699
  %v775 = vpack.c.bf16 %v710, %v707
  %v778 = vunpack.c.l.b16 %v774
  %v779 = vunpack.c.h.b16 %v774
  %v780 = vunpack.c.l.b16 %v775
  %v781 = vunpack.c.h.b16 %v775
  %v782 = vpack.c.b16 %v778, %v778
  %v783 = vpack.c.b16 %v779, %v779
  %v784 = vpack.c.b16 %v780, %v780
  %v785 = vpack.c.b16 %v781, %v781
  %vm790 = vcmask 519168
  %791 = vst.msk [vmem:[%s3] sm:$0xf] %vm790, %v782
  %792 = vst.msk [vmem:[%s3 + $0x4] sm:$0xf] %vm790, %v783
  %793 = vst.msk [vmem:[%s3 + $0x8] sm:$0xf] %vm790, %v784
  %794 = vst.msk [vmem:[%s3 + $0xc] sm:$0xf] %vm790, %v785
  // Predicated region
  $region14: #{netd_forward.12} parent=0 // pred_check
    _
  $region15: #{netd_forward.12} parent=0 // pred_check_branch
    %796 = sbr.rel (0) target = $region17
  $region16: #{netd_forward.12} parent=0 // pred_region
    _
  $region17: #{netd_forward.12} parent=0 // pred_fallthru
    _
  // Predicated region
  $region18: #{netd_forward.12} parent=0 // pred_check
    _
  $region19: #{netd_forward.12} parent=0 // pred_check_branch
    %798 = sbr.rel (0) target = $region21
  $region20: #{netd_forward.12} parent=0 // pred_region
    _
  $region21: #{netd_forward.12} parent=0 // pred_fallthru
    _
  // Predicated region
  $region22: #{netd_forward.12} parent=0 // pred_check
    _
  $region23: #{netd_forward.12} parent=0 // pred_check_branch
    %800 = sbr.rel (0) target = $region25
  $region24: #{netd_forward.12} parent=0 // pred_region
    _
  $region25: #{netd_forward.12} parent=0 // pred_fallthru
    _
  // Predicated region
  $region26: #{netd_forward.12} parent=0 // pred_check
    _
  $region27: #{netd_forward.12} parent=0 // pred_check_branch
    %802 = sbr.rel (0) target = $region29
  $region28: #{netd_forward.12} parent=0 // pred_region
    _
  $region29: #{netd_forward.12} parent=0 // pred_fallthru
    _

// kernel: netd_forward.13
$region0: #{netd_forward.13}
  #allocation0 [shape = 'u32[]', space=smem, size = 0x4, offset = 0x4, fixed_abs, tag = 'smem constant byte address 0x4 - core index']
  #allocation1 [shape = 'u32[144,128]{1,0:T(1,128)}', space=vmem, size = 0x12000, scoped, tag = 'internal scratch']
  %s0 = inlined_call_operand.vmem [shape: bf16[32,64], index: 0, kind: input, shape index: {}]
  %s1 = inlined_call_operand.vmem [shape: f32[1,64], index: 1, kind: input, shape index: {}]
  %s2 = inlined_call_operand.vmem [shape: f32[1,64], index: 2, kind: input, shape index: {}]
  %s3 = inlined_call_operand.vmem [shape: bf16[32,64], index: 3, kind: output, shape index: {}]
  %s4 = sld [smem:[#allocation0]]
  $region22: #{netd_forward.13} parent=0
    _
  %s6 = ssub.s32 1, %s4
  %s7 = scalar_select 0, %s6, %s4
  // Predicated region
  $region2: #{netd_forward.13} parent=0 // pred_check
    _
  $region3: #{netd_forward.13} parent=0 // pred_check_branch
    %9 = sbr.rel (0) target = $region5
  $region4: #{netd_forward.13} parent=0 // pred_region
    _
  $region5: #{netd_forward.13} parent=0 // pred_fallthru
    _
  // Predicated region
  $region6: #{netd_forward.13} parent=0 // pred_check
    _
  $region7: #{netd_forward.13} parent=0 // pred_check_branch
    %11 = sbr.rel (0) target = $region9
  $region8: #{netd_forward.13} parent=0 // pred_region
    _
  $region9: #{netd_forward.13} parent=0 // pred_fallthru
    _
  // Predicated region
  $region10: #{netd_forward.13} parent=0 // pred_check
    _
  $region11: #{netd_forward.13} parent=0 // pred_check_branch
    %13 = sbr.rel (0) target = $region13
  $region12: #{netd_forward.13} parent=0 // pred_region
    _
  $region13: #{netd_forward.13} parent=0 // pred_fallthru
    _
  %v14 = vld [vmem:[%s0] sm:$0xf]
  %v15 = vld [vmem:[%s0 + $0x4] sm:$0xf]
  %v16 = vld [vmem:[%s0 + $0x8] sm:$0xf]
  %v17 = vld [vmem:[%s0 + $0xc] sm:$0xf]
  %v18 = vunpack.c.l.bf16 %v14
  %v19 = vunpack.c.l.bf16 %v15
  %v20 = vunpack.c.l.bf16 %v16
  %v21 = vunpack.c.l.bf16 %v17
  %v22 = vld [vmem:[%s1] sm:$0x1]
  %v24 = vlaneseq
  %v25 = vshrl.u32 %v24, 7
  %v26 = vsub.s32 0, %v25
  %v27 = vrot.slane %v22, %v26
  %v29 = vmul.f32 %v18, %v27
  %v30 = vmul.f32 %v19, %v27
  %v31 = vmul.f32 %v20, %v27
  %v32 = vmul.f32 %v21, %v27
  %v33 = vld [vmem:[%s2] sm:$0x1]
  %v35 = vlaneseq
  %v36 = vshrl.u32 %v35, 7
  %v37 = vsub.s32 0, %v36
  %v38 = vrot.slane %v33, %v37
  %v40 = vadd.f32 %v29, %v38
  %v41 = vadd.f32 %v30, %v38
  %v42 = vadd.f32 %v31, %v38
  %v43 = vadd.f32 %v32, %v38
  %vm44 = vcmp.ge.f32.partialorder %v40, 0.0
  %vm45 = vcmp.ge.f32.partialorder %v41, 0.0
  %vm46 = vcmp.ge.f32.partialorder %v42, 0.0
  %vm47 = vcmp.ge.f32.partialorder %v43, 0.0
  %v48 = vmul.f32 %v40, 0.2
  %v49 = vmul.f32 %v41, 0.2
  %v50 = vmul.f32 %v42, 0.2
  %v51 = vmul.f32 %v43, 0.2
  %v52 = vsel %vm44, %v40, %v48
  %v53 = vsel %vm45, %v41, %v49
  %v54 = vsel %vm46, %v42, %v50
  %v55 = vsel %vm47, %v43, %v51
  %v56 = vpack.c.bf16 %v53, %v52
  %v57 = vpack.c.bf16 %v55, %v54
  %v60 = vunpack.c.l.b16 %v56
  %v61 = vunpack.c.h.b16 %v56
  %v62 = vunpack.c.l.b16 %v57
  %v63 = vunpack.c.h.b16 %v57
  %v64 = vpack.c.b16 %v60, %v60
  %v65 = vpack.c.b16 %v61, %v61
  %v66 = vpack.c.b16 %v62, %v62
  %v67 = vpack.c.b16 %v63, %v63
  %vm72 = vcmask 519168
  %73 = vst.msk [vmem:[%s3] sm:$0xf] %vm72, %v64
  %74 = vst.msk [vmem:[%s3 + $0x4] sm:$0xf] %vm72, %v65
  %75 = vst.msk [vmem:[%s3 + $0x8] sm:$0xf] %vm72, %v66
  %76 = vst.msk [vmem:[%s3 + $0xc] sm:$0xf] %vm72, %v67
  // Predicated region
  $region14: #{netd_forward.13} parent=0 // pred_check
    _
  $region15: #{netd_forward.13} parent=0 // pred_check_branch
    %78 = sbr.rel (0) target = $region17
  $region16: #{netd_forward.13} parent=0 // pred_region
    _
  $region17: #{netd_forward.13} parent=0 // pred_fallthru
    _
  // Predicated region
  $region18: #{netd_forward.13} parent=0 // pred_check
    _
  $region19: #{netd_forward.13} parent=0 // pred_check_branch
    %80 = sbr.rel (0) target = $region21
  $region20: #{netd_forward.13} parent=0 // pred_region
    _
  $region21: #{netd_forward.13} parent=0 // pred_fallthru
    _

</llo_original>
